<compile_context>
chip_gen: v6e
topology: v6e:2x2x1
jax: 0.10.0
libtpu: 0.0.40
codegen_flags: <defaults>
</compile_context>

<pallas_src>
import jax
import jax.numpy as jnp
from jax.experimental import pallas as pl
from jax.experimental.pallas import tpu as pltpu

EMBED_DIM = 50
IMG_CHANNELS = 3
IMG_SIZE = 28
NUM_CLASSES = 8
Z_DIM = 100
IN_DIM = Z_DIM + EMBED_DIM                      # 150
OUT_DIM = IMG_CHANNELS * IMG_SIZE * IMG_SIZE    # 2352
BN_EPS = 1e-5

H1, H2, H3 = 128, 256, 512

IN_PAD = 256            # [noise | label_emb] padded to 2 * 128 lanes
OUT_PAD = 2560          # 20 * 128 lanes; splits into two 1280-wide tiles
N_TILES = 2             # one w4 tile per v7x TC; double-buffers w4 elsewhere
TN = OUT_PAD // N_TILES  # 1280

# Static offsets inside the packed per-feature-vector array (all 128-aligned).
_B1_OFF = 0
_G2_OFF = _B1_OFF + H1          # 128
_BE2_OFF = _G2_OFF + H2         # 384
_G3_OFF = _BE2_OFF + H2         # 640
_BE3_OFF = _G3_OFF + H3         # 1152
VEC_LEN = _BE3_OFF + H3         # 1664 = 13 * 128


def _generator_kernel(x_ref, w1_ref, w2_ref, w3_ref, vec_ref,
                      w4_ref, b4_ref, out_ref):
    f32 = jnp.float32
    bf16 = jnp.bfloat16

    b1 = vec_ref[:, _B1_OFF:_B1_OFF + H1]
    g2 = vec_ref[:, _G2_OFF:_G2_OFF + H2]
    be2 = vec_ref[:, _BE2_OFF:_BE2_OFF + H2]
    g3 = vec_ref[:, _G3_OFF:_G3_OFF + H3]
    be3 = vec_ref[:, _BE3_OFF:_BE3_OFF + H3]

    # Linear 1 (input pre-padded to IN_PAD lanes; pad rows of w1 are zero) + ReLU.
    h = jnp.dot(x_ref[...].astype(bf16), w1_ref[...],
                preferred_element_type=f32) + b1
    h = jnp.maximum(h, 0.0)

    # Linear 2 (bias dropped: exactly cancelled by BN batch mean) +
    # BatchNorm1d(256) in training mode folded to scale*h + shift, + ReLU.
    h = jnp.dot(h.astype(bf16), w2_ref[...], preferred_element_type=f32)
    mu = jnp.mean(h, axis=0, keepdims=True)
    var = jnp.mean((h - mu) * (h - mu), axis=0, keepdims=True)
    s = g2 * jax.lax.rsqrt(var + BN_EPS)
    h = jnp.maximum(h * s + (be2 - s * mu), 0.0)

    # Linear 3 (bias dropped) + BatchNorm1d(512) + ReLU.
    h = jnp.dot(h.astype(bf16), w3_ref[...], preferred_element_type=f32)
    mu = jnp.mean(h, axis=0, keepdims=True)
    var = jnp.mean((h - mu) * (h - mu), axis=0, keepdims=True)
    s = g3 * jax.lax.rsqrt(var + BN_EPS)
    h = jnp.maximum(h * s + (be3 - s * mu), 0.0)

    # Linear 4 (one N tile of the padded output) + Tanh.
    o = jnp.dot(h.astype(bf16), w4_ref[...], preferred_element_type=f32) \
        + b4_ref[...]
    out_ref[...] = jnp.tanh(o)


def prepare_params(params):
    """One-time conversion of the f32 module parameters into kernel-ready
    operands (bf16 weights, padded w1/w4/b4, packed per-feature vector).
    Call once and reuse: this removes the per-call re-cast / re-pad HBM
    traffic that previously tripled the bytes moved per forward pass."""
    bf16 = jnp.bfloat16
    w1 = jnp.pad(params["w1"], ((0, IN_PAD - IN_DIM), (0, 0))).astype(bf16)
    w2 = params["w2"].astype(bf16)
    w3 = params["w3"].astype(bf16)
    w4 = jnp.pad(params["w4"], ((0, 0), (0, OUT_PAD - OUT_DIM))).astype(bf16)
    b4 = jnp.pad(params["b4"], ((0, 0), (0, OUT_PAD - OUT_DIM)))
    # b2/b3 are intentionally omitted: BatchNorm's batch-mean subtraction
    # cancels a constant pre-BN bias exactly (training-mode BN).
    vec = jnp.concatenate(
        [params["b1"], params["g2"], params["be2"], params["g3"], params["be3"]],
        axis=1)  # (1, VEC_LEN)
    prepped = {"emb": params["emb"], "w1": w1, "w2": w2, "w3": w3,
               "vec": vec, "w4": w4, "b4": b4}
    return jax.tree_util.tree_map(jax.block_until_ready, prepped)


def generator_forward(noise, labels, prepped):
    """noise: (B, Z_DIM) f32, labels: (B, 1) int32, prepped: prepare_params()
    output -> (B, 3, 28, 28) f32."""
    B = noise.shape[0]

    # Embedding lookup as a row gather (PyTorch: label_emb(labels).squeeze(1)),
    # concat with noise, pad to a lane-dense 256-wide input.
    lab = jnp.take(prepped["emb"], labels.reshape(B).astype(jnp.int32), axis=0)
    x = jnp.concatenate([noise.astype(jnp.float32), lab], axis=1)
    x = jnp.pad(x, ((0, 0), (0, IN_PAD - IN_DIM)))

    full = lambda j: (0, 0)
    tiled = lambda j: (0, j)

    grid_spec = pltpu.PrefetchScalarGridSpec(
        num_scalar_prefetch=0,
        grid=(N_TILES,),
        in_specs=[
            pl.BlockSpec((B, IN_PAD), full),      # padded [noise|emb] (resident)
            pl.BlockSpec((IN_PAD, H1), full),     # w1 (merged, padded)
            pl.BlockSpec((H1, H2), full),         # w2
            pl.BlockSpec((H2, H3), full),         # w3
            pl.BlockSpec((1, VEC_LEN), full),     # packed b1/g2/be2/g3/be3
            pl.BlockSpec((H3, TN), tiled),        # w4 N tile (pipelined)
            pl.BlockSpec((1, TN), tiled),         # b4 N tile
        ],
        out_specs=pl.BlockSpec((B, TN), tiled),
    )

    flat = pl.pallas_call(
        _generator_kernel,
        out_shape=jax.ShapeDtypeStruct((B, OUT_PAD), jnp.float32),
        grid_spec=grid_spec,
        compiler_params=pltpu.CompilerParams(
            dimension_semantics=("parallel",)),
    )(x, prepped["w1"], prepped["w2"], prepped["w3"], prepped["vec"],
      prepped["w4"], prepped["b4"])

    return flat[:, :OUT_DIM].reshape(B, IMG_CHANNELS, IMG_SIZE, IMG_SIZE)


def init_params(key):
    """Deterministic synthetic parameters matching the PyTorch module shapes.

    Linear weights are stored transposed relative to PyTorch, i.e.
    (in_features, out_features), so the kernel computes x @ W.  b2/b3 exist
    (the module has them) but the kernel omits them — training-mode BN
    cancels them exactly.
    """
    ks = jax.random.split(key, 8)

    def lin(k, fan_in, fan_out):
        bound = 1.0 / jnp.sqrt(fan_in)
        kw, kb = jax.random.split(k)
        w = jax.random.uniform(kw, (fan_in, fan_out), jnp.float32, -bound, bound)
        b = jax.random.uniform(kb, (1, fan_out), jnp.float32, -bound, bound)
        return w, b

    w1, b1 = lin(ks[0], IN_DIM, H1)
    w2, b2 = lin(ks[1], H1, H2)
    w3, b3 = lin(ks[2], H2, H3)
    w4, b4 = lin(ks[3], H3, OUT_DIM)

    return {
        "emb": jax.random.normal(ks[4], (NUM_CLASSES, EMBED_DIM), jnp.float32),
        "w1": w1, "b1": b1,
        "w2": w2, "b2": b2,
        "g2": jnp.ones((1, H2), jnp.float32), "be2": jnp.zeros((1, H2), jnp.float32),
        "w3": w3, "b3": b3,
        "g3": jnp.ones((1, H3), jnp.float32), "be3": jnp.zeros((1, H3), jnp.float32),
        "w4": w4, "b4": b4,
    }


def _reference_forward(noise, labels, p):
    """Pure-JAX reference mirroring the PyTorch forward (BN training mode),
    with the same bf16-weight / bf16-activation-at-matmul quantization."""
    bf16 = jnp.bfloat16
    f32 = jnp.float32
    B = noise.shape[0]
    lab = p["emb"][labels.reshape(B)]
    x = jnp.concatenate([noise, lab], axis=1)
    h = jnp.maximum(
        jnp.dot(x.astype(bf16), p["w1"].astype(bf16),
                preferred_element_type=f32) + p["b1"], 0.0)

    def bn(x, g, b):
        mu = jnp.mean(x, axis=0, keepdims=True)
        var = jnp.mean((x - mu) ** 2, axis=0, keepdims=True)
        return g * (x - mu) / jnp.sqrt(var + BN_EPS) + b

    h = jnp.dot(h.astype(bf16), p["w2"].astype(bf16), preferred_element_type=f32) + p["b2"]
    h = jnp.maximum(bn(h, p["g2"], p["be2"]), 0.0)
    h = jnp.dot(h.astype(bf16), p["w3"].astype(bf16), preferred_element_type=f32) + p["b3"]
    h = jnp.maximum(bn(h, p["g3"], p["be3"]), 0.0)
    h = jnp.tanh(
        jnp.dot(h.astype(bf16), p["w4"].astype(bf16), preferred_element_type=f32)
        + p["b4"])
    return h.reshape(B, IMG_CHANNELS, IMG_SIZE, IMG_SIZE)


if __name__ == "__main__":
    key = jax.random.PRNGKey(0)
    k_param, k_noise, k_lab = jax.random.split(key, 3)

    B = 8
    params = init_params(k_param)
    prepped = prepare_params(params)   # one-time weight prep (bf16/pad/pack)

    noise = jax.random.normal(k_noise, (B, Z_DIM), jnp.float32)
    labels = jax.random.randint(k_lab, (B, 1), 0, NUM_CLASSES, dtype=jnp.int32)

    img = jax.block_until_ready(generator_forward(noise, labels, prepped))
    ref = jax.block_until_ready(_reference_forward(noise, labels, params))

    assert img.shape == (B, IMG_CHANNELS, IMG_SIZE, IMG_SIZE)
    assert jnp.allclose(img, ref, atol=1e-2, rtol=1e-2), \
        float(jnp.max(jnp.abs(img - ref)))

    print("KERNEL_OK")
</pallas_src>

<mosaic_0001>
module attributes {stable_mosaic.version = 11 : i64} {
  func.func @_generator_kernel(%arg0: i32, %arg1: memref<8x256xf32, #tpu.memory_space<vmem>>, %arg2: memref<256x128xbf16, #tpu.memory_space<vmem>>, %arg3: memref<128x256xbf16, #tpu.memory_space<vmem>>, %arg4: memref<256x512xbf16, #tpu.memory_space<vmem>>, %arg5: memref<1x1664xf32, #tpu.memory_space<vmem>>, %arg6: memref<512x1280xbf16, #tpu.memory_space<vmem>>, %arg7: memref<1x1280xf32, #tpu.memory_space<vmem>>, %arg8: memref<8x1280xf32, #tpu.memory_space<vmem>>) attributes {dimension_semantics = [#tpu.dimension_semantics<parallel>], iteration_bounds = array<i64: 2>, scalar_prefetch = 0 : i64, scratch_operands = 0 : i64, tpu.core_type = #tpu.core_type<tc>, window_params = [{pipeline_mode = #tpu.pipeline_mode<synchronous>, transform_indices = @transform_0, window_bounds = array<i64: 8, 256>}, {pipeline_mode = #tpu.pipeline_mode<synchronous>, transform_indices = @transform_1, window_bounds = array<i64: 256, 128>}, {pipeline_mode = #tpu.pipeline_mode<synchronous>, transform_indices = @transform_2, window_bounds = array<i64: 128, 256>}, {pipeline_mode = #tpu.pipeline_mode<synchronous>, transform_indices = @transform_3, window_bounds = array<i64: 256, 512>}, {pipeline_mode = #tpu.pipeline_mode<synchronous>, transform_indices = @transform_4, window_bounds = array<i64: 1, 1664>}, {transform_indices = @transform_5, window_bounds = array<i64: 512, 1280>}, {transform_indices = @transform_6, window_bounds = array<i64: 1, 1280>}, {transform_indices = @transform_7, window_bounds = array<i64: 8, 1280>}]} {
    %c0 = arith.constant 0 : index
    %c0_0 = arith.constant 0 : index
    %0 = vector.load %arg5[%c0, %c0_0] : memref<1x1664xf32, #tpu.memory_space<vmem>>, vector<1x128xf32>
    %c0_1 = arith.constant 0 : index
    %c128 = arith.constant 128 : index
    %1 = vector.load %arg5[%c0_1, %c128] : memref<1x1664xf32, #tpu.memory_space<vmem>>, vector<1x256xf32>
    %c0_2 = arith.constant 0 : index
    %c384 = arith.constant 384 : index
    %2 = vector.load %arg5[%c0_2, %c384] : memref<1x1664xf32, #tpu.memory_space<vmem>>, vector<1x256xf32>
    %c0_3 = arith.constant 0 : index
    %c640 = arith.constant 640 : index
    %3 = vector.load %arg5[%c0_3, %c640] : memref<1x1664xf32, #tpu.memory_space<vmem>>, vector<1x512xf32>
    %c0_4 = arith.constant 0 : index
    %c1152 = arith.constant 1152 : index
    %4 = vector.load %arg5[%c0_4, %c1152] : memref<1x1664xf32, #tpu.memory_space<vmem>>, vector<1x512xf32>
    %c0_5 = arith.constant 0 : index
    %c0_6 = arith.constant 0 : index
    %5 = vector.load %arg1[%c0_5, %c0_6] : memref<8x256xf32, #tpu.memory_space<vmem>>, vector<8x256xf32>
    %6 = arith.truncf %5 : vector<8x256xf32> to vector<8x256xbf16>
    %c0_7 = arith.constant 0 : index
    %c0_8 = arith.constant 0 : index
    %7 = vector.load %arg2[%c0_7, %c0_8] : memref<256x128xbf16, #tpu.memory_space<vmem>>, vector<256x128xbf16>
    %cst = arith.constant dense<0.000000e+00> : vector<8x128xf32>
    %8 = tpu.matmul %6, %7, %cst {dimension_numbers = #tpu.dot_dimension_numbers<[1], [0], [0], [1], [0, 0, 1, 1], [], []>} : vector<8x256xbf16>, vector<256x128xbf16>, vector<8x128xf32> -> vector<8x128xf32>
    %9 = vector.broadcast %0 : vector<1x128xf32> to vector<8x128xf32>
    %10 = arith.addf %8, %9 : vector<8x128xf32>
    %cst_9 = arith.constant 0.000000e+00 : f32
    %11 = vector.broadcast %cst_9 : f32 to vector<8x128xf32>
    %12 = arith.maximumf %10, %11 : vector<8x128xf32>
    %13 = arith.truncf %12 : vector<8x128xf32> to vector<8x128xbf16>
    %c0_10 = arith.constant 0 : index
    %c0_11 = arith.constant 0 : index
    %14 = vector.load %arg3[%c0_10, %c0_11] : memref<128x256xbf16, #tpu.memory_space<vmem>>, vector<128x256xbf16>
    %cst_12 = arith.constant dense<0.000000e+00> : vector<8x256xf32>
    %15 = tpu.matmul %13, %14, %cst_12 {dimension_numbers = #tpu.dot_dimension_numbers<[1], [0], [0], [1], [0, 0, 1, 1], [], []>} : vector<8x128xbf16>, vector<128x256xbf16>, vector<8x256xf32> -> vector<8x256xf32>
    %cst_13 = arith.constant dense<0.000000e+00> : vector<256xf32>
    %16 = vector.multi_reduction <add>, %15, %cst_13 [0] : vector<8x256xf32> to vector<256xf32>
    %17 = vector.shape_cast %16 : vector<256xf32> to vector<1x256xf32>
    %cst_14 = arith.constant 8.000000e+00 : f32
    %18 = vector.broadcast %cst_14 : f32 to vector<1x256xf32>
    %19 = arith.divf %17, %18 : vector<1x256xf32>
    %20 = vector.broadcast %19 : vector<1x256xf32> to vector<8x256xf32>
    %21 = arith.subf %15, %20 : vector<8x256xf32>
    %22 = vector.broadcast %19 : vector<1x256xf32> to vector<8x256xf32>
    %23 = arith.subf %15, %22 : vector<8x256xf32>
    %24 = arith.mulf %21, %23 : vector<8x256xf32>
    %cst_15 = arith.constant dense<0.000000e+00> : vector<256xf32>
    %25 = vector.multi_reduction <add>, %24, %cst_15 [0] : vector<8x256xf32> to vector<256xf32>
    %26 = vector.shape_cast %25 : vector<256xf32> to vector<1x256xf32>
    %cst_16 = arith.constant 8.000000e+00 : f32
    %27 = vector.broadcast %cst_16 : f32 to vector<1x256xf32>
    %28 = arith.divf %26, %27 : vector<1x256xf32>
    %cst_17 = arith.constant 9.99999974E-6 : f32
    %29 = vector.broadcast %cst_17 : f32 to vector<1x256xf32>
    %30 = arith.addf %28, %29 : vector<1x256xf32>
    %31 = math.rsqrt %30 : vector<1x256xf32>
    %32 = arith.mulf %1, %31 : vector<1x256xf32>
    %33 = vector.broadcast %32 : vector<1x256xf32> to vector<8x256xf32>
    %34 = arith.mulf %15, %33 : vector<8x256xf32>
    %35 = arith.mulf %32, %19 : vector<1x256xf32>
    %36 = arith.subf %2, %35 : vector<1x256xf32>
    %37 = vector.broadcast %36 : vector<1x256xf32> to vector<8x256xf32>
    %38 = arith.addf %34, %37 : vector<8x256xf32>
    %cst_18 = arith.constant 0.000000e+00 : f32
    %39 = vector.broadcast %cst_18 : f32 to vector<8x256xf32>
    %40 = arith.maximumf %38, %39 : vector<8x256xf32>
    %41 = arith.truncf %40 : vector<8x256xf32> to vector<8x256xbf16>
    %c0_19 = arith.constant 0 : index
    %c0_20 = arith.constant 0 : index
    %42 = vector.load %arg4[%c0_19, %c0_20] : memref<256x512xbf16, #tpu.memory_space<vmem>>, vector<256x512xbf16>
    %cst_21 = arith.constant dense<0.000000e+00> : vector<8x512xf32>
    %43 = tpu.matmul %41, %42, %cst_21 {dimension_numbers = #tpu.dot_dimension_numbers<[1], [0], [0], [1], [0, 0, 1, 1], [], []>} : vector<8x256xbf16>, vector<256x512xbf16>, vector<8x512xf32> -> vector<8x512xf32>
    %cst_22 = arith.constant dense<0.000000e+00> : vector<512xf32>
    %44 = vector.multi_reduction <add>, %43, %cst_22 [0] : vector<8x512xf32> to vector<512xf32>
    %45 = vector.shape_cast %44 : vector<512xf32> to vector<1x512xf32>
    %cst_23 = arith.constant 8.000000e+00 : f32
    %46 = vector.broadcast %cst_23 : f32 to vector<1x512xf32>
    %47 = arith.divf %45, %46 : vector<1x512xf32>
    %48 = vector.broadcast %47 : vector<1x512xf32> to vector<8x512xf32>
    %49 = arith.subf %43, %48 : vector<8x512xf32>
    %50 = vector.broadcast %47 : vector<1x512xf32> to vector<8x512xf32>
    %51 = arith.subf %43, %50 : vector<8x512xf32>
    %52 = arith.mulf %49, %51 : vector<8x512xf32>
    %cst_24 = arith.constant dense<0.000000e+00> : vector<512xf32>
    %53 = vector.multi_reduction <add>, %52, %cst_24 [0] : vector<8x512xf32> to vector<512xf32>
    %54 = vector.shape_cast %53 : vector<512xf32> to vector<1x512xf32>
    %cst_25 = arith.constant 8.000000e+00 : f32
    %55 = vector.broadcast %cst_25 : f32 to vector<1x512xf32>
    %56 = arith.divf %54, %55 : vector<1x512xf32>
    %cst_26 = arith.constant 9.99999974E-6 : f32
    %57 = vector.broadcast %cst_26 : f32 to vector<1x512xf32>
    %58 = arith.addf %56, %57 : vector<1x512xf32>
    %59 = math.rsqrt %58 : vector<1x512xf32>
    %60 = arith.mulf %3, %59 : vector<1x512xf32>
    %61 = vector.broadcast %60 : vector<1x512xf32> to vector<8x512xf32>
    %62 = arith.mulf %43, %61 : vector<8x512xf32>
    %63 = arith.mulf %60, %47 : vector<1x512xf32>
    %64 = arith.subf %4, %63 : vector<1x512xf32>
    %65 = vector.broadcast %64 : vector<1x512xf32> to vector<8x512xf32>
    %66 = arith.addf %62, %65 : vector<8x512xf32>
    %cst_27 = arith.constant 0.000000e+00 : f32
    %67 = vector.broadcast %cst_27 : f32 to vector<8x512xf32>
    %68 = arith.maximumf %66, %67 : vector<8x512xf32>
    %69 = arith.truncf %68 : vector<8x512xf32> to vector<8x512xbf16>
    %c0_28 = arith.constant 0 : index
    %c0_29 = arith.constant 0 : index
    %70 = vector.load %arg6[%c0_28, %c0_29] : memref<512x1280xbf16, #tpu.memory_space<vmem>>, vector<512x1280xbf16>
    %cst_30 = arith.constant dense<0.000000e+00> : vector<8x1280xf32>
    %71 = tpu.matmul %69, %70, %cst_30 {dimension_numbers = #tpu.dot_dimension_numbers<[1], [0], [0], [1], [0, 0, 1, 1], [], []>} : vector<8x512xbf16>, vector<512x1280xbf16>, vector<8x1280xf32> -> vector<8x1280xf32>
    %c0_31 = arith.constant 0 : index
    %c0_32 = arith.constant 0 : index
    %72 = vector.load %arg7[%c0_31, %c0_32] : memref<1x1280xf32, #tpu.memory_space<vmem>>, vector<1x1280xf32>
    %73 = vector.broadcast %72 : vector<1x1280xf32> to vector<8x1280xf32>
    %74 = arith.addf %71, %73 : vector<8x1280xf32>
    %75 = math.tanh %74 : vector<8x1280xf32>
    %c0_33 = arith.constant 0 : index
    %c0_34 = arith.constant 0 : index
    %76 = vector.load %arg8[%c0_33, %c0_34] : memref<8x1280xf32, #tpu.memory_space<vmem>>, vector<8x1280xf32>
    tpu.vector_store %arg8[%c0_33, %c0_34], %75 {strides = array<i32>} : memref<8x1280xf32, #tpu.memory_space<vmem>>, vector<8x1280xf32>,
    return
  }
  func.func @transform_0(%arg0: i32) -> (i32, i32) {
    %c0_i32 = arith.constant 0 : i32
    %c0_i32_0 = arith.constant 0 : i32
    %c0_i32_1 = arith.constant 0 : i32
    return %c0_i32, %c0_i32_0 : i32, i32
  }
  func.func @transform_1(%arg0: i32) -> (i32, i32) {
    %c0_i32 = arith.constant 0 : i32
    %c0_i32_0 = arith.constant 0 : i32
    %c0_i32_1 = arith.constant 0 : i32
    return %c0_i32, %c0_i32_0 : i32, i32
  }
  func.func @transform_2(%arg0: i32) -> (i32, i32) {
    %c0_i32 = arith.constant 0 : i32
    %c0_i32_0 = arith.constant 0 : i32
    %c0_i32_1 = arith.constant 0 : i32
    return %c0_i32, %c0_i32_0 : i32, i32
  }
  func.func @transform_3(%arg0: i32) -> (i32, i32) {
    %c0_i32 = arith.constant 0 : i32
    %c0_i32_0 = arith.constant 0 : i32
    %c0_i32_1 = arith.constant 0 : i32
    return %c0_i32, %c0_i32_0 : i32, i32
  }
  func.func @transform_4(%arg0: i32) -> (i32, i32) {
    %c0_i32 = arith.constant 0 : i32
    %c0_i32_0 = arith.constant 0 : i32
    %c0_i32_1 = arith.constant 0 : i32
    return %c0_i32, %c0_i32_0 : i32, i32
  }
  func.func @transform_5(%arg0: i32) -> (i32, i32) {
    %c0_i32 = arith.constant 0 : i32
    %c0_i32_0 = arith.constant 0 : i32
    return %c0_i32, %arg0 : i32, i32
  }
  func.func @transform_6(%arg0: i32) -> (i32, i32) {
    %c0_i32 = arith.constant 0 : i32
    %c0_i32_0 = arith.constant 0 : i32
    return %c0_i32, %arg0 : i32, i32
  }
  func.func @transform_7(%arg0: i32) -> (i32, i32) {
    %c0_i32 = arith.constant 0 : i32
    %c0_i32_0 = arith.constant 0 : i32
    return %c0_i32, %arg0 : i32, i32
  }
}

</mosaic_0001>

<llo_original>
// kernel: tpu_custom_call.1
$region0: #{tpu_custom_call.1}
  #allocation0 [shape = 'u32[]', space=smem, size = 0x4, offset = 0x4, fixed_abs, tag = 'smem constant byte address 0x4 - core index']
  #allocation1 [shape = 'u32[144,128]{1,0:T(1,128)}', space=vmem, size = 0x12000, scoped, tag = 'internal scratch']
  %s0 = inlined_call_operand.hbm [shape: f32[8,256], index: 0, kind: input, shape index: {}]
  %s1 = inlined_call_operand.hbm [shape: bf16[256,128], index: 1, kind: input, shape index: {}]
  %s2 = inlined_call_operand.hbm [shape: bf16[128,256], index: 2, kind: input, shape index: {}]
  %s3 = inlined_call_operand.hbm [shape: bf16[256,512], index: 3, kind: input, shape index: {}]
  %s4 = inlined_call_operand.hbm [shape: f32[1,1664], index: 4, kind: input, shape index: {}]
  %s5 = inlined_call_operand.hbm [shape: bf16[512,2560], index: 5, kind: input, shape index: {}]
  %s6 = inlined_call_operand.hbm [shape: f32[1,2560], index: 6, kind: input, shape index: {}]
  %s7 = inlined_call_operand.hbm [shape: f32[8,2560], index: 7, kind: output, shape index: {}]
  %s8 = sld [smem:[#allocation0]]
  $region89: #{tpu_custom_call.1} parent=0
    _
  %s10 = ssub.s32 1, %s8
  %s11 = scalar_select 0, %s10, %s8
  $region1: #{tpu_custom_call.1} parent=0
    #allocation2 [shape = 'u8[8192]{0}', space=vmem, size = 0x2000, scoped, tag = 'input window, operand 0, single buffered']
    #allocation3 [shape = 's32[2]{0}', space=sflag, size = 0x8, scoped, tag = 'scoped memory for tpu_custom_call.1']
    #allocation4 [shape = 's32[2]{0}', space=sflag, size = 0x8, scoped, tag = 'scoped memory for tpu_custom_call.1']
    #allocation5 [shape = 'u8[65536]{0}', space=vmem, size = 0x10000, scoped, tag = 'input window, operand 1, single buffered']
    #allocation6 [shape = 's32[1]{0}', space=sflag, size = 0x4, scoped, tag = 'scoped memory for tpu_custom_call.1']
    #allocation7 [shape = 'u8[65536]{0}', space=vmem, size = 0x10000, scoped, tag = 'input window, operand 2, single buffered']
    #allocation8 [shape = 'u8[262144]{0}', space=vmem, size = 0x40000, scoped, tag = 'input window, operand 3, single buffered']
    #allocation9 [shape = 's32[1]{0}', space=sflag, size = 0x4, scoped, tag = 'scoped memory for tpu_custom_call.1']
    #allocation10 [shape = 'u8[6656]{0}', space=vmem, size = 0x1c00, scoped, tag = 'input window, operand 4, single buffered']
    #allocation11 [shape = 'u8[2621440]{0}', space=vmem, size = 0x280000, scoped, tag = 'input window, operand 5']
    #allocation12 [shape = 's32[2]{0}', space=sflag, size = 0x8, scoped, tag = 'scoped memory for tpu_custom_call.1']
    #allocation13 [shape = 'u8[10240]{0}', space=vmem, size = 0x2800, scoped, tag = 'input window, operand 6']
    #allocation14 [shape = 'u8[81920]{0}', space=vmem, size = 0x14000, scoped, tag = 'output window, operand 0']
    %12 = vsyncpa [#allocation3], 0
    %13 = vsyncpa [#allocation6], 0
    %14 = vsyncpa [#allocation9], 0
    %15 = vsyncpa [#allocation12], 0
    %s16 = scalar_lea.sflag [#allocation12], 1
    %17 = vsyncpa %s16, 0
    %18 = vsyncpa [#allocation4], 0
    %s19 = scalar_lea.sflag [#allocation4], 1
    %20 = vsyncpa %s19, 0
    loop: start=0, step=1, limit=4
    $region2: #{tpu_custom_call.1} parent=1 // loop_pre_header
      _
    $region3: #{tpu_custom_call.1} parent=1 // loop_header
      %s22 = sphi 0, %s26
      %p23 = scmp.ge.s32.totalorder %s22, 4
      %s30 = sphi 0, %s30
      %s32 = sphi 0, %s30
      %s33 = sphi 0, %s32
      %s47 = sphi 0, %s33
      %s51 = sphi 0, %s51
      %s53 = sphi 0, %s51
      %s54 = sphi 0, %s53
      %s68 = sphi 0, %s54
      %s72 = sphi 0, %s72
      %s74 = sphi 0, %s72
      %s75 = sphi 0, %s74
      %s89 = sphi 0, %s75
      %s93 = sphi 0, %s93
      %s95 = sphi 0, %s93
      %s96 = sphi 0, %s95
      %s110 = sphi 0, %s96
      %s114 = sphi 0, %s114
      %s116 = sphi 0, %s114
      %s117 = sphi 0, %s116
      %s131 = sphi 0, %s117
      %s137 = sphi 0, %s139
      %s140 = sphi 0, %s137
      %s141 = sphi 0, %s140
      %s157 = sphi 0, %s141
      %s163 = sphi 0, %s165
      %s166 = sphi 0, %s163
      %s167 = sphi 0, %s166
      %s183 = sphi 0, %s167
      %s189 = sphi 0, %s191
      %s192 = sphi 0, %s189
      %s193 = sphi 0, %s192
      %s209 = sphi 0, %s193
    $region4: #{tpu_custom_call.1} parent=1 // loop_header_branch
      %25 = sbr.rel (%p23) target = $region8
    $region5: #{tpu_custom_call.1} parent=1 // loop_body
      %s27 = ssub.s32 %s22, 1
      %s28 = ssub.s32 %s22, 2
      %s29 = sadd.s32 %s22, 1
      %s31 = sadd.s32 %s30, 1
      %p34 = scmp.eq.s32.totalorder %s22, 1
      %p35 = scmp.ne.s32.totalorder %s30, %s32
      %p36 = scmp.eq.s32.totalorder %s22, 0
      %p37 = por %p35, %p36
      %p38 = scmp.ne.s32.totalorder %s30, %s32
      %p39 = scmp.eq.s32.totalorder %s27, 1
      %p40 = por %p38, %p39
      %p41 = scmp.ne.s32.totalorder %s32, %s33
      %p42 = scmp.eq.s32.totalorder %s27, 0
      %p43 = por %p41, %p42
      %p44 = scmp.ne.s32.totalorder %s32, %s33
      %p45 = scmp.eq.s32.totalorder %s28, 1
      %p46 = por %p44, %p45
      %p48 = scmp.ne.s32.totalorder %s33, %s47
      %p49 = scmp.eq.s32.totalorder %s28, 0
      %p50 = por %p48, %p49
      %s52 = sadd.s32 %s51, 1
      %p55 = scmp.eq.s32.totalorder %s22, 1
      %p56 = scmp.ne.s32.totalorder %s51, %s53
      %p57 = scmp.eq.s32.totalorder %s22, 0
      %p58 = por %p56, %p57
      %p59 = scmp.ne.s32.totalorder %s51, %s53
      %p60 = scmp.eq.s32.totalorder %s27, 1
      %p61 = por %p59, %p60
      %p62 = scmp.ne.s32.totalorder %s53, %s54
      %p63 = scmp.eq.s32.totalorder %s27, 0
      %p64 = por %p62, %p63
      %p65 = scmp.ne.s32.totalorder %s53, %s54
      %p66 = scmp.eq.s32.totalorder %s28, 1
      %p67 = por %p65, %p66
      %p69 = scmp.ne.s32.totalorder %s54, %s68
      %p70 = scmp.eq.s32.totalorder %s28, 0
      %p71 = por %p69, %p70
      %s73 = sadd.s32 %s72, 1
      %p76 = scmp.eq.s32.totalorder %s22, 1
      %p77 = scmp.ne.s32.totalorder %s72, %s74
      %p78 = scmp.eq.s32.totalorder %s22, 0
      %p79 = por %p77, %p78
      %p80 = scmp.ne.s32.totalorder %s72, %s74
      %p81 = scmp.eq.s32.totalorder %s27, 1
      %p82 = por %p80, %p81
      %p83 = scmp.ne.s32.totalorder %s74, %s75
      %p84 = scmp.eq.s32.totalorder %s27, 0
      %p85 = por %p83, %p84
      %p86 = scmp.ne.s32.totalorder %s74, %s75
      %p87 = scmp.eq.s32.totalorder %s28, 1
      %p88 = por %p86, %p87
      %p90 = scmp.ne.s32.totalorder %s75, %s89
      %p91 = scmp.eq.s32.totalorder %s28, 0
      %p92 = por %p90, %p91
      %s94 = sadd.s32 %s93, 1
      %p97 = scmp.eq.s32.totalorder %s22, 1
      %p98 = scmp.ne.s32.totalorder %s93, %s95
      %p99 = scmp.eq.s32.totalorder %s22, 0
      %p100 = por %p98, %p99
      %p101 = scmp.ne.s32.totalorder %s93, %s95
      %p102 = scmp.eq.s32.totalorder %s27, 1
      %p103 = por %p101, %p102
      %p104 = scmp.ne.s32.totalorder %s95, %s96
      %p105 = scmp.eq.s32.totalorder %s27, 0
      %p106 = por %p104, %p105
      %p107 = scmp.ne.s32.totalorder %s95, %s96
      %p108 = scmp.eq.s32.totalorder %s28, 1
      %p109 = por %p107, %p108
      %p111 = scmp.ne.s32.totalorder %s96, %s110
      %p112 = scmp.eq.s32.totalorder %s28, 0
      %p113 = por %p111, %p112
      %s115 = sadd.s32 %s114, 1
      %p118 = scmp.eq.s32.totalorder %s22, 1
      %p119 = scmp.ne.s32.totalorder %s114, %s116
      %p120 = scmp.eq.s32.totalorder %s22, 0
      %p121 = por %p119, %p120
      %p122 = scmp.ne.s32.totalorder %s114, %s116
      %p123 = scmp.eq.s32.totalorder %s27, 1
      %p124 = por %p122, %p123
      %p125 = scmp.ne.s32.totalorder %s116, %s117
      %p126 = scmp.eq.s32.totalorder %s27, 0
      %p127 = por %p125, %p126
      %p128 = scmp.ne.s32.totalorder %s116, %s117
      %p129 = scmp.eq.s32.totalorder %s28, 1
      %p130 = por %p128, %p129
      %p132 = scmp.ne.s32.totalorder %s117, %s131
      %p133 = scmp.eq.s32.totalorder %s28, 0
      %p134 = por %p132, %p133
      %s135 = ssub.s32 %s22, %s29
      %p136 = scmp.eq.s32.totalorder %s135, 0
      %s138 = sadd.s32 %s137, 1
      %s139 = scalar_select %p136, %s137, %s138
      %p142 = pneg %p136
      %p143 = scmp.eq.s32.totalorder %s22, 1
      %p144 = por %p142, %p143
      %p145 = scmp.ne.s32.totalorder %s137, %s140
      %p146 = scmp.eq.s32.totalorder %s22, 0
      %p147 = por %p145, %p146
      %p148 = scmp.ne.s32.totalorder %s137, %s140
      %p149 = scmp.eq.s32.totalorder %s27, 1
      %p150 = por %p148, %p149
      %p151 = scmp.ne.s32.totalorder %s140, %s141
      %p152 = scmp.eq.s32.totalorder %s27, 0
      %p153 = por %p151, %p152
      %p154 = scmp.ne.s32.totalorder %s140, %s141
      %p155 = scmp.eq.s32.totalorder %s28, 1
      %p156 = por %p154, %p155
      %p158 = scmp.ne.s32.totalorder %s141, %s157
      %p159 = scmp.eq.s32.totalorder %s28, 0
      %p160 = por %p158, %p159
      %s161 = ssub.s32 %s22, %s29
      %p162 = scmp.eq.s32.totalorder %s161, 0
      %s164 = sadd.s32 %s163, 1
      %s165 = scalar_select %p162, %s163, %s164
      %p168 = pneg %p162
      %p169 = scmp.eq.s32.totalorder %s22, 1
      %p170 = por %p168, %p169
      %p171 = scmp.ne.s32.totalorder %s163, %s166
      %p172 = scmp.eq.s32.totalorder %s22, 0
      %p173 = por %p171, %p172
      %p174 = scmp.ne.s32.totalorder %s163, %s166
      %p175 = scmp.eq.s32.totalorder %s27, 1
      %p176 = por %p174, %p175
      %p177 = scmp.ne.s32.totalorder %s166, %s167
      %p178 = scmp.eq.s32.totalorder %s27, 0
      %p179 = por %p177, %p178
      %p180 = scmp.ne.s32.totalorder %s166, %s167
      %p181 = scmp.eq.s32.totalorder %s28, 1
      %p182 = por %p180, %p181
      %p184 = scmp.ne.s32.totalorder %s167, %s183
      %p185 = scmp.eq.s32.totalorder %s28, 0
      %p186 = por %p184, %p185
      %s187 = ssub.s32 %s22, %s29
      %p188 = scmp.eq.s32.totalorder %s187, 0
      %s190 = sadd.s32 %s189, 1
      %s191 = scalar_select %p188, %s189, %s190
      %p194 = pneg %p188
      %p195 = scmp.eq.s32.totalorder %s22, 1
      %p196 = por %p194, %p195
      %p197 = scmp.ne.s32.totalorder %s189, %s192
      %p198 = scmp.eq.s32.totalorder %s22, 0
      %p199 = por %p197, %p198
      %p200 = scmp.ne.s32.totalorder %s189, %s192
      %p201 = scmp.eq.s32.totalorder %s27, 1
      %p202 = por %p200, %p201
      %p203 = scmp.ne.s32.totalorder %s192, %s193
      %p204 = scmp.eq.s32.totalorder %s27, 0
      %p205 = por %p203, %p204
      %p206 = scmp.ne.s32.totalorder %s192, %s193
      %p207 = scmp.eq.s32.totalorder %s28, 1
      %p208 = por %p206, %p207
      %p210 = scmp.ne.s32.totalorder %s193, %s209
      %p211 = scmp.eq.s32.totalorder %s28, 0
      %p212 = por %p210, %p211
      %p213 = scmp.le.s32.totalorder 1, %s22
      %p214 = scmp.lt.s32.totalorder %s22, 3
      %p215 = pnand %p213, %p214
      %p216 = pneg %p215
      // Predicated region
      $region9: #{tpu_custom_call.1} parent=5 // pred_check
        _
      $region10: #{tpu_custom_call.1} parent=5 // pred_check_branch
        %218 = sbr.rel (%p215) target = $region12
      $region11: #{tpu_custom_call.1} parent=5 // pred_region
        %s219 = ssub.s32 %s22, 1
        // Predicated region
        $region13: #{tpu_custom_call.1} parent=11 // pred_check
          %p220 = pneg %p43
        $region14: #{tpu_custom_call.1} parent=11 // pred_check_branch
          %222 = sbr.rel (%p220) target = $region16
        $region15: #{tpu_custom_call.1} parent=11 // pred_region
          %s224 = ssub.s32 256, 256
          %225 = vsyncadd [#allocation3], %s224
          %s227 = sshll.u32 [#allocation2], 4
          %s228 = int_to_ptr.vmem [resolvable:$true] %s227
          %230 = dma.hbm_to_vmem [thread:$0]  %s0, 256, %s228, [#allocation3]
        $region16: #{tpu_custom_call.1} parent=11 // pred_fallthru
          _
        // Predicated region
        $region17: #{tpu_custom_call.1} parent=11 // pred_check
          %p231 = pneg %p64
        $region18: #{tpu_custom_call.1} parent=11 // pred_check_branch
          %233 = sbr.rel (%p231) target = $region20
        $region19: #{tpu_custom_call.1} parent=11 // pred_region
          %s235 = ssub.s32 2048, 2048
          %236 = vsyncadd [#allocation6], %s235
          %s237 = sshll.u32 [#allocation5], 4
          %s238 = int_to_ptr.vmem [resolvable:$true] %s237
          %243 = dma.hbm_to_vmem [thread:$0]  %s1, 2048, %s238, [#allocation6], 64, 64, 4
        $region20: #{tpu_custom_call.1} parent=11 // pred_fallthru
          _
        // Predicated region
        $region21: #{tpu_custom_call.1} parent=11 // pred_check
          %p244 = pneg %p85
        $region22: #{tpu_custom_call.1} parent=11 // pred_check_branch
          %246 = sbr.rel (%p244) target = $region24
        $region23: #{tpu_custom_call.1} parent=11 // pred_region
          %s248 = ssub.s32 2048, 2048
          %249 = vsyncadd [#allocation6], %s248
          %s250 = sshll.u32 [#allocation7], 4
          %s251 = int_to_ptr.vmem [resolvable:$true] %s250
          %256 = dma.hbm_to_vmem [thread:$0]  %s2, 2048, %s251, [#allocation6], 128, 128, 8
        $region24: #{tpu_custom_call.1} parent=11 // pred_fallthru
          _
        // Predicated region
        $region25: #{tpu_custom_call.1} parent=11 // pred_check
          %p257 = pneg %p106
        $region26: #{tpu_custom_call.1} parent=11 // pred_check_branch
          %259 = sbr.rel (%p257) target = $region28
        $region27: #{tpu_custom_call.1} parent=11 // pred_region
          %s261 = ssub.s32 8192, 8192
          %262 = vsyncadd [#allocation9], %s261
          %s263 = sshll.u32 [#allocation8], 4
          %s264 = int_to_ptr.vmem [resolvable:$true] %s263
          %269 = dma.hbm_to_vmem [thread:$0]  %s3, 8192, %s264, [#allocation9], 256, 256, 16
        $region28: #{tpu_custom_call.1} parent=11 // pred_fallthru
          _
        // Predicated region
        $region29: #{tpu_custom_call.1} parent=11 // pred_check
          %p270 = pneg %p127
        $region30: #{tpu_custom_call.1} parent=11 // pred_check_branch
          %272 = sbr.rel (%p270) target = $region32
        $region31: #{tpu_custom_call.1} parent=11 // pred_region
          %s274 = ssub.s32 208, 208
          %275 = vsyncadd [#allocation9], %s274
          %s277 = sshll.u32 [#allocation10], 4
          %s278 = int_to_ptr.vmem [resolvable:$true] %s277
          %280 = dma.hbm_to_vmem [thread:$0]  %s4, 208, %s278, [#allocation9]
        $region32: #{tpu_custom_call.1} parent=11 // pred_fallthru
          _
      $region12: #{tpu_custom_call.1} parent=5 // pred_fallthru
        _
      %p281 = scmp.lt.s32.totalorder %s22, 2
      // Predicated region
      $region33: #{tpu_custom_call.1} parent=5 // pred_check
        %p282 = pneg %p281
      $region34: #{tpu_custom_call.1} parent=5 // pred_check_branch
        %284 = sbr.rel (%p282) target = $region36
      $region35: #{tpu_custom_call.1} parent=5 // pred_region
        // Predicated region
        $region37: #{tpu_custom_call.1} parent=35 // pred_check
          %p285 = pneg %p147
        $region38: #{tpu_custom_call.1} parent=35 // pred_check_branch
          %287 = sbr.rel (%p285) target = $region40
        $region39: #{tpu_custom_call.1} parent=35 // pred_region
          %s288 = sand.u32 %s22, 1
          %s289 = scalar_lea.sflag [#allocation12], %s288
          %s290 = sand.u32 %s137, 1
          %s291 = smul.addr %s290, 2560
          %s292 = scalar_lea.vmem [#allocation11], %s291
          %s293 = smul.u32 10, %s22
          %s295 = ssub.s32 40960, 40960
          %296 = vsyncadd %s289, %s295
          %s297 = smul.addr %s293, 64
          %s298 = scalar_lea.hbm %s5, %s297
          %s299 = sshll.u32 %s292, 4
          %s300 = int_to_ptr.vmem [resolvable:$true] %s299
          %305 = dma.hbm_to_vmem [thread:$0]  %s298, 40960, %s300, %s289, 1280, 640, 40
        $region40: #{tpu_custom_call.1} parent=35 // pred_fallthru
          _
        // Predicated region
        $region41: #{tpu_custom_call.1} parent=35 // pred_check
          %p306 = pneg %p173
        $region42: #{tpu_custom_call.1} parent=35 // pred_check_branch
          %308 = sbr.rel (%p306) target = $region44
        $region43: #{tpu_custom_call.1} parent=35 // pred_region
          %s309 = sand.u32 %s22, 1
          %s310 = scalar_lea.sflag [#allocation12], %s309
          %s311 = sand.u32 %s163, 1
          %s312 = smul.addr %s311, 10
          %s313 = scalar_lea.vmem [#allocation13], %s312
          %s314 = smul.u32 10, %s22
          %s316 = ssub.s32 160, 160
          %317 = vsyncadd %s310, %s316
          %s318 = smul.addr %s314, 16
          %s319 = scalar_lea.hbm %s6, %s318
          %s321 = sshll.u32 %s313, 4
          %s322 = int_to_ptr.vmem [resolvable:$true] %s321
          %324 = dma.hbm_to_vmem [thread:$0]  %s319, 160, %s322, %s310
        $region44: #{tpu_custom_call.1} parent=35 // pred_fallthru
          _
      $region36: #{tpu_custom_call.1} parent=5 // pred_fallthru
        _
      %p325 = scmp.le.s32.totalorder 1, %s22
      %p326 = scmp.lt.s32.totalorder %s22, 3
      %p327 = pnand %p325, %p326
      %p328 = pneg %p327
      // Predicated region
      $region45: #{tpu_custom_call.1} parent=5 // pred_check
        _
      $region46: #{tpu_custom_call.1} parent=5 // pred_check_branch
        %330 = sbr.rel (%p327) target = $region48
      $region47: #{tpu_custom_call.1} parent=5 // pred_region
        %s331 = ssub.s32 %s22, 1
        // Predicated region
        $region49: #{tpu_custom_call.1} parent=47 // pred_check
          %p332 = pneg %p43
        $region50: #{tpu_custom_call.1} parent=47 // pred_check_branch
          %334 = sbr.rel (%p332) target = $region52
        $region51: #{tpu_custom_call.1} parent=47 // pred_region
          %335 = dma.done [#allocation3], 256
        $region52: #{tpu_custom_call.1} parent=47 // pred_fallthru
          _
        // Predicated region
        $region53: #{tpu_custom_call.1} parent=47 // pred_check
          %p336 = pneg %p64
        $region54: #{tpu_custom_call.1} parent=47 // pred_check_branch
          %338 = sbr.rel (%p336) target = $region56
        $region55: #{tpu_custom_call.1} parent=47 // pred_region
          %339 = dma.done [#allocation6], 2048
        $region56: #{tpu_custom_call.1} parent=47 // pred_fallthru
          _
        // Predicated region
        $region57: #{tpu_custom_call.1} parent=47 // pred_check
          %p340 = pneg %p85
        $region58: #{tpu_custom_call.1} parent=47 // pred_check_branch
          %342 = sbr.rel (%p340) target = $region60
        $region59: #{tpu_custom_call.1} parent=47 // pred_region
          %343 = dma.done [#allocation6], 2048
        $region60: #{tpu_custom_call.1} parent=47 // pred_fallthru
          _
        // Predicated region
        $region61: #{tpu_custom_call.1} parent=47 // pred_check
          %p344 = pneg %p106
        $region62: #{tpu_custom_call.1} parent=47 // pred_check_branch
          %346 = sbr.rel (%p344) target = $region64
        $region63: #{tpu_custom_call.1} parent=47 // pred_region
          %347 = dma.done [#allocation9], 8192
        $region64: #{tpu_custom_call.1} parent=47 // pred_fallthru
          _
        // Predicated region
        $region65: #{tpu_custom_call.1} parent=47 // pred_check
          %p348 = pneg %p127
        $region66: #{tpu_custom_call.1} parent=47 // pred_check_branch
          %350 = sbr.rel (%p348) target = $region68
        $region67: #{tpu_custom_call.1} parent=47 // pred_region
          %351 = dma.done [#allocation9], 208
        $region68: #{tpu_custom_call.1} parent=47 // pred_fallthru
          _
        %s352 = sand.u32 %s27, 1
        %s353 = scalar_lea.sflag [#allocation12], %s352
        %s354 = sand.u32 %s140, 1
        %s355 = smul.addr %s354, 2560
        %s356 = scalar_lea.vmem [#allocation11], %s355
        // Predicated region
        $region69: #{tpu_custom_call.1} parent=47 // pred_check
          %p357 = pneg %p153
        $region70: #{tpu_custom_call.1} parent=47 // pred_check_branch
          %359 = sbr.rel (%p357) target = $region72
        $region71: #{tpu_custom_call.1} parent=47 // pred_region
          %360 = dma.done %s353, 40960
        $region72: #{tpu_custom_call.1} parent=47 // pred_fallthru
          _
        %s361 = sand.u32 %s27, 1
        %s362 = scalar_lea.sflag [#allocation12], %s361
        %s363 = sand.u32 %s166, 1
        %s364 = smul.addr %s363, 10
        %s365 = scalar_lea.vmem [#allocation13], %s364
        // Predicated region
        $region73: #{tpu_custom_call.1} parent=47 // pred_check
          %p366 = pneg %p179
        $region74: #{tpu_custom_call.1} parent=47 // pred_check_branch
          %368 = sbr.rel (%p366) target = $region76
        $region75: #{tpu_custom_call.1} parent=47 // pred_region
          %369 = dma.done %s362, 160
        $region76: #{tpu_custom_call.1} parent=47 // pred_fallthru
          _
        %p370 = pneg %p43
        %p371 = pneg %p40
        %p372 = pneg %p64
        %p373 = pneg %p61
        %p374 = pneg %p85
        %p375 = pneg %p82
        %p376 = pneg %p106
        %p377 = pneg %p103
        %p378 = pneg %p127
        %p379 = pneg %p124
        %s380 = sand.u32 %s27, 1
        %s381 = scalar_lea.sflag [#allocation12], %s380
        %s382 = sand.u32 %s140, 1
        %s383 = smul.addr %s382, 2560
        %s384 = scalar_lea.vmem [#allocation11], %s383
        %p385 = pneg %p153
        %p386 = pneg %p150
        %s387 = sand.u32 %s27, 1
        %s388 = scalar_lea.sflag [#allocation12], %s387
        %s389 = sand.u32 %s166, 1
        %s390 = smul.addr %s389, 10
        %s391 = scalar_lea.vmem [#allocation13], %s390
        %p392 = pneg %p179
        %p393 = pneg %p176
        %p394 = pneg %p205
        %p395 = pneg %p202
        %s396 = sand.u32 %s192, 1
        %s397 = scalar_lea.sflag [#allocation4], %s396
        %s398 = sand.u32 %s192, 1
        %s399 = smul.addr %s398, 80
        %s400 = scalar_lea.vmem [#allocation14], %s399
        %s401 = smul.u32 10, %s27
        %s402 = smul.u32 10, %s27
        %s403 = smul.u32 10, %s27
        %v405 = vld [vmem:[#allocation10] sm:$0x1]
        %v406 = vld [vmem:[#allocation10 + $0x1] sm:$0x3]
        %v407 = vld [vmem:[#allocation10 + $0x3] sm:$0x3]
        %v408 = vld [vmem:[#allocation10 + $0x5] sm:$0xf]
        %v409 = vld [vmem:[#allocation10 + $0x9] sm:$0xf]
        %v410 = vld [vmem:[#allocation2] sm:$0xff]
        %v411 = vld [vmem:[#allocation2 + $0x8] sm:$0xff]
        %v412 = vpack.c.bf16 %v410, %v410
        %v413 = vpack.c.bf16 %v411, %v411
        %v414 = vld [vmem:[#allocation5] sm:$0xf]
        %v415 = vld [vmem:[#allocation5 + $0x4] sm:$0xf]
        %v416 = vld [vmem:[#allocation5 + $0x8] sm:$0xf]
        %v417 = vld [vmem:[#allocation5 + $0xc] sm:$0xf]
        %v418 = vld [vmem:[#allocation5 + $0x10] sm:$0xf]
        %v419 = vld [vmem:[#allocation5 + $0x14] sm:$0xf]
        %v420 = vld [vmem:[#allocation5 + $0x18] sm:$0xf]
        %v421 = vld [vmem:[#allocation5 + $0x1c] sm:$0xf]
        %v422 = vld [vmem:[#allocation5 + $0x20] sm:$0xf]
        %v423 = vld [vmem:[#allocation5 + $0x24] sm:$0xf]
        %v424 = vld [vmem:[#allocation5 + $0x28] sm:$0xf]
        %v425 = vld [vmem:[#allocation5 + $0x2c] sm:$0xf]
        %v426 = vld [vmem:[#allocation5 + $0x30] sm:$0xf]
        %v427 = vld [vmem:[#allocation5 + $0x34] sm:$0xf]
        %v428 = vld [vmem:[#allocation5 + $0x38] sm:$0xf]
        %v429 = vld [vmem:[#allocation5 + $0x3c] sm:$0xf]
        %v430 = vld [vmem:[#allocation5 + $0x40] sm:$0xf]
        %v431 = vld [vmem:[#allocation5 + $0x44] sm:$0xf]
        %v432 = vld [vmem:[#allocation5 + $0x48] sm:$0xf]
        %v433 = vld [vmem:[#allocation5 + $0x4c] sm:$0xf]
        %v434 = vld [vmem:[#allocation5 + $0x50] sm:$0xf]
        %v435 = vld [vmem:[#allocation5 + $0x54] sm:$0xf]
        %v436 = vld [vmem:[#allocation5 + $0x58] sm:$0xf]
        %v437 = vld [vmem:[#allocation5 + $0x5c] sm:$0xf]
        %v438 = vld [vmem:[#allocation5 + $0x60] sm:$0xf]
        %v439 = vld [vmem:[#allocation5 + $0x64] sm:$0xf]
        %v440 = vld [vmem:[#allocation5 + $0x68] sm:$0xf]
        %v441 = vld [vmem:[#allocation5 + $0x6c] sm:$0xf]
        %v442 = vld [vmem:[#allocation5 + $0x70] sm:$0xf]
        %v443 = vld [vmem:[#allocation5 + $0x74] sm:$0xf]
        %v444 = vld [vmem:[#allocation5 + $0x78] sm:$0xf]
        %v445 = vld [vmem:[#allocation5 + $0x7c] sm:$0xf]
        %v447 = vlaneseq
        %v448 = vshrl.u32 %v447, 7
        %v449 = vsub.s32 0, %v448
        %v450 = vrot.slane %v405, %v449
        %v484 = vunpack.c.l.b16 %v414
        %v485 = vunpack.c.l.b16 %v415
        %v486 = vunpack.c.l.b16 %v416
        %v487 = vunpack.c.l.b16 %v417
        %v488 = vunpack.c.l.b16 %v418
        %v489 = vunpack.c.l.b16 %v419
        %v490 = vunpack.c.l.b16 %v420
        %v491 = vunpack.c.l.b16 %v421
        %v492 = vunpack.c.l.b16 %v422
        %v493 = vunpack.c.l.b16 %v423
        %v494 = vunpack.c.l.b16 %v424
        %v495 = vunpack.c.l.b16 %v425
        %v496 = vunpack.c.l.b16 %v426
        %v497 = vunpack.c.l.b16 %v427
        %v498 = vunpack.c.l.b16 %v428
        %v499 = vunpack.c.l.b16 %v429
        %v500 = vunpack.c.l.b16 %v430
        %v501 = vunpack.c.l.b16 %v431
        %v502 = vunpack.c.l.b16 %v432
        %v503 = vunpack.c.l.b16 %v433
        %v504 = vunpack.c.l.b16 %v434
        %v505 = vunpack.c.l.b16 %v435
        %v506 = vunpack.c.l.b16 %v436
        %v507 = vunpack.c.l.b16 %v437
        %v508 = vunpack.c.l.b16 %v438
        %v509 = vunpack.c.l.b16 %v439
        %v510 = vunpack.c.l.b16 %v440
        %v511 = vunpack.c.l.b16 %v441
        %v512 = vunpack.c.l.b16 %v442
        %v513 = vunpack.c.l.b16 %v443
        %v514 = vunpack.c.l.b16 %v444
        %v515 = vunpack.c.l.b16 %v445
        %v516 = vpack.c.b16 %v485, %v484
        %v517 = vpack.c.b16 %v487, %v486
        %v518 = vpack.c.b16 %v489, %v488
        %v519 = vpack.c.b16 %v491, %v490
        %v520 = vpack.c.b16 %v493, %v492
        %v521 = vpack.c.b16 %v495, %v494
        %v522 = vpack.c.b16 %v497, %v496
        %v523 = vpack.c.b16 %v499, %v498
        %v524 = vpack.c.b16 %v501, %v500
        %v525 = vpack.c.b16 %v503, %v502
        %v526 = vpack.c.b16 %v505, %v504
        %v527 = vpack.c.b16 %v507, %v506
        %v528 = vpack.c.b16 %v509, %v508
        %v529 = vpack.c.b16 %v511, %v510
        %v530 = vpack.c.b16 %v513, %v512
        %v531 = vpack.c.b16 %v515, %v514
        %548 = vmatprep.subr.bf16.mxu0 0
        %549 = vmatpush1.bf16.msra.mxu0 %v523
        %550 = vmatprep.subr.bf16.mxu0 0
        %551 = vmatpush1.bf16.msra.mxu0 %v522
        %552 = vmatprep.subr.bf16.mxu0 0
        %553 = vmatpush1.bf16.msra.mxu0 %v521
        %554 = vmatprep.subr.bf16.mxu0 0
        %555 = vmatpush1.bf16.msra.mxu0 %v520
        %556 = vmatprep.subr.bf16.mxu0 0
        %557 = vmatpush1.bf16.msra.mxu0 %v519
        %558 = vmatprep.subr.bf16.mxu0 0
        %559 = vmatpush1.bf16.msra.mxu0 %v518
        %560 = vmatprep.subr.bf16.mxu0 0
        %561 = vmatpush1.bf16.msra.mxu0 %v517
        %562 = vmatprep.subr.bf16.mxu0 0
        %563 = vmatpush1.bf16.msra.mxu0 %v516
        %564 = vmatprep.subr.bf16.mxu0 0
        %565 = vmatpush2.bf16.msra.mxu0 %v531
        %566 = vmatprep.subr.bf16.mxu0 0
        %567 = vmatpush2.bf16.msra.mxu0 %v530
        %568 = vmatprep.subr.bf16.mxu0 0
        %569 = vmatpush2.bf16.msra.mxu0 %v529
        %570 = vmatprep.subr.bf16.mxu0 0
        %571 = vmatpush2.bf16.msra.mxu0 %v528
        %572 = vmatprep.subr.bf16.mxu0 0
        %573 = vmatpush2.bf16.msra.mxu0 %v527
        %574 = vmatprep.subr.bf16.mxu0 0
        %575 = vmatpush2.bf16.msra.mxu0 %v526
        %576 = vmatprep.subr.bf16.mxu0 0
        %577 = vmatpush2.bf16.msra.mxu0 %v525
        %578 = vmatprep.subr.bf16.mxu0 0
        %579 = vmatpush2.bf16.msra.mxu0 %v524
        %580 = vmatprep.mubr.bf16.mxu0 %v413
        %581 = vmatmul.mubr.bf16.gmra.mxu0 %v412
        %v582 = vpop.f32.mrf.mxu0
        %v583 = vadd.f32 %v450, %v582
        %v584 = vpop.f32.mrf.mxu0
        %v585 = vpop.f32.mrf.mxu0
        %v586 = vpop.f32.mrf.mxu0
        %587 = vdwg.mxu0
        %v588 = vmax.f32 %v583, 0.0
        %v589 = vpack.c.bf16 %v588, %v588
        %v590 = vld [vmem:[#allocation7] sm:$0xff]
        %v591 = vld [vmem:[#allocation7 + $0x8] sm:$0xff]
        %v592 = vld [vmem:[#allocation7 + $0x10] sm:$0xff]
        %v593 = vld [vmem:[#allocation7 + $0x18] sm:$0xff]
        %v594 = vld [vmem:[#allocation7 + $0x20] sm:$0xff]
        %v595 = vld [vmem:[#allocation7 + $0x28] sm:$0xff]
        %v596 = vld [vmem:[#allocation7 + $0x30] sm:$0xff]
        %v597 = vld [vmem:[#allocation7 + $0x38] sm:$0xff]
        %v598 = vld [vmem:[#allocation7 + $0x40] sm:$0xff]
        %v599 = vld [vmem:[#allocation7 + $0x48] sm:$0xff]
        %v600 = vld [vmem:[#allocation7 + $0x50] sm:$0xff]
        %v601 = vld [vmem:[#allocation7 + $0x58] sm:$0xff]
        %v602 = vld [vmem:[#allocation7 + $0x60] sm:$0xff]
        %v603 = vld [vmem:[#allocation7 + $0x68] sm:$0xff]
        %v604 = vld [vmem:[#allocation7 + $0x70] sm:$0xff]
        %v605 = vld [vmem:[#allocation7 + $0x78] sm:$0xff]
        %v622 = vunpack.c.l.b16 %v590
        %v623 = vunpack.c.h.b16 %v590
        %v624 = vunpack.c.l.b16 %v591
        %v625 = vunpack.c.h.b16 %v591
        %v626 = vunpack.c.l.b16 %v592
        %v627 = vunpack.c.h.b16 %v592
        %v628 = vunpack.c.l.b16 %v593
        %v629 = vunpack.c.h.b16 %v593
        %v630 = vunpack.c.l.b16 %v594
        %v631 = vunpack.c.h.b16 %v594
        %v632 = vunpack.c.l.b16 %v595
        %v633 = vunpack.c.h.b16 %v595
        %v634 = vunpack.c.l.b16 %v596
        %v635 = vunpack.c.h.b16 %v596
        %v636 = vunpack.c.l.b16 %v597
        %v637 = vunpack.c.h.b16 %v597
        %v638 = vunpack.c.l.b16 %v598
        %v639 = vunpack.c.h.b16 %v598
        %v640 = vunpack.c.l.b16 %v599
        %v641 = vunpack.c.h.b16 %v599
        %v642 = vunpack.c.l.b16 %v600
        %v643 = vunpack.c.h.b16 %v600
        %v644 = vunpack.c.l.b16 %v601
        %v645 = vunpack.c.h.b16 %v601
        %v646 = vunpack.c.l.b16 %v602
        %v647 = vunpack.c.h.b16 %v602
        %v648 = vunpack.c.l.b16 %v603
        %v649 = vunpack.c.h.b16 %v603
        %v650 = vunpack.c.l.b16 %v604
        %v651 = vunpack.c.h.b16 %v604
        %v652 = vunpack.c.l.b16 %v605
        %v653 = vunpack.c.h.b16 %v605
        %v654 = vpack.c.b16 %v624, %v622
        %v655 = vpack.c.b16 %v625, %v623
        %v656 = vpack.c.b16 %v628, %v626
        %v657 = vpack.c.b16 %v629, %v627
        %v658 = vpack.c.b16 %v632, %v630
        %v659 = vpack.c.b16 %v633, %v631
        %v660 = vpack.c.b16 %v636, %v634
        %v661 = vpack.c.b16 %v637, %v635
        %v662 = vpack.c.b16 %v640, %v638
        %v663 = vpack.c.b16 %v641, %v639
        %v664 = vpack.c.b16 %v644, %v642
        %v665 = vpack.c.b16 %v645, %v643
        %v666 = vpack.c.b16 %v648, %v646
        %v667 = vpack.c.b16 %v649, %v647
        %v668 = vpack.c.b16 %v652, %v650
        %v669 = vpack.c.b16 %v653, %v651
        %686 = vmatprep.subr.bf16.mxu0 %v669
        %687 = vmatpush1.bf16.msra.mxu0 %v668
        %688 = vmatprep.subr.bf16.mxu0 %v667
        %689 = vmatpush1.bf16.msra.mxu0 %v666
        %690 = vmatprep.subr.bf16.mxu0 %v665
        %691 = vmatpush1.bf16.msra.mxu0 %v664
        %692 = vmatprep.subr.bf16.mxu0 %v663
        %693 = vmatpush1.bf16.msra.mxu0 %v662
        %694 = vmatprep.subr.bf16.mxu0 %v661
        %695 = vmatpush1.bf16.msra.mxu0 %v660
        %696 = vmatprep.subr.bf16.mxu0 %v659
        %697 = vmatpush1.bf16.msra.mxu0 %v658
        %698 = vmatprep.subr.bf16.mxu0 %v657
        %699 = vmatpush1.bf16.msra.mxu0 %v656
        %700 = vmatprep.subr.bf16.mxu0 %v655
        %701 = vmatpush1.bf16.msra.mxu0 %v654
        %702 = vmatprep.subr.bf16.mxu0 0
        %703 = vmatpush2.bf16.msra.mxu0 0
        %704 = vmatprep.subr.bf16.mxu0 0
        %705 = vmatpush2.bf16.msra.mxu0 0
        %706 = vmatprep.subr.bf16.mxu0 0
        %707 = vmatpush2.bf16.msra.mxu0 0
        %708 = vmatprep.subr.bf16.mxu0 0
        %709 = vmatpush2.bf16.msra.mxu0 0
        %710 = vmatprep.subr.bf16.mxu0 0
        %711 = vmatpush2.bf16.msra.mxu0 0
        %712 = vmatprep.subr.bf16.mxu0 0
        %713 = vmatpush2.bf16.msra.mxu0 0
        %714 = vmatprep.subr.bf16.mxu0 0
        %715 = vmatpush2.bf16.msra.mxu0 0
        %716 = vmatprep.subr.bf16.mxu0 0
        %717 = vmatpush2.bf16.msra.mxu0 0
        %718 = vmatprep.mubr.bf16.mxu0 0
        %719 = vmatmul.mubr.bf16.gmra.mxu0 %v589
        %v720 = vpop.f32.mrf.mxu0
        %v721 = vadd.f32 0.0, %v720
        %v722 = vpop.f32.mrf.mxu0
        %v723 = vadd.f32 0.0, %v722
        %v724 = vpop.f32.mrf.mxu0
        %v725 = vpop.f32.mrf.mxu0
        %726 = vdwg.mxu0
        %v727 = vrot.slane %v721, 4
        %v728 = vadd.f32 %v721, %v727
        %v729 = vrot.slane %v728, 2
        %v730 = vadd.f32 %v728, %v729
        %v731 = vrot.slane %v730, 1
        %v732 = vadd.f32 %v730, %v731
        %v733 = vrot.slane %v723, 4
        %v734 = vadd.f32 %v723, %v733
        %v735 = vrot.slane %v734, 2
        %v736 = vadd.f32 %v734, %v735
        %v737 = vrot.slane %v736, 1
        %v738 = vadd.f32 %v736, %v737
        %v739 = vrcp.pop 8.0
        %v740 = vmul.f32 %v732, %v739
        %v741 = vmul.f32 %v738, %v739
        %v742 = vsub.f32 %v721, %v740
        %v743 = vsub.f32 %v723, %v741
        %v744 = vmul.f32 %v742, %v742
        %v745 = vmul.f32 %v743, %v743
        %v746 = vrot.slane %v744, 4
        %v747 = vadd.f32 %v744, %v746
        %v748 = vrot.slane %v747, 2
        %v749 = vadd.f32 %v747, %v748
        %v750 = vrot.slane %v749, 1
        %v751 = vadd.f32 %v749, %v750
        %v752 = vrot.slane %v745, 4
        %v753 = vadd.f32 %v745, %v752
        %v754 = vrot.slane %v753, 2
        %v755 = vadd.f32 %v753, %v754
        %v756 = vrot.slane %v755, 1
        %v757 = vadd.f32 %v755, %v756
        %v758 = vmul.f32 %v751, %v739
        %v759 = vmul.f32 %v757, %v739
        %v760 = vadd.f32 %v758, 1e-05
        %v761 = vadd.f32 %v759, 1e-05
        %v762 = vrsqrt.pop %v760
        %v763 = vrsqrt.pop %v761
        %v766 = vcombine.low %v762, %v763
        %v768 = vunpack.c.l.s4 1966171168
        %v769 = vunpack.c.0.s8 %v768
        %v770 = vlaneseq
        %v771 = vshrl.u32 %v770, 7
        %v772 = vsub.s32 %v769, %v771
        %v773 = vrot.slane %v766, %v772
        %v775 = vunpack.c.l.s4 1966171168
        %v776 = vunpack.c.0.s8 %v775
        %v777 = vlaneseq
        %v778 = vshrl.u32 %v777, 7
        %v779 = vsub.s32 %v776, %v778
        %v780 = vrot.slane %v773, %v779
        %v782 = vmul.f32 %v406, %v780
        %v784 = vlaneseq
        %v785 = vshrl.u32 %v784, 7
        %v786 = vsub.s32 0, %v785
        %v787 = vrot.slane %v782, %v786
        %v788 = vlaneseq
        %v789 = vshrl.u32 %v788, 7
        %v790 = vsub.s32 1, %v789
        %v791 = vrot.slane %v782, %v790
        %v794 = vmul.f32 %v721, %v787
        %v795 = vmul.f32 %v723, %v791
        %v798 = vcombine.low %v740, %v741
        %v800 = vunpack.c.l.s4 1966171168
        %v801 = vunpack.c.0.s8 %v800
        %v802 = vlaneseq
        %v803 = vshrl.u32 %v802, 7
        %v804 = vsub.s32 %v801, %v803
        %v805 = vrot.slane %v798, %v804
        %v807 = vunpack.c.l.s4 1966171168
        %v808 = vunpack.c.0.s8 %v807
        %v809 = vlaneseq
        %v810 = vshrl.u32 %v809, 7
        %v811 = vsub.s32 %v808, %v810
        %v812 = vrot.slane %v805, %v811
        %v814 = vmul.f32 %v782, %v812
        %v815 = vsub.f32 %v407, %v814
        %v817 = vlaneseq
        %v818 = vshrl.u32 %v817, 7
        %v819 = vsub.s32 0, %v818
        %v820 = vrot.slane %v815, %v819
        %v821 = vlaneseq
        %v822 = vshrl.u32 %v821, 7
        %v823 = vsub.s32 1, %v822
        %v824 = vrot.slane %v815, %v823
        %v827 = vadd.f32 %v794, %v820
        %v828 = vadd.f32 %v795, %v824
        %v829 = vmax.f32 %v827, 0.0
        %v830 = vmax.f32 %v828, 0.0
        %v831 = vpack.c.bf16 %v829, %v829
        %v832 = vpack.c.bf16 %v830, %v830
        %v833 = vld [vmem:[#allocation8] sm:$0xff]
        %v834 = vld [vmem:[#allocation8 + $0x8] sm:$0xff]
        %v835 = vld [vmem:[#allocation8 + $0x10] sm:$0xff]
        %v836 = vld [vmem:[#allocation8 + $0x18] sm:$0xff]
        %v837 = vld [vmem:[#allocation8 + $0x20] sm:$0xff]
        %v838 = vld [vmem:[#allocation8 + $0x28] sm:$0xff]
        %v839 = vld [vmem:[#allocation8 + $0x30] sm:$0xff]
        %v840 = vld [vmem:[#allocation8 + $0x38] sm:$0xff]
        %v841 = vld [vmem:[#allocation8 + $0x40] sm:$0xff]
        %v842 = vld [vmem:[#allocation8 + $0x48] sm:$0xff]
        %v843 = vld [vmem:[#allocation8 + $0x50] sm:$0xff]
        %v844 = vld [vmem:[#allocation8 + $0x58] sm:$0xff]
        %v845 = vld [vmem:[#allocation8 + $0x60] sm:$0xff]
        %v846 = vld [vmem:[#allocation8 + $0x68] sm:$0xff]
        %v847 = vld [vmem:[#allocation8 + $0x70] sm:$0xff]
        %v848 = vld [vmem:[#allocation8 + $0x78] sm:$0xff]
        %v849 = vld [vmem:[#allocation8 + $0x80] sm:$0xff]
        %v850 = vld [vmem:[#allocation8 + $0x88] sm:$0xff]
        %v851 = vld [vmem:[#allocation8 + $0x90] sm:$0xff]
        %v852 = vld [vmem:[#allocation8 + $0x98] sm:$0xff]
        %v853 = vld [vmem:[#allocation8 + $0xa0] sm:$0xff]
        %v854 = vld [vmem:[#allocation8 + $0xa8] sm:$0xff]
        %v855 = vld [vmem:[#allocation8 + $0xb0] sm:$0xff]
        %v856 = vld [vmem:[#allocation8 + $0xb8] sm:$0xff]
        %v857 = vld [vmem:[#allocation8 + $0xc0] sm:$0xff]
        %v858 = vld [vmem:[#allocation8 + $0xc8] sm:$0xff]
        %v859 = vld [vmem:[#allocation8 + $0xd0] sm:$0xff]
        %v860 = vld [vmem:[#allocation8 + $0xd8] sm:$0xff]
        %v861 = vld [vmem:[#allocation8 + $0xe0] sm:$0xff]
        %v862 = vld [vmem:[#allocation8 + $0xe8] sm:$0xff]
        %v863 = vld [vmem:[#allocation8 + $0xf0] sm:$0xff]
        %v864 = vld [vmem:[#allocation8 + $0xf8] sm:$0xff]
        %v865 = vld [vmem:[#allocation8 + $0x100] sm:$0xff]
        %v866 = vld [vmem:[#allocation8 + $0x108] sm:$0xff]
        %v867 = vld [vmem:[#allocation8 + $0x110] sm:$0xff]
        %v868 = vld [vmem:[#allocation8 + $0x118] sm:$0xff]
        %v869 = vld [vmem:[#allocation8 + $0x120] sm:$0xff]
        %v870 = vld [vmem:[#allocation8 + $0x128] sm:$0xff]
        %v871 = vld [vmem:[#allocation8 + $0x130] sm:$0xff]
        %v872 = vld [vmem:[#allocation8 + $0x138] sm:$0xff]
        %v873 = vld [vmem:[#allocation8 + $0x140] sm:$0xff]
        %v874 = vld [vmem:[#allocation8 + $0x148] sm:$0xff]
        %v875 = vld [vmem:[#allocation8 + $0x150] sm:$0xff]
        %v876 = vld [vmem:[#allocation8 + $0x158] sm:$0xff]
        %v877 = vld [vmem:[#allocation8 + $0x160] sm:$0xff]
        %v878 = vld [vmem:[#allocation8 + $0x168] sm:$0xff]
        %v879 = vld [vmem:[#allocation8 + $0x170] sm:$0xff]
        %v880 = vld [vmem:[#allocation8 + $0x178] sm:$0xff]
        %v881 = vld [vmem:[#allocation8 + $0x180] sm:$0xff]
        %v882 = vld [vmem:[#allocation8 + $0x188] sm:$0xff]
        %v883 = vld [vmem:[#allocation8 + $0x190] sm:$0xff]
        %v884 = vld [vmem:[#allocation8 + $0x198] sm:$0xff]
        %v885 = vld [vmem:[#allocation8 + $0x1a0] sm:$0xff]
        %v886 = vld [vmem:[#allocation8 + $0x1a8] sm:$0xff]
        %v887 = vld [vmem:[#allocation8 + $0x1b0] sm:$0xff]
        %v888 = vld [vmem:[#allocation8 + $0x1b8] sm:$0xff]
        %v889 = vld [vmem:[#allocation8 + $0x1c0] sm:$0xff]
        %v890 = vld [vmem:[#allocation8 + $0x1c8] sm:$0xff]
        %v891 = vld [vmem:[#allocation8 + $0x1d0] sm:$0xff]
        %v892 = vld [vmem:[#allocation8 + $0x1d8] sm:$0xff]
        %v893 = vld [vmem:[#allocation8 + $0x1e0] sm:$0xff]
        %v894 = vld [vmem:[#allocation8 + $0x1e8] sm:$0xff]
        %v895 = vld [vmem:[#allocation8 + $0x1f0] sm:$0xff]
        %v896 = vld [vmem:[#allocation8 + $0x1f8] sm:$0xff]
        %v961 = vunpack.c.l.b16 %v833
        %v962 = vunpack.c.h.b16 %v833
        %v963 = vunpack.c.l.b16 %v834
        %v964 = vunpack.c.h.b16 %v834
        %v965 = vunpack.c.l.b16 %v835
        %v966 = vunpack.c.h.b16 %v835
        %v967 = vunpack.c.l.b16 %v836
        %v968 = vunpack.c.h.b16 %v836
        %v969 = vunpack.c.l.b16 %v837
        %v970 = vunpack.c.h.b16 %v837
        %v971 = vunpack.c.l.b16 %v838
        %v972 = vunpack.c.h.b16 %v838
        %v973 = vunpack.c.l.b16 %v839
        %v974 = vunpack.c.h.b16 %v839
        %v975 = vunpack.c.l.b16 %v840
        %v976 = vunpack.c.h.b16 %v840
        %v977 = vunpack.c.l.b16 %v841
        %v978 = vunpack.c.h.b16 %v841
        %v979 = vunpack.c.l.b16 %v842
        %v980 = vunpack.c.h.b16 %v842
        %v981 = vunpack.c.l.b16 %v843
        %v982 = vunpack.c.h.b16 %v843
        %v983 = vunpack.c.l.b16 %v844
        %v984 = vunpack.c.h.b16 %v844
        %v985 = vunpack.c.l.b16 %v845
        %v986 = vunpack.c.h.b16 %v845
        %v987 = vunpack.c.l.b16 %v846
        %v988 = vunpack.c.h.b16 %v846
        %v989 = vunpack.c.l.b16 %v847
        %v990 = vunpack.c.h.b16 %v847
        %v991 = vunpack.c.l.b16 %v848
        %v992 = vunpack.c.h.b16 %v848
        %v993 = vunpack.c.l.b16 %v849
        %v994 = vunpack.c.h.b16 %v849
        %v995 = vunpack.c.l.b16 %v850
        %v996 = vunpack.c.h.b16 %v850
        %v997 = vunpack.c.l.b16 %v851
        %v998 = vunpack.c.h.b16 %v851
        %v999 = vunpack.c.l.b16 %v852
        %v1000 = vunpack.c.h.b16 %v852
        %v1001 = vunpack.c.l.b16 %v853
        %v1002 = vunpack.c.h.b16 %v853
        %v1003 = vunpack.c.l.b16 %v854
        %v1004 = vunpack.c.h.b16 %v854
        %v1005 = vunpack.c.l.b16 %v855
        %v1006 = vunpack.c.h.b16 %v855
        %v1007 = vunpack.c.l.b16 %v856
        %v1008 = vunpack.c.h.b16 %v856
        %v1009 = vunpack.c.l.b16 %v857
        %v1010 = vunpack.c.h.b16 %v857
        %v1011 = vunpack.c.l.b16 %v858
        %v1012 = vunpack.c.h.b16 %v858
        %v1013 = vunpack.c.l.b16 %v859
        %v1014 = vunpack.c.h.b16 %v859
        %v1015 = vunpack.c.l.b16 %v860
        %v1016 = vunpack.c.h.b16 %v860
        %v1017 = vunpack.c.l.b16 %v861
        %v1018 = vunpack.c.h.b16 %v861
        %v1019 = vunpack.c.l.b16 %v862
        %v1020 = vunpack.c.h.b16 %v862
        %v1021 = vunpack.c.l.b16 %v863
        %v1022 = vunpack.c.h.b16 %v863
        %v1023 = vunpack.c.l.b16 %v864
        %v1024 = vunpack.c.h.b16 %v864
        %v1025 = vunpack.c.l.b16 %v865
        %v1026 = vunpack.c.h.b16 %v865
        %v1027 = vunpack.c.l.b16 %v866
        %v1028 = vunpack.c.h.b16 %v866
        %v1029 = vunpack.c.l.b16 %v867
        %v1030 = vunpack.c.h.b16 %v867
        %v1031 = vunpack.c.l.b16 %v868
        %v1032 = vunpack.c.h.b16 %v868
        %v1033 = vunpack.c.l.b16 %v869
        %v1034 = vunpack.c.h.b16 %v869
        %v1035 = vunpack.c.l.b16 %v870
        %v1036 = vunpack.c.h.b16 %v870
        %v1037 = vunpack.c.l.b16 %v871
        %v1038 = vunpack.c.h.b16 %v871
        %v1039 = vunpack.c.l.b16 %v872
        %v1040 = vunpack.c.h.b16 %v872
        %v1041 = vunpack.c.l.b16 %v873
        %v1042 = vunpack.c.h.b16 %v873
        %v1043 = vunpack.c.l.b16 %v874
        %v1044 = vunpack.c.h.b16 %v874
        %v1045 = vunpack.c.l.b16 %v875
        %v1046 = vunpack.c.h.b16 %v875
        %v1047 = vunpack.c.l.b16 %v876
        %v1048 = vunpack.c.h.b16 %v876
        %v1049 = vunpack.c.l.b16 %v877
        %v1050 = vunpack.c.h.b16 %v877
        %v1051 = vunpack.c.l.b16 %v878
        %v1052 = vunpack.c.h.b16 %v878
        %v1053 = vunpack.c.l.b16 %v879
        %v1054 = vunpack.c.h.b16 %v879
        %v1055 = vunpack.c.l.b16 %v880
        %v1056 = vunpack.c.h.b16 %v880
        %v1057 = vunpack.c.l.b16 %v881
        %v1058 = vunpack.c.h.b16 %v881
        %v1059 = vunpack.c.l.b16 %v882
        %v1060 = vunpack.c.h.b16 %v882
        %v1061 = vunpack.c.l.b16 %v883
        %v1062 = vunpack.c.h.b16 %v883
        %v1063 = vunpack.c.l.b16 %v884
        %v1064 = vunpack.c.h.b16 %v884
        %v1065 = vunpack.c.l.b16 %v885
        %v1066 = vunpack.c.h.b16 %v885
        %v1067 = vunpack.c.l.b16 %v886
        %v1068 = vunpack.c.h.b16 %v886
        %v1069 = vunpack.c.l.b16 %v887
        %v1070 = vunpack.c.h.b16 %v887
        %v1071 = vunpack.c.l.b16 %v888
        %v1072 = vunpack.c.h.b16 %v888
        %v1073 = vunpack.c.l.b16 %v889
        %v1074 = vunpack.c.h.b16 %v889
        %v1075 = vunpack.c.l.b16 %v890
        %v1076 = vunpack.c.h.b16 %v890
        %v1077 = vunpack.c.l.b16 %v891
        %v1078 = vunpack.c.h.b16 %v891
        %v1079 = vunpack.c.l.b16 %v892
        %v1080 = vunpack.c.h.b16 %v892
        %v1081 = vunpack.c.l.b16 %v893
        %v1082 = vunpack.c.h.b16 %v893
        %v1083 = vunpack.c.l.b16 %v894
        %v1084 = vunpack.c.h.b16 %v894
        %v1085 = vunpack.c.l.b16 %v895
        %v1086 = vunpack.c.h.b16 %v895
        %v1087 = vunpack.c.l.b16 %v896
        %v1088 = vunpack.c.h.b16 %v896
        %v1089 = vpack.c.b16 %v965, %v961
        %v1090 = vpack.c.b16 %v966, %v962
        %v1091 = vpack.c.b16 %v967, %v963
        %v1092 = vpack.c.b16 %v968, %v964
        %v1093 = vpack.c.b16 %v973, %v969
        %v1094 = vpack.c.b16 %v974, %v970
        %v1095 = vpack.c.b16 %v975, %v971
        %v1096 = vpack.c.b16 %v976, %v972
        %v1097 = vpack.c.b16 %v981, %v977
        %v1098 = vpack.c.b16 %v982, %v978
        %v1099 = vpack.c.b16 %v983, %v979
        %v1100 = vpack.c.b16 %v984, %v980
        %v1101 = vpack.c.b16 %v989, %v985
        %v1102 = vpack.c.b16 %v990, %v986
        %v1103 = vpack.c.b16 %v991, %v987
        %v1104 = vpack.c.b16 %v992, %v988
        %v1105 = vpack.c.b16 %v997, %v993
        %v1106 = vpack.c.b16 %v998, %v994
        %v1107 = vpack.c.b16 %v999, %v995
        %v1108 = vpack.c.b16 %v1000, %v996
        %v1109 = vpack.c.b16 %v1005, %v1001
        %v1110 = vpack.c.b16 %v1006, %v1002
        %v1111 = vpack.c.b16 %v1007, %v1003
        %v1112 = vpack.c.b16 %v1008, %v1004
        %v1113 = vpack.c.b16 %v1013, %v1009
        %v1114 = vpack.c.b16 %v1014, %v1010
        %v1115 = vpack.c.b16 %v1015, %v1011
        %v1116 = vpack.c.b16 %v1016, %v1012
        %v1117 = vpack.c.b16 %v1021, %v1017
        %v1118 = vpack.c.b16 %v1022, %v1018
        %v1119 = vpack.c.b16 %v1023, %v1019
        %v1120 = vpack.c.b16 %v1024, %v1020
        %v1121 = vpack.c.b16 %v1029, %v1025
        %v1122 = vpack.c.b16 %v1030, %v1026
        %v1123 = vpack.c.b16 %v1031, %v1027
        %v1124 = vpack.c.b16 %v1032, %v1028
        %v1125 = vpack.c.b16 %v1037, %v1033
        %v1126 = vpack.c.b16 %v1038, %v1034
        %v1127 = vpack.c.b16 %v1039, %v1035
        %v1128 = vpack.c.b16 %v1040, %v1036
        %v1129 = vpack.c.b16 %v1045, %v1041
        %v1130 = vpack.c.b16 %v1046, %v1042
        %v1131 = vpack.c.b16 %v1047, %v1043
        %v1132 = vpack.c.b16 %v1048, %v1044
        %v1133 = vpack.c.b16 %v1053, %v1049
        %v1134 = vpack.c.b16 %v1054, %v1050
        %v1135 = vpack.c.b16 %v1055, %v1051
        %v1136 = vpack.c.b16 %v1056, %v1052
        %v1137 = vpack.c.b16 %v1061, %v1057
        %v1138 = vpack.c.b16 %v1062, %v1058
        %v1139 = vpack.c.b16 %v1063, %v1059
        %v1140 = vpack.c.b16 %v1064, %v1060
        %v1141 = vpack.c.b16 %v1069, %v1065
        %v1142 = vpack.c.b16 %v1070, %v1066
        %v1143 = vpack.c.b16 %v1071, %v1067
        %v1144 = vpack.c.b16 %v1072, %v1068
        %v1145 = vpack.c.b16 %v1077, %v1073
        %v1146 = vpack.c.b16 %v1078, %v1074
        %v1147 = vpack.c.b16 %v1079, %v1075
        %v1148 = vpack.c.b16 %v1080, %v1076
        %v1149 = vpack.c.b16 %v1085, %v1081
        %v1150 = vpack.c.b16 %v1086, %v1082
        %v1151 = vpack.c.b16 %v1087, %v1083
        %v1152 = vpack.c.b16 %v1088, %v1084
        %1217 = vmatprep.subr.bf16.mxu0 %v1118
        %1218 = vmatpush1.bf16.msra.mxu0 %v1117
        %1219 = vmatprep.subr.bf16.mxu0 %v1114
        %1220 = vmatpush1.bf16.msra.mxu0 %v1113
        %1221 = vmatprep.subr.bf16.mxu0 %v1110
        %1222 = vmatpush1.bf16.msra.mxu0 %v1109
        %1223 = vmatprep.subr.bf16.mxu0 %v1106
        %1224 = vmatpush1.bf16.msra.mxu0 %v1105
        %1225 = vmatprep.subr.bf16.mxu0 %v1102
        %1226 = vmatpush1.bf16.msra.mxu0 %v1101
        %1227 = vmatprep.subr.bf16.mxu0 %v1098
        %1228 = vmatpush1.bf16.msra.mxu0 %v1097
        %1229 = vmatprep.subr.bf16.mxu0 %v1094
        %1230 = vmatpush1.bf16.msra.mxu0 %v1093
        %1231 = vmatprep.subr.bf16.mxu0 %v1090
        %1232 = vmatpush1.bf16.msra.mxu0 %v1089
        %1233 = vmatprep.subr.bf16.mxu0 %v1150
        %1234 = vmatpush2.bf16.msra.mxu0 %v1149
        %1235 = vmatprep.subr.bf16.mxu0 %v1146
        %1236 = vmatpush2.bf16.msra.mxu0 %v1145
        %1237 = vmatprep.subr.bf16.mxu0 %v1142
        %1238 = vmatpush2.bf16.msra.mxu0 %v1141
        %1239 = vmatprep.subr.bf16.mxu0 %v1138
        %1240 = vmatpush2.bf16.msra.mxu0 %v1137
        %1241 = vmatprep.subr.bf16.mxu0 %v1134
        %1242 = vmatpush2.bf16.msra.mxu0 %v1133
        %1243 = vmatprep.subr.bf16.mxu0 %v1130
        %1244 = vmatpush2.bf16.msra.mxu0 %v1129
        %1245 = vmatprep.subr.bf16.mxu0 %v1126
        %1246 = vmatpush2.bf16.msra.mxu0 %v1125
        %1247 = vmatprep.subr.bf16.mxu0 %v1122
        %1248 = vmatpush2.bf16.msra.mxu0 %v1121
        %1249 = vmatprep.mubr.bf16.mxu0 %v832
        %1250 = vmatmul.mubr.bf16.gmra.mxu0 %v831
        %v1251 = vpop.f32.mrf.mxu0
        %v1252 = vadd.f32 0.0, %v1251
        %v1253 = vpop.f32.mrf.mxu0
        %v1254 = vadd.f32 0.0, %v1253
        %v1255 = vpop.f32.mrf.mxu0
        %v1256 = vpop.f32.mrf.mxu0
        %1257 = vdwg.mxu0
        %1258 = vmatprep.subr.bf16.mxu0 %v1120
        %1259 = vmatpush1.bf16.msra.mxu0 %v1119
        %1260 = vmatprep.subr.bf16.mxu0 %v1116
        %1261 = vmatpush1.bf16.msra.mxu0 %v1115
        %1262 = vmatprep.subr.bf16.mxu0 %v1112
        %1263 = vmatpush1.bf16.msra.mxu0 %v1111
        %1264 = vmatprep.subr.bf16.mxu0 %v1108
        %1265 = vmatpush1.bf16.msra.mxu0 %v1107
        %1266 = vmatprep.subr.bf16.mxu0 %v1104
        %1267 = vmatpush1.bf16.msra.mxu0 %v1103
        %1268 = vmatprep.subr.bf16.mxu0 %v1100
        %1269 = vmatpush1.bf16.msra.mxu0 %v1099
        %1270 = vmatprep.subr.bf16.mxu0 %v1096
        %1271 = vmatpush1.bf16.msra.mxu0 %v1095
        %1272 = vmatprep.subr.bf16.mxu0 %v1092
        %1273 = vmatpush1.bf16.msra.mxu0 %v1091
        %1274 = vmatprep.subr.bf16.mxu0 %v1152
        %1275 = vmatpush2.bf16.msra.mxu0 %v1151
        %1276 = vmatprep.subr.bf16.mxu0 %v1148
        %1277 = vmatpush2.bf16.msra.mxu0 %v1147
        %1278 = vmatprep.subr.bf16.mxu0 %v1144
        %1279 = vmatpush2.bf16.msra.mxu0 %v1143
        %1280 = vmatprep.subr.bf16.mxu0 %v1140
        %1281 = vmatpush2.bf16.msra.mxu0 %v1139
        %1282 = vmatprep.subr.bf16.mxu0 %v1136
        %1283 = vmatpush2.bf16.msra.mxu0 %v1135
        %1284 = vmatprep.subr.bf16.mxu0 %v1132
        %1285 = vmatpush2.bf16.msra.mxu0 %v1131
        %1286 = vmatprep.subr.bf16.mxu0 %v1128
        %1287 = vmatpush2.bf16.msra.mxu0 %v1127
        %1288 = vmatprep.subr.bf16.mxu0 %v1124
        %1289 = vmatpush2.bf16.msra.mxu0 %v1123
        %1290 = vmatprep.mubr.bf16.mxu0 %v832
        %1291 = vmatmul.mubr.bf16.gmra.mxu0 %v831
        %v1292 = vpop.f32.mrf.mxu0
        %v1293 = vadd.f32 0.0, %v1292
        %v1294 = vpop.f32.mrf.mxu0
        %v1295 = vadd.f32 0.0, %v1294
        %v1296 = vpop.f32.mrf.mxu0
        %v1297 = vpop.f32.mrf.mxu0
        %1298 = vdwg.mxu0
        %v1299 = vrot.slane %v1252, 4
        %v1300 = vadd.f32 %v1252, %v1299
        %v1301 = vrot.slane %v1300, 2
        %v1302 = vadd.f32 %v1300, %v1301
        %v1303 = vrot.slane %v1302, 1
        %v1304 = vadd.f32 %v1302, %v1303
        %v1305 = vrot.slane %v1254, 4
        %v1306 = vadd.f32 %v1254, %v1305
        %v1307 = vrot.slane %v1306, 2
        %v1308 = vadd.f32 %v1306, %v1307
        %v1309 = vrot.slane %v1308, 1
        %v1310 = vadd.f32 %v1308, %v1309
        %v1311 = vrot.slane %v1293, 4
        %v1312 = vadd.f32 %v1293, %v1311
        %v1313 = vrot.slane %v1312, 2
        %v1314 = vadd.f32 %v1312, %v1313
        %v1315 = vrot.slane %v1314, 1
        %v1316 = vadd.f32 %v1314, %v1315
        %v1317 = vrot.slane %v1295, 4
        %v1318 = vadd.f32 %v1295, %v1317
        %v1319 = vrot.slane %v1318, 2
        %v1320 = vadd.f32 %v1318, %v1319
        %v1321 = vrot.slane %v1320, 1
        %v1322 = vadd.f32 %v1320, %v1321
        %v1323 = vmul.f32 %v1304, %v739
        %v1324 = vmul.f32 %v1310, %v739
        %v1325 = vmul.f32 %v1316, %v739
        %v1326 = vmul.f32 %v1322, %v739
        %v1327 = vsub.f32 %v1252, %v1323
        %v1328 = vsub.f32 %v1254, %v1324
        %v1329 = vsub.f32 %v1293, %v1325
        %v1330 = vsub.f32 %v1295, %v1326
        %v1331 = vmul.f32 %v1327, %v1327
        %v1332 = vmul.f32 %v1328, %v1328
        %v1333 = vmul.f32 %v1329, %v1329
        %v1334 = vmul.f32 %v1330, %v1330
        %v1335 = vrot.slane %v1331, 4
        %v1336 = vadd.f32 %v1331, %v1335
        %v1337 = vrot.slane %v1336, 2
        %v1338 = vadd.f32 %v1336, %v1337
        %v1339 = vrot.slane %v1338, 1
        %v1340 = vadd.f32 %v1338, %v1339
        %v1341 = vrot.slane %v1332, 4
        %v1342 = vadd.f32 %v1332, %v1341
        %v1343 = vrot.slane %v1342, 2
        %v1344 = vadd.f32 %v1342, %v1343
        %v1345 = vrot.slane %v1344, 1
        %v1346 = vadd.f32 %v1344, %v1345
        %v1347 = vrot.slane %v1333, 4
        %v1348 = vadd.f32 %v1333, %v1347
        %v1349 = vrot.slane %v1348, 2
        %v1350 = vadd.f32 %v1348, %v1349
        %v1351 = vrot.slane %v1350, 1
        %v1352 = vadd.f32 %v1350, %v1351
        %v1353 = vrot.slane %v1334, 4
        %v1354 = vadd.f32 %v1334, %v1353
        %v1355 = vrot.slane %v1354, 2
        %v1356 = vadd.f32 %v1354, %v1355
        %v1357 = vrot.slane %v1356, 1
        %v1358 = vadd.f32 %v1356, %v1357
        %v1359 = vmul.f32 %v1340, %v739
        %v1360 = vmul.f32 %v1346, %v739
        %v1361 = vmul.f32 %v1352, %v739
        %v1362 = vmul.f32 %v1358, %v739
        %v1363 = vadd.f32 %v1359, 1e-05
        %v1364 = vadd.f32 %v1360, 1e-05
        %v1365 = vadd.f32 %v1361, 1e-05
        %v1366 = vadd.f32 %v1362, 1e-05
        %v1367 = vrsqrt.pop %v1363
        %v1368 = vrsqrt.pop %v1364
        %v1369 = vrsqrt.pop %v1365
        %v1370 = vrsqrt.pop %v1366
        %v1375 = vcombine.low %v1367, %v1368
        %v1376 = vcombine.low %v1369, %v1370
        %v1378 = vunpack.c.l.s4 1966171168
        %v1379 = vunpack.c.0.s8 %v1378
        %v1380 = vlaneseq
        %v1381 = vshrl.u32 %v1380, 7
        %v1382 = vsub.s32 %v1379, %v1381
        %v1383 = vrot.slane %v1375, %v1382
        %v1385 = vunpack.c.l.s4 1966171168
        %v1386 = vunpack.c.0.s8 %v1385
        %v1387 = vlaneseq
        %v1388 = vshrl.u32 %v1387, 7
        %v1389 = vsub.s32 %v1386, %v1388
        %v1390 = vrot.slane %v1376, %v1389
        %v1391 = vcombine.low %v1383, %v1390
        %v1393 = vunpack.c.l.s4 1966171168
        %v1394 = vunpack.c.0.s8 %v1393
        %v1395 = vlaneseq
        %v1396 = vshrl.u32 %v1395, 7
        %v1397 = vsub.s32 %v1394, %v1396
        %v1398 = vrot.slane %v1391, %v1397
        %v1400 = vmul.f32 %v408, %v1398
        %v1402 = vlaneseq
        %v1403 = vshrl.u32 %v1402, 7
        %v1404 = vsub.s32 0, %v1403
        %v1405 = vrot.slane %v1400, %v1404
        %v1406 = vlaneseq
        %v1407 = vshrl.u32 %v1406, 7
        %v1408 = vsub.s32 1, %v1407
        %v1409 = vrot.slane %v1400, %v1408
        %v1410 = vlaneseq
        %v1411 = vshrl.u32 %v1410, 7
        %v1412 = vsub.s32 2, %v1411
        %v1413 = vrot.slane %v1400, %v1412
        %v1414 = vlaneseq
        %v1415 = vshrl.u32 %v1414, 7
        %v1416 = vsub.s32 3, %v1415
        %v1417 = vrot.slane %v1400, %v1416
        %v1422 = vmul.f32 %v1252, %v1405
        %v1423 = vmul.f32 %v1254, %v1409
        %v1424 = vmul.f32 %v1293, %v1413
        %v1425 = vmul.f32 %v1295, %v1417
        %v1430 = vcombine.low %v1323, %v1324
        %v1431 = vcombine.low %v1325, %v1326
        %v1433 = vunpack.c.l.s4 1966171168
        %v1434 = vunpack.c.0.s8 %v1433
        %v1435 = vlaneseq
        %v1436 = vshrl.u32 %v1435, 7
        %v1437 = vsub.s32 %v1434, %v1436
        %v1438 = vrot.slane %v1430, %v1437
        %v1440 = vunpack.c.l.s4 1966171168
        %v1441 = vunpack.c.0.s8 %v1440
        %v1442 = vlaneseq
        %v1443 = vshrl.u32 %v1442, 7
        %v1444 = vsub.s32 %v1441, %v1443
        %v1445 = vrot.slane %v1431, %v1444
        %v1446 = vcombine.low %v1438, %v1445
        %v1448 = vunpack.c.l.s4 1966171168
        %v1449 = vunpack.c.0.s8 %v1448
        %v1450 = vlaneseq
        %v1451 = vshrl.u32 %v1450, 7
        %v1452 = vsub.s32 %v1449, %v1451
        %v1453 = vrot.slane %v1446, %v1452
        %v1455 = vmul.f32 %v1400, %v1453
        %v1456 = vsub.f32 %v409, %v1455
        %v1458 = vlaneseq
        %v1459 = vshrl.u32 %v1458, 7
        %v1460 = vsub.s32 0, %v1459
        %v1461 = vrot.slane %v1456, %v1460
        %v1462 = vlaneseq
        %v1463 = vshrl.u32 %v1462, 7
        %v1464 = vsub.s32 1, %v1463
        %v1465 = vrot.slane %v1456, %v1464
        %v1466 = vlaneseq
        %v1467 = vshrl.u32 %v1466, 7
        %v1468 = vsub.s32 2, %v1467
        %v1469 = vrot.slane %v1456, %v1468
        %v1470 = vlaneseq
        %v1471 = vshrl.u32 %v1470, 7
        %v1472 = vsub.s32 3, %v1471
        %v1473 = vrot.slane %v1456, %v1472
        %v1478 = vadd.f32 %v1422, %v1461
        %v1479 = vadd.f32 %v1423, %v1465
        %v1480 = vadd.f32 %v1424, %v1469
        %v1481 = vadd.f32 %v1425, %v1473
        %v1482 = vmax.f32 %v1478, 0.0
        %v1483 = vmax.f32 %v1479, 0.0
        %v1484 = vmax.f32 %v1480, 0.0
        %v1485 = vmax.f32 %v1481, 0.0
        %v1486 = vpack.c.bf16 %v1482, %v1482
        %v1487 = vpack.c.bf16 %v1483, %v1483
        %v1488 = vpack.c.bf16 %v1484, %v1484
        %v1489 = vpack.c.bf16 %v1485, %v1485
        %v1490 = vld [vmem:[%s356] sm:$0xff]
        %v1491 = vld [vmem:[%s356 + $0x8] sm:$0xff]
        %v1492 = vld [vmem:[%s356 + $0x10] sm:$0xff]
        %v1493 = vld [vmem:[%s356 + $0x18] sm:$0xff]
        %v1494 = vld [vmem:[%s356 + $0x20] sm:$0xff]
        %v1495 = vld [vmem:[%s356 + $0x28] sm:$0xff]
        %v1496 = vld [vmem:[%s356 + $0x30] sm:$0xff]
        %v1497 = vld [vmem:[%s356 + $0x38] sm:$0xff]
        %v1498 = vld [vmem:[%s356 + $0x40] sm:$0xff]
        %v1499 = vld [vmem:[%s356 + $0x48] sm:$0xff]
        %v1500 = vld [vmem:[%s356 + $0x50] sm:$0xff]
        %v1501 = vld [vmem:[%s356 + $0x58] sm:$0xff]
        %v1502 = vld [vmem:[%s356 + $0x60] sm:$0xff]
        %v1503 = vld [vmem:[%s356 + $0x68] sm:$0xff]
        %v1504 = vld [vmem:[%s356 + $0x70] sm:$0xff]
        %v1505 = vld [vmem:[%s356 + $0x78] sm:$0xff]
        %v1506 = vld [vmem:[%s356 + $0x80] sm:$0xff]
        %v1507 = vld [vmem:[%s356 + $0x88] sm:$0xff]
        %v1508 = vld [vmem:[%s356 + $0x90] sm:$0xff]
        %v1509 = vld [vmem:[%s356 + $0x98] sm:$0xff]
        %v1510 = vld [vmem:[%s356 + $0xa0] sm:$0xff]
        %v1511 = vld [vmem:[%s356 + $0xa8] sm:$0xff]
        %v1512 = vld [vmem:[%s356 + $0xb0] sm:$0xff]
        %v1513 = vld [vmem:[%s356 + $0xb8] sm:$0xff]
        %v1514 = vld [vmem:[%s356 + $0xc0] sm:$0xff]
        %v1515 = vld [vmem:[%s356 + $0xc8] sm:$0xff]
        %v1516 = vld [vmem:[%s356 + $0xd0] sm:$0xff]
        %v1517 = vld [vmem:[%s356 + $0xd8] sm:$0xff]
        %v1518 = vld [vmem:[%s356 + $0xe0] sm:$0xff]
        %v1519 = vld [vmem:[%s356 + $0xe8] sm:$0xff]
        %v1520 = vld [vmem:[%s356 + $0xf0] sm:$0xff]
        %v1521 = vld [vmem:[%s356 + $0xf8] sm:$0xff]
        %v1522 = vld [vmem:[%s356 + $0x100] sm:$0xff]
        %v1523 = vld [vmem:[%s356 + $0x108] sm:$0xff]
        %v1524 = vld [vmem:[%s356 + $0x110] sm:$0xff]
        %v1525 = vld [vmem:[%s356 + $0x118] sm:$0xff]
        %v1526 = vld [vmem:[%s356 + $0x120] sm:$0xff]
        %v1527 = vld [vmem:[%s356 + $0x128] sm:$0xff]
        %v1528 = vld [vmem:[%s356 + $0x130] sm:$0xff]
        %v1529 = vld [vmem:[%s356 + $0x138] sm:$0xff]
        %v1530 = vld [vmem:[%s356 + $0x140] sm:$0xff]
        %v1531 = vld [vmem:[%s356 + $0x148] sm:$0xff]
        %v1532 = vld [vmem:[%s356 + $0x150] sm:$0xff]
        %v1533 = vld [vmem:[%s356 + $0x158] sm:$0xff]
        %v1534 = vld [vmem:[%s356 + $0x160] sm:$0xff]
        %v1535 = vld [vmem:[%s356 + $0x168] sm:$0xff]
        %v1536 = vld [vmem:[%s356 + $0x170] sm:$0xff]
        %v1537 = vld [vmem:[%s356 + $0x178] sm:$0xff]
        %v1538 = vld [vmem:[%s356 + $0x180] sm:$0xff]
        %v1539 = vld [vmem:[%s356 + $0x188] sm:$0xff]
        %v1540 = vld [vmem:[%s356 + $0x190] sm:$0xff]
        %v1541 = vld [vmem:[%s356 + $0x198] sm:$0xff]
        %v1542 = vld [vmem:[%s356 + $0x1a0] sm:$0xff]
        %v1543 = vld [vmem:[%s356 + $0x1a8] sm:$0xff]
        %v1544 = vld [vmem:[%s356 + $0x1b0] sm:$0xff]
        %v1545 = vld [vmem:[%s356 + $0x1b8] sm:$0xff]
        %v1546 = vld [vmem:[%s356 + $0x1c0] sm:$0xff]
        %v1547 = vld [vmem:[%s356 + $0x1c8] sm:$0xff]
        %v1548 = vld [vmem:[%s356 + $0x1d0] sm:$0xff]
        %v1549 = vld [vmem:[%s356 + $0x1d8] sm:$0xff]
        %v1550 = vld [vmem:[%s356 + $0x1e0] sm:$0xff]
        %v1551 = vld [vmem:[%s356 + $0x1e8] sm:$0xff]
        %v1552 = vld [vmem:[%s356 + $0x1f0] sm:$0xff]
        %v1553 = vld [vmem:[%s356 + $0x1f8] sm:$0xff]
        %v1554 = vld [vmem:[%s356 + $0x200] sm:$0xff]
        %v1555 = vld [vmem:[%s356 + $0x208] sm:$0xff]
        %v1556 = vld [vmem:[%s356 + $0x210] sm:$0xff]
        %v1557 = vld [vmem:[%s356 + $0x218] sm:$0xff]
        %v1558 = vld [vmem:[%s356 + $0x220] sm:$0xff]
        %v1559 = vld [vmem:[%s356 + $0x228] sm:$0xff]
        %v1560 = vld [vmem:[%s356 + $0x230] sm:$0xff]
        %v1561 = vld [vmem:[%s356 + $0x238] sm:$0xff]
        %v1562 = vld [vmem:[%s356 + $0x240] sm:$0xff]
        %v1563 = vld [vmem:[%s356 + $0x248] sm:$0xff]
        %v1564 = vld [vmem:[%s356 + $0x250] sm:$0xff]
        %v1565 = vld [vmem:[%s356 + $0x258] sm:$0xff]
        %v1566 = vld [vmem:[%s356 + $0x260] sm:$0xff]
        %v1567 = vld [vmem:[%s356 + $0x268] sm:$0xff]
        %v1568 = vld [vmem:[%s356 + $0x270] sm:$0xff]
        %v1569 = vld [vmem:[%s356 + $0x278] sm:$0xff]
        %v1570 = vld [vmem:[%s356 + $0x280] sm:$0xff]
        %v1571 = vld [vmem:[%s356 + $0x288] sm:$0xff]
        %v1572 = vld [vmem:[%s356 + $0x290] sm:$0xff]
        %v1573 = vld [vmem:[%s356 + $0x298] sm:$0xff]
        %v1574 = vld [vmem:[%s356 + $0x2a0] sm:$0xff]
        %v1575 = vld [vmem:[%s356 + $0x2a8] sm:$0xff]
        %v1576 = vld [vmem:[%s356 + $0x2b0] sm:$0xff]
        %v1577 = vld [vmem:[%s356 + $0x2b8] sm:$0xff]
        %v1578 = vld [vmem:[%s356 + $0x2c0] sm:$0xff]
        %v1579 = vld [vmem:[%s356 + $0x2c8] sm:$0xff]
        %v1580 = vld [vmem:[%s356 + $0x2d0] sm:$0xff]
        %v1581 = vld [vmem:[%s356 + $0x2d8] sm:$0xff]
        %v1582 = vld [vmem:[%s356 + $0x2e0] sm:$0xff]
        %v1583 = vld [vmem:[%s356 + $0x2e8] sm:$0xff]
        %v1584 = vld [vmem:[%s356 + $0x2f0] sm:$0xff]
        %v1585 = vld [vmem:[%s356 + $0x2f8] sm:$0xff]
        %v1586 = vld [vmem:[%s356 + $0x300] sm:$0xff]
        %v1587 = vld [vmem:[%s356 + $0x308] sm:$0xff]
        %v1588 = vld [vmem:[%s356 + $0x310] sm:$0xff]
        %v1589 = vld [vmem:[%s356 + $0x318] sm:$0xff]
        %v1590 = vld [vmem:[%s356 + $0x320] sm:$0xff]
        %v1591 = vld [vmem:[%s356 + $0x328] sm:$0xff]
        %v1592 = vld [vmem:[%s356 + $0x330] sm:$0xff]
        %v1593 = vld [vmem:[%s356 + $0x338] sm:$0xff]
        %v1594 = vld [vmem:[%s356 + $0x340] sm:$0xff]
        %v1595 = vld [vmem:[%s356 + $0x348] sm:$0xff]
        %v1596 = vld [vmem:[%s356 + $0x350] sm:$0xff]
        %v1597 = vld [vmem:[%s356 + $0x358] sm:$0xff]
        %v1598 = vld [vmem:[%s356 + $0x360] sm:$0xff]
        %v1599 = vld [vmem:[%s356 + $0x368] sm:$0xff]
        %v1600 = vld [vmem:[%s356 + $0x370] sm:$0xff]
        %v1601 = vld [vmem:[%s356 + $0x378] sm:$0xff]
        %v1602 = vld [vmem:[%s356 + $0x380] sm:$0xff]
        %v1603 = vld [vmem:[%s356 + $0x388] sm:$0xff]
        %v1604 = vld [vmem:[%s356 + $0x390] sm:$0xff]
        %v1605 = vld [vmem:[%s356 + $0x398] sm:$0xff]
        %v1606 = vld [vmem:[%s356 + $0x3a0] sm:$0xff]
        %v1607 = vld [vmem:[%s356 + $0x3a8] sm:$0xff]
        %v1608 = vld [vmem:[%s356 + $0x3b0] sm:$0xff]
        %v1609 = vld [vmem:[%s356 + $0x3b8] sm:$0xff]
        %v1610 = vld [vmem:[%s356 + $0x3c0] sm:$0xff]
        %v1611 = vld [vmem:[%s356 + $0x3c8] sm:$0xff]
        %v1612 = vld [vmem:[%s356 + $0x3d0] sm:$0xff]
        %v1613 = vld [vmem:[%s356 + $0x3d8] sm:$0xff]
        %v1614 = vld [vmem:[%s356 + $0x3e0] sm:$0xff]
        %v1615 = vld [vmem:[%s356 + $0x3e8] sm:$0xff]
        %v1616 = vld [vmem:[%s356 + $0x3f0] sm:$0xff]
        %v1617 = vld [vmem:[%s356 + $0x3f8] sm:$0xff]
        %v1618 = vld [vmem:[%s356 + $0x400] sm:$0xff]
        %v1619 = vld [vmem:[%s356 + $0x408] sm:$0xff]
        %v1620 = vld [vmem:[%s356 + $0x410] sm:$0xff]
        %v1621 = vld [vmem:[%s356 + $0x418] sm:$0xff]
        %v1622 = vld [vmem:[%s356 + $0x420] sm:$0xff]
        %v1623 = vld [vmem:[%s356 + $0x428] sm:$0xff]
        %v1624 = vld [vmem:[%s356 + $0x430] sm:$0xff]
        %v1625 = vld [vmem:[%s356 + $0x438] sm:$0xff]
        %v1626 = vld [vmem:[%s356 + $0x440] sm:$0xff]
        %v1627 = vld [vmem:[%s356 + $0x448] sm:$0xff]
        %v1628 = vld [vmem:[%s356 + $0x450] sm:$0xff]
        %v1629 = vld [vmem:[%s356 + $0x458] sm:$0xff]
        %v1630 = vld [vmem:[%s356 + $0x460] sm:$0xff]
        %v1631 = vld [vmem:[%s356 + $0x468] sm:$0xff]
        %v1632 = vld [vmem:[%s356 + $0x470] sm:$0xff]
        %v1633 = vld [vmem:[%s356 + $0x478] sm:$0xff]
        %v1634 = vld [vmem:[%s356 + $0x480] sm:$0xff]
        %v1635 = vld [vmem:[%s356 + $0x488] sm:$0xff]
        %v1636 = vld [vmem:[%s356 + $0x490] sm:$0xff]
        %v1637 = vld [vmem:[%s356 + $0x498] sm:$0xff]
        %v1638 = vld [vmem:[%s356 + $0x4a0] sm:$0xff]
        %v1639 = vld [vmem:[%s356 + $0x4a8] sm:$0xff]
        %v1640 = vld [vmem:[%s356 + $0x4b0] sm:$0xff]
        %v1641 = vld [vmem:[%s356 + $0x4b8] sm:$0xff]
        %v1642 = vld [vmem:[%s356 + $0x4c0] sm:$0xff]
        %v1643 = vld [vmem:[%s356 + $0x4c8] sm:$0xff]
        %v1644 = vld [vmem:[%s356 + $0x4d0] sm:$0xff]
        %v1645 = vld [vmem:[%s356 + $0x4d8] sm:$0xff]
        %v1646 = vld [vmem:[%s356 + $0x4e0] sm:$0xff]
        %v1647 = vld [vmem:[%s356 + $0x4e8] sm:$0xff]
        %v1648 = vld [vmem:[%s356 + $0x4f0] sm:$0xff]
        %v1649 = vld [vmem:[%s356 + $0x4f8] sm:$0xff]
        %v1650 = vld [vmem:[%s356 + $0x500] sm:$0xff]
        %v1651 = vld [vmem:[%s356 + $0x508] sm:$0xff]
        %v1652 = vld [vmem:[%s356 + $0x510] sm:$0xff]
        %v1653 = vld [vmem:[%s356 + $0x518] sm:$0xff]
        %v1654 = vld [vmem:[%s356 + $0x520] sm:$0xff]
        %v1655 = vld [vmem:[%s356 + $0x528] sm:$0xff]
        %v1656 = vld [vmem:[%s356 + $0x530] sm:$0xff]
        %v1657 = vld [vmem:[%s356 + $0x538] sm:$0xff]
        %v1658 = vld [vmem:[%s356 + $0x540] sm:$0xff]
        %v1659 = vld [vmem:[%s356 + $0x548] sm:$0xff]
        %v1660 = vld [vmem:[%s356 + $0x550] sm:$0xff]
        %v1661 = vld [vmem:[%s356 + $0x558] sm:$0xff]
        %v1662 = vld [vmem:[%s356 + $0x560] sm:$0xff]
        %v1663 = vld [vmem:[%s356 + $0x568] sm:$0xff]
        %v1664 = vld [vmem:[%s356 + $0x570] sm:$0xff]
        %v1665 = vld [vmem:[%s356 + $0x578] sm:$0xff]
        %v1666 = vld [vmem:[%s356 + $0x580] sm:$0xff]
        %v1667 = vld [vmem:[%s356 + $0x588] sm:$0xff]
        %v1668 = vld [vmem:[%s356 + $0x590] sm:$0xff]
        %v1669 = vld [vmem:[%s356 + $0x598] sm:$0xff]
        %v1670 = vld [vmem:[%s356 + $0x5a0] sm:$0xff]
        %v1671 = vld [vmem:[%s356 + $0x5a8] sm:$0xff]
        %v1672 = vld [vmem:[%s356 + $0x5b0] sm:$0xff]
        %v1673 = vld [vmem:[%s356 + $0x5b8] sm:$0xff]
        %v1674 = vld [vmem:[%s356 + $0x5c0] sm:$0xff]
        %v1675 = vld [vmem:[%s356 + $0x5c8] sm:$0xff]
        %v1676 = vld [vmem:[%s356 + $0x5d0] sm:$0xff]
        %v1677 = vld [vmem:[%s356 + $0x5d8] sm:$0xff]
        %v1678 = vld [vmem:[%s356 + $0x5e0] sm:$0xff]
        %v1679 = vld [vmem:[%s356 + $0x5e8] sm:$0xff]
        %v1680 = vld [vmem:[%s356 + $0x5f0] sm:$0xff]
        %v1681 = vld [vmem:[%s356 + $0x5f8] sm:$0xff]
        %v1682 = vld [vmem:[%s356 + $0x600] sm:$0xff]
        %v1683 = vld [vmem:[%s356 + $0x608] sm:$0xff]
        %v1684 = vld [vmem:[%s356 + $0x610] sm:$0xff]
        %v1685 = vld [vmem:[%s356 + $0x618] sm:$0xff]
        %v1686 = vld [vmem:[%s356 + $0x620] sm:$0xff]
        %v1687 = vld [vmem:[%s356 + $0x628] sm:$0xff]
        %v1688 = vld [vmem:[%s356 + $0x630] sm:$0xff]
        %v1689 = vld [vmem:[%s356 + $0x638] sm:$0xff]
        %v1690 = vld [vmem:[%s356 + $0x640] sm:$0xff]
        %v1691 = vld [vmem:[%s356 + $0x648] sm:$0xff]
        %v1692 = vld [vmem:[%s356 + $0x650] sm:$0xff]
        %v1693 = vld [vmem:[%s356 + $0x658] sm:$0xff]
        %v1694 = vld [vmem:[%s356 + $0x660] sm:$0xff]
        %v1695 = vld [vmem:[%s356 + $0x668] sm:$0xff]
        %v1696 = vld [vmem:[%s356 + $0x670] sm:$0xff]
        %v1697 = vld [vmem:[%s356 + $0x678] sm:$0xff]
        %v1698 = vld [vmem:[%s356 + $0x680] sm:$0xff]
        %v1699 = vld [vmem:[%s356 + $0x688] sm:$0xff]
        %v1700 = vld [vmem:[%s356 + $0x690] sm:$0xff]
        %v1701 = vld [vmem:[%s356 + $0x698] sm:$0xff]
        %v1702 = vld [vmem:[%s356 + $0x6a0] sm:$0xff]
        %v1703 = vld [vmem:[%s356 + $0x6a8] sm:$0xff]
        %v1704 = vld [vmem:[%s356 + $0x6b0] sm:$0xff]
        %v1705 = vld [vmem:[%s356 + $0x6b8] sm:$0xff]
        %v1706 = vld [vmem:[%s356 + $0x6c0] sm:$0xff]
        %v1707 = vld [vmem:[%s356 + $0x6c8] sm:$0xff]
        %v1708 = vld [vmem:[%s356 + $0x6d0] sm:$0xff]
        %v1709 = vld [vmem:[%s356 + $0x6d8] sm:$0xff]
        %v1710 = vld [vmem:[%s356 + $0x6e0] sm:$0xff]
        %v1711 = vld [vmem:[%s356 + $0x6e8] sm:$0xff]
        %v1712 = vld [vmem:[%s356 + $0x6f0] sm:$0xff]
        %v1713 = vld [vmem:[%s356 + $0x6f8] sm:$0xff]
        %v1714 = vld [vmem:[%s356 + $0x700] sm:$0xff]
        %v1715 = vld [vmem:[%s356 + $0x708] sm:$0xff]
        %v1716 = vld [vmem:[%s356 + $0x710] sm:$0xff]
        %v1717 = vld [vmem:[%s356 + $0x718] sm:$0xff]
        %v1718 = vld [vmem:[%s356 + $0x720] sm:$0xff]
        %v1719 = vld [vmem:[%s356 + $0x728] sm:$0xff]
        %v1720 = vld [vmem:[%s356 + $0x730] sm:$0xff]
        %v1721 = vld [vmem:[%s356 + $0x738] sm:$0xff]
        %v1722 = vld [vmem:[%s356 + $0x740] sm:$0xff]
        %v1723 = vld [vmem:[%s356 + $0x748] sm:$0xff]
        %v1724 = vld [vmem:[%s356 + $0x750] sm:$0xff]
        %v1725 = vld [vmem:[%s356 + $0x758] sm:$0xff]
        %v1726 = vld [vmem:[%s356 + $0x760] sm:$0xff]
        %v1727 = vld [vmem:[%s356 + $0x768] sm:$0xff]
        %v1728 = vld [vmem:[%s356 + $0x770] sm:$0xff]
        %v1729 = vld [vmem:[%s356 + $0x778] sm:$0xff]
        %v1730 = vld [vmem:[%s356 + $0x780] sm:$0xff]
        %v1731 = vld [vmem:[%s356 + $0x788] sm:$0xff]
        %v1732 = vld [vmem:[%s356 + $0x790] sm:$0xff]
        %v1733 = vld [vmem:[%s356 + $0x798] sm:$0xff]
        %v1734 = vld [vmem:[%s356 + $0x7a0] sm:$0xff]
        %v1735 = vld [vmem:[%s356 + $0x7a8] sm:$0xff]
        %v1736 = vld [vmem:[%s356 + $0x7b0] sm:$0xff]
        %v1737 = vld [vmem:[%s356 + $0x7b8] sm:$0xff]
        %v1738 = vld [vmem:[%s356 + $0x7c0] sm:$0xff]
        %v1739 = vld [vmem:[%s356 + $0x7c8] sm:$0xff]
        %v1740 = vld [vmem:[%s356 + $0x7d0] sm:$0xff]
        %v1741 = vld [vmem:[%s356 + $0x7d8] sm:$0xff]
        %v1742 = vld [vmem:[%s356 + $0x7e0] sm:$0xff]
        %v1743 = vld [vmem:[%s356 + $0x7e8] sm:$0xff]
        %v1744 = vld [vmem:[%s356 + $0x7f0] sm:$0xff]
        %v1745 = vld [vmem:[%s356 + $0x7f8] sm:$0xff]
        %v1746 = vld [vmem:[%s356 + $0x800] sm:$0xff]
        %v1747 = vld [vmem:[%s356 + $0x808] sm:$0xff]
        %v1748 = vld [vmem:[%s356 + $0x810] sm:$0xff]
        %v1749 = vld [vmem:[%s356 + $0x818] sm:$0xff]
        %v1750 = vld [vmem:[%s356 + $0x820] sm:$0xff]
        %v1751 = vld [vmem:[%s356 + $0x828] sm:$0xff]
        %v1752 = vld [vmem:[%s356 + $0x830] sm:$0xff]
        %v1753 = vld [vmem:[%s356 + $0x838] sm:$0xff]
        %v1754 = vld [vmem:[%s356 + $0x840] sm:$0xff]
        %v1755 = vld [vmem:[%s356 + $0x848] sm:$0xff]
        %v1756 = vld [vmem:[%s356 + $0x850] sm:$0xff]
        %v1757 = vld [vmem:[%s356 + $0x858] sm:$0xff]
        %v1758 = vld [vmem:[%s356 + $0x860] sm:$0xff]
        %v1759 = vld [vmem:[%s356 + $0x868] sm:$0xff]
        %v1760 = vld [vmem:[%s356 + $0x870] sm:$0xff]
        %v1761 = vld [vmem:[%s356 + $0x878] sm:$0xff]
        %v1762 = vld [vmem:[%s356 + $0x880] sm:$0xff]
        %v1763 = vld [vmem:[%s356 + $0x888] sm:$0xff]
        %v1764 = vld [vmem:[%s356 + $0x890] sm:$0xff]
        %v1765 = vld [vmem:[%s356 + $0x898] sm:$0xff]
        %v1766 = vld [vmem:[%s356 + $0x8a0] sm:$0xff]
        %v1767 = vld [vmem:[%s356 + $0x8a8] sm:$0xff]
        %v1768 = vld [vmem:[%s356 + $0x8b0] sm:$0xff]
        %v1769 = vld [vmem:[%s356 + $0x8b8] sm:$0xff]
        %v1770 = vld [vmem:[%s356 + $0x8c0] sm:$0xff]
        %v1771 = vld [vmem:[%s356 + $0x8c8] sm:$0xff]
        %v1772 = vld [vmem:[%s356 + $0x8d0] sm:$0xff]
        %v1773 = vld [vmem:[%s356 + $0x8d8] sm:$0xff]
        %v1774 = vld [vmem:[%s356 + $0x8e0] sm:$0xff]
        %v1775 = vld [vmem:[%s356 + $0x8e8] sm:$0xff]
        %v1776 = vld [vmem:[%s356 + $0x8f0] sm:$0xff]
        %v1777 = vld [vmem:[%s356 + $0x8f8] sm:$0xff]
        %v1778 = vld [vmem:[%s356 + $0x900] sm:$0xff]
        %v1779 = vld [vmem:[%s356 + $0x908] sm:$0xff]
        %v1780 = vld [vmem:[%s356 + $0x910] sm:$0xff]
        %v1781 = vld [vmem:[%s356 + $0x918] sm:$0xff]
        %v1782 = vld [vmem:[%s356 + $0x920] sm:$0xff]
        %v1783 = vld [vmem:[%s356 + $0x928] sm:$0xff]
        %v1784 = vld [vmem:[%s356 + $0x930] sm:$0xff]
        %v1785 = vld [vmem:[%s356 + $0x938] sm:$0xff]
        %v1786 = vld [vmem:[%s356 + $0x940] sm:$0xff]
        %v1787 = vld [vmem:[%s356 + $0x948] sm:$0xff]
        %v1788 = vld [vmem:[%s356 + $0x950] sm:$0xff]
        %v1789 = vld [vmem:[%s356 + $0x958] sm:$0xff]
        %v1790 = vld [vmem:[%s356 + $0x960] sm:$0xff]
        %v1791 = vld [vmem:[%s356 + $0x968] sm:$0xff]
        %v1792 = vld [vmem:[%s356 + $0x970] sm:$0xff]
        %v1793 = vld [vmem:[%s356 + $0x978] sm:$0xff]
        %v1794 = vld [vmem:[%s356 + $0x980] sm:$0xff]
        %v1795 = vld [vmem:[%s356 + $0x988] sm:$0xff]
        %v1796 = vld [vmem:[%s356 + $0x990] sm:$0xff]
        %v1797 = vld [vmem:[%s356 + $0x998] sm:$0xff]
        %v1798 = vld [vmem:[%s356 + $0x9a0] sm:$0xff]
        %v1799 = vld [vmem:[%s356 + $0x9a8] sm:$0xff]
        %v1800 = vld [vmem:[%s356 + $0x9b0] sm:$0xff]
        %v1801 = vld [vmem:[%s356 + $0x9b8] sm:$0xff]
        %v1802 = vld [vmem:[%s356 + $0x9c0] sm:$0xff]
        %v1803 = vld [vmem:[%s356 + $0x9c8] sm:$0xff]
        %v1804 = vld [vmem:[%s356 + $0x9d0] sm:$0xff]
        %v1805 = vld [vmem:[%s356 + $0x9d8] sm:$0xff]
        %v1806 = vld [vmem:[%s356 + $0x9e0] sm:$0xff]
        %v1807 = vld [vmem:[%s356 + $0x9e8] sm:$0xff]
        %v1808 = vld [vmem:[%s356 + $0x9f0] sm:$0xff]
        %v1809 = vld [vmem:[%s356 + $0x9f8] sm:$0xff]
        %v1810 = vld [vmem:[%s365] sm:$0xff]
        %v1811 = vld [vmem:[%s365 + $0x8] sm:$0x3]
        %v1814 = vlaneseq
        %v1815 = vshrl.u32 %v1814, 7
        %v1816 = vsub.s32 0, %v1815
        %v1817 = vrot.slane %v1810, %v1816
        %v1818 = vlaneseq
        %v1819 = vshrl.u32 %v1818, 7
        %v1820 = vsub.s32 1, %v1819
        %v1821 = vrot.slane %v1810, %v1820
        %v1822 = vlaneseq
        %v1823 = vshrl.u32 %v1822, 7
        %v1824 = vsub.s32 2, %v1823
        %v1825 = vrot.slane %v1810, %v1824
        %v1826 = vlaneseq
        %v1827 = vshrl.u32 %v1826, 7
        %v1828 = vsub.s32 3, %v1827
        %v1829 = vrot.slane %v1810, %v1828
        %v1830 = vlaneseq
        %v1831 = vshrl.u32 %v1830, 7
        %v1832 = vsub.s32 4, %v1831
        %v1833 = vrot.slane %v1810, %v1832
        %v1834 = vlaneseq
        %v1835 = vshrl.u32 %v1834, 7
        %v1836 = vsub.s32 5, %v1835
        %v1837 = vrot.slane %v1810, %v1836
        %v1838 = vlaneseq
        %v1839 = vshrl.u32 %v1838, 7
        %v1840 = vsub.s32 6, %v1839
        %v1841 = vrot.slane %v1810, %v1840
        %v1842 = vlaneseq
        %v1843 = vshrl.u32 %v1842, 7
        %v1844 = vsub.s32 7, %v1843
        %v1845 = vrot.slane %v1810, %v1844
        %v1846 = vlaneseq
        %v1847 = vshrl.u32 %v1846, 7
        %v1848 = vsub.s32 0, %v1847
        %v1849 = vrot.slane %v1811, %v1848
        %v1850 = vlaneseq
        %v1851 = vshrl.u32 %v1850, 7
        %v1852 = vsub.s32 1, %v1851
        %v1853 = vrot.slane %v1811, %v1852
        %v2184 = vunpack.c.l.b16 %v1490
        %v2185 = vunpack.c.h.b16 %v1490
        %v2186 = vunpack.c.l.b16 %v1491
        %v2187 = vunpack.c.h.b16 %v1491
        %v2188 = vunpack.c.l.b16 %v1492
        %v2189 = vunpack.c.h.b16 %v1492
        %v2190 = vunpack.c.l.b16 %v1493
        %v2191 = vunpack.c.h.b16 %v1493
        %v2192 = vunpack.c.l.b16 %v1494
        %v2193 = vunpack.c.h.b16 %v1494
        %v2194 = vunpack.c.l.b16 %v1495
        %v2195 = vunpack.c.h.b16 %v1495
        %v2196 = vunpack.c.l.b16 %v1496
        %v2197 = vunpack.c.h.b16 %v1496
        %v2198 = vunpack.c.l.b16 %v1497
        %v2199 = vunpack.c.h.b16 %v1497
        %v2200 = vunpack.c.l.b16 %v1498
        %v2201 = vunpack.c.h.b16 %v1498
        %v2202 = vunpack.c.l.b16 %v1499
        %v2203 = vunpack.c.h.b16 %v1499
        %v2204 = vunpack.c.l.b16 %v1500
        %v2205 = vunpack.c.h.b16 %v1500
        %v2206 = vunpack.c.l.b16 %v1501
        %v2207 = vunpack.c.h.b16 %v1501
        %v2208 = vunpack.c.l.b16 %v1502
        %v2209 = vunpack.c.h.b16 %v1502
        %v2210 = vunpack.c.l.b16 %v1503
        %v2211 = vunpack.c.h.b16 %v1503
        %v2212 = vunpack.c.l.b16 %v1504
        %v2213 = vunpack.c.h.b16 %v1504
        %v2214 = vunpack.c.l.b16 %v1505
        %v2215 = vunpack.c.h.b16 %v1505
        %v2216 = vunpack.c.l.b16 %v1506
        %v2217 = vunpack.c.h.b16 %v1506
        %v2218 = vunpack.c.l.b16 %v1507
        %v2219 = vunpack.c.h.b16 %v1507
        %v2220 = vunpack.c.l.b16 %v1508
        %v2221 = vunpack.c.h.b16 %v1508
        %v2222 = vunpack.c.l.b16 %v1509
        %v2223 = vunpack.c.h.b16 %v1509
        %v2224 = vunpack.c.l.b16 %v1510
        %v2225 = vunpack.c.h.b16 %v1510
        %v2226 = vunpack.c.l.b16 %v1511
        %v2227 = vunpack.c.h.b16 %v1511
        %v2228 = vunpack.c.l.b16 %v1512
        %v2229 = vunpack.c.h.b16 %v1512
        %v2230 = vunpack.c.l.b16 %v1513
        %v2231 = vunpack.c.h.b16 %v1513
        %v2232 = vunpack.c.l.b16 %v1514
        %v2233 = vunpack.c.h.b16 %v1514
        %v2234 = vunpack.c.l.b16 %v1515
        %v2235 = vunpack.c.h.b16 %v1515
        %v2236 = vunpack.c.l.b16 %v1516
        %v2237 = vunpack.c.h.b16 %v1516
        %v2238 = vunpack.c.l.b16 %v1517
        %v2239 = vunpack.c.h.b16 %v1517
        %v2240 = vunpack.c.l.b16 %v1518
        %v2241 = vunpack.c.h.b16 %v1518
        %v2242 = vunpack.c.l.b16 %v1519
        %v2243 = vunpack.c.h.b16 %v1519
        %v2244 = vunpack.c.l.b16 %v1520
        %v2245 = vunpack.c.h.b16 %v1520
        %v2246 = vunpack.c.l.b16 %v1521
        %v2247 = vunpack.c.h.b16 %v1521
        %v2248 = vunpack.c.l.b16 %v1522
        %v2249 = vunpack.c.h.b16 %v1522
        %v2250 = vunpack.c.l.b16 %v1523
        %v2251 = vunpack.c.h.b16 %v1523
        %v2252 = vunpack.c.l.b16 %v1524
        %v2253 = vunpack.c.h.b16 %v1524
        %v2254 = vunpack.c.l.b16 %v1525
        %v2255 = vunpack.c.h.b16 %v1525
        %v2256 = vunpack.c.l.b16 %v1526
        %v2257 = vunpack.c.h.b16 %v1526
        %v2258 = vunpack.c.l.b16 %v1527
        %v2259 = vunpack.c.h.b16 %v1527
        %v2260 = vunpack.c.l.b16 %v1528
        %v2261 = vunpack.c.h.b16 %v1528
        %v2262 = vunpack.c.l.b16 %v1529
        %v2263 = vunpack.c.h.b16 %v1529
        %v2264 = vunpack.c.l.b16 %v1530
        %v2265 = vunpack.c.h.b16 %v1530
        %v2266 = vunpack.c.l.b16 %v1531
        %v2267 = vunpack.c.h.b16 %v1531
        %v2268 = vunpack.c.l.b16 %v1532
        %v2269 = vunpack.c.h.b16 %v1532
        %v2270 = vunpack.c.l.b16 %v1533
        %v2271 = vunpack.c.h.b16 %v1533
        %v2272 = vunpack.c.l.b16 %v1534
        %v2273 = vunpack.c.h.b16 %v1534
        %v2274 = vunpack.c.l.b16 %v1535
        %v2275 = vunpack.c.h.b16 %v1535
        %v2276 = vunpack.c.l.b16 %v1536
        %v2277 = vunpack.c.h.b16 %v1536
        %v2278 = vunpack.c.l.b16 %v1537
        %v2279 = vunpack.c.h.b16 %v1537
        %v2280 = vunpack.c.l.b16 %v1538
        %v2281 = vunpack.c.h.b16 %v1538
        %v2282 = vunpack.c.l.b16 %v1539
        %v2283 = vunpack.c.h.b16 %v1539
        %v2284 = vunpack.c.l.b16 %v1540
        %v2285 = vunpack.c.h.b16 %v1540
        %v2286 = vunpack.c.l.b16 %v1541
        %v2287 = vunpack.c.h.b16 %v1541
        %v2288 = vunpack.c.l.b16 %v1542
        %v2289 = vunpack.c.h.b16 %v1542
        %v2290 = vunpack.c.l.b16 %v1543
        %v2291 = vunpack.c.h.b16 %v1543
        %v2292 = vunpack.c.l.b16 %v1544
        %v2293 = vunpack.c.h.b16 %v1544
        %v2294 = vunpack.c.l.b16 %v1545
        %v2295 = vunpack.c.h.b16 %v1545
        %v2296 = vunpack.c.l.b16 %v1546
        %v2297 = vunpack.c.h.b16 %v1546
        %v2298 = vunpack.c.l.b16 %v1547
        %v2299 = vunpack.c.h.b16 %v1547
        %v2300 = vunpack.c.l.b16 %v1548
        %v2301 = vunpack.c.h.b16 %v1548
        %v2302 = vunpack.c.l.b16 %v1549
        %v2303 = vunpack.c.h.b16 %v1549
        %v2304 = vunpack.c.l.b16 %v1550
        %v2305 = vunpack.c.h.b16 %v1550
        %v2306 = vunpack.c.l.b16 %v1551
        %v2307 = vunpack.c.h.b16 %v1551
        %v2308 = vunpack.c.l.b16 %v1552
        %v2309 = vunpack.c.h.b16 %v1552
        %v2310 = vunpack.c.l.b16 %v1553
        %v2311 = vunpack.c.h.b16 %v1553
        %v2312 = vunpack.c.l.b16 %v1554
        %v2313 = vunpack.c.h.b16 %v1554
        %v2314 = vunpack.c.l.b16 %v1555
        %v2315 = vunpack.c.h.b16 %v1555
        %v2316 = vunpack.c.l.b16 %v1556
        %v2317 = vunpack.c.h.b16 %v1556
        %v2318 = vunpack.c.l.b16 %v1557
        %v2319 = vunpack.c.h.b16 %v1557
        %v2320 = vunpack.c.l.b16 %v1558
        %v2321 = vunpack.c.h.b16 %v1558
        %v2322 = vunpack.c.l.b16 %v1559
        %v2323 = vunpack.c.h.b16 %v1559
        %v2324 = vunpack.c.l.b16 %v1560
        %v2325 = vunpack.c.h.b16 %v1560
        %v2326 = vunpack.c.l.b16 %v1561
        %v2327 = vunpack.c.h.b16 %v1561
        %v2328 = vunpack.c.l.b16 %v1562
        %v2329 = vunpack.c.h.b16 %v1562
        %v2330 = vunpack.c.l.b16 %v1563
        %v2331 = vunpack.c.h.b16 %v1563
        %v2332 = vunpack.c.l.b16 %v1564
        %v2333 = vunpack.c.h.b16 %v1564
        %v2334 = vunpack.c.l.b16 %v1565
        %v2335 = vunpack.c.h.b16 %v1565
        %v2336 = vunpack.c.l.b16 %v1566
        %v2337 = vunpack.c.h.b16 %v1566
        %v2338 = vunpack.c.l.b16 %v1567
        %v2339 = vunpack.c.h.b16 %v1567
        %v2340 = vunpack.c.l.b16 %v1568
        %v2341 = vunpack.c.h.b16 %v1568
        %v2342 = vunpack.c.l.b16 %v1569
        %v2343 = vunpack.c.h.b16 %v1569
        %v2344 = vunpack.c.l.b16 %v1570
        %v2345 = vunpack.c.h.b16 %v1570
        %v2346 = vunpack.c.l.b16 %v1571
        %v2347 = vunpack.c.h.b16 %v1571
        %v2348 = vunpack.c.l.b16 %v1572
        %v2349 = vunpack.c.h.b16 %v1572
        %v2350 = vunpack.c.l.b16 %v1573
        %v2351 = vunpack.c.h.b16 %v1573
        %v2352 = vunpack.c.l.b16 %v1574
        %v2353 = vunpack.c.h.b16 %v1574
        %v2354 = vunpack.c.l.b16 %v1575
        %v2355 = vunpack.c.h.b16 %v1575
        %v2356 = vunpack.c.l.b16 %v1576
        %v2357 = vunpack.c.h.b16 %v1576
        %v2358 = vunpack.c.l.b16 %v1577
        %v2359 = vunpack.c.h.b16 %v1577
        %v2360 = vunpack.c.l.b16 %v1578
        %v2361 = vunpack.c.h.b16 %v1578
        %v2362 = vunpack.c.l.b16 %v1579
        %v2363 = vunpack.c.h.b16 %v1579
        %v2364 = vunpack.c.l.b16 %v1580
        %v2365 = vunpack.c.h.b16 %v1580
        %v2366 = vunpack.c.l.b16 %v1581
        %v2367 = vunpack.c.h.b16 %v1581
        %v2368 = vunpack.c.l.b16 %v1582
        %v2369 = vunpack.c.h.b16 %v1582
        %v2370 = vunpack.c.l.b16 %v1583
        %v2371 = vunpack.c.h.b16 %v1583
        %v2372 = vunpack.c.l.b16 %v1584
        %v2373 = vunpack.c.h.b16 %v1584
        %v2374 = vunpack.c.l.b16 %v1585
        %v2375 = vunpack.c.h.b16 %v1585
        %v2376 = vunpack.c.l.b16 %v1586
        %v2377 = vunpack.c.h.b16 %v1586
        %v2378 = vunpack.c.l.b16 %v1587
        %v2379 = vunpack.c.h.b16 %v1587
        %v2380 = vunpack.c.l.b16 %v1588
        %v2381 = vunpack.c.h.b16 %v1588
        %v2382 = vunpack.c.l.b16 %v1589
        %v2383 = vunpack.c.h.b16 %v1589
        %v2384 = vunpack.c.l.b16 %v1590
        %v2385 = vunpack.c.h.b16 %v1590
        %v2386 = vunpack.c.l.b16 %v1591
        %v2387 = vunpack.c.h.b16 %v1591
        %v2388 = vunpack.c.l.b16 %v1592
        %v2389 = vunpack.c.h.b16 %v1592
        %v2390 = vunpack.c.l.b16 %v1593
        %v2391 = vunpack.c.h.b16 %v1593
        %v2392 = vunpack.c.l.b16 %v1594
        %v2393 = vunpack.c.h.b16 %v1594
        %v2394 = vunpack.c.l.b16 %v1595
        %v2395 = vunpack.c.h.b16 %v1595
        %v2396 = vunpack.c.l.b16 %v1596
        %v2397 = vunpack.c.h.b16 %v1596
        %v2398 = vunpack.c.l.b16 %v1597
        %v2399 = vunpack.c.h.b16 %v1597
        %v2400 = vunpack.c.l.b16 %v1598
        %v2401 = vunpack.c.h.b16 %v1598
        %v2402 = vunpack.c.l.b16 %v1599
        %v2403 = vunpack.c.h.b16 %v1599
        %v2404 = vunpack.c.l.b16 %v1600
        %v2405 = vunpack.c.h.b16 %v1600
        %v2406 = vunpack.c.l.b16 %v1601
        %v2407 = vunpack.c.h.b16 %v1601
        %v2408 = vunpack.c.l.b16 %v1602
        %v2409 = vunpack.c.h.b16 %v1602
        %v2410 = vunpack.c.l.b16 %v1603
        %v2411 = vunpack.c.h.b16 %v1603
        %v2412 = vunpack.c.l.b16 %v1604
        %v2413 = vunpack.c.h.b16 %v1604
        %v2414 = vunpack.c.l.b16 %v1605
        %v2415 = vunpack.c.h.b16 %v1605
        %v2416 = vunpack.c.l.b16 %v1606
        %v2417 = vunpack.c.h.b16 %v1606
        %v2418 = vunpack.c.l.b16 %v1607
        %v2419 = vunpack.c.h.b16 %v1607
        %v2420 = vunpack.c.l.b16 %v1608
        %v2421 = vunpack.c.h.b16 %v1608
        %v2422 = vunpack.c.l.b16 %v1609
        %v2423 = vunpack.c.h.b16 %v1609
        %v2424 = vunpack.c.l.b16 %v1610
        %v2425 = vunpack.c.h.b16 %v1610
        %v2426 = vunpack.c.l.b16 %v1611
        %v2427 = vunpack.c.h.b16 %v1611
        %v2428 = vunpack.c.l.b16 %v1612
        %v2429 = vunpack.c.h.b16 %v1612
        %v2430 = vunpack.c.l.b16 %v1613
        %v2431 = vunpack.c.h.b16 %v1613
        %v2432 = vunpack.c.l.b16 %v1614
        %v2433 = vunpack.c.h.b16 %v1614
        %v2434 = vunpack.c.l.b16 %v1615
        %v2435 = vunpack.c.h.b16 %v1615
        %v2436 = vunpack.c.l.b16 %v1616
        %v2437 = vunpack.c.h.b16 %v1616
        %v2438 = vunpack.c.l.b16 %v1617
        %v2439 = vunpack.c.h.b16 %v1617
        %v2440 = vunpack.c.l.b16 %v1618
        %v2441 = vunpack.c.h.b16 %v1618
        %v2442 = vunpack.c.l.b16 %v1619
        %v2443 = vunpack.c.h.b16 %v1619
        %v2444 = vunpack.c.l.b16 %v1620
        %v2445 = vunpack.c.h.b16 %v1620
        %v2446 = vunpack.c.l.b16 %v1621
        %v2447 = vunpack.c.h.b16 %v1621
        %v2448 = vunpack.c.l.b16 %v1622
        %v2449 = vunpack.c.h.b16 %v1622
        %v2450 = vunpack.c.l.b16 %v1623
        %v2451 = vunpack.c.h.b16 %v1623
        %v2452 = vunpack.c.l.b16 %v1624
        %v2453 = vunpack.c.h.b16 %v1624
        %v2454 = vunpack.c.l.b16 %v1625
        %v2455 = vunpack.c.h.b16 %v1625
        %v2456 = vunpack.c.l.b16 %v1626
        %v2457 = vunpack.c.h.b16 %v1626
        %v2458 = vunpack.c.l.b16 %v1627
        %v2459 = vunpack.c.h.b16 %v1627
        %v2460 = vunpack.c.l.b16 %v1628
        %v2461 = vunpack.c.h.b16 %v1628
        %v2462 = vunpack.c.l.b16 %v1629
        %v2463 = vunpack.c.h.b16 %v1629
        %v2464 = vunpack.c.l.b16 %v1630
        %v2465 = vunpack.c.h.b16 %v1630
        %v2466 = vunpack.c.l.b16 %v1631
        %v2467 = vunpack.c.h.b16 %v1631
        %v2468 = vunpack.c.l.b16 %v1632
        %v2469 = vunpack.c.h.b16 %v1632
        %v2470 = vunpack.c.l.b16 %v1633
        %v2471 = vunpack.c.h.b16 %v1633
        %v2472 = vunpack.c.l.b16 %v1634
        %v2473 = vunpack.c.h.b16 %v1634
        %v2474 = vunpack.c.l.b16 %v1635
        %v2475 = vunpack.c.h.b16 %v1635
        %v2476 = vunpack.c.l.b16 %v1636
        %v2477 = vunpack.c.h.b16 %v1636
        %v2478 = vunpack.c.l.b16 %v1637
        %v2479 = vunpack.c.h.b16 %v1637
        %v2480 = vunpack.c.l.b16 %v1638
        %v2481 = vunpack.c.h.b16 %v1638
        %v2482 = vunpack.c.l.b16 %v1639
        %v2483 = vunpack.c.h.b16 %v1639
        %v2484 = vunpack.c.l.b16 %v1640
        %v2485 = vunpack.c.h.b16 %v1640
        %v2486 = vunpack.c.l.b16 %v1641
        %v2487 = vunpack.c.h.b16 %v1641
        %v2488 = vunpack.c.l.b16 %v1642
        %v2489 = vunpack.c.h.b16 %v1642
        %v2490 = vunpack.c.l.b16 %v1643
        %v2491 = vunpack.c.h.b16 %v1643
        %v2492 = vunpack.c.l.b16 %v1644
        %v2493 = vunpack.c.h.b16 %v1644
        %v2494 = vunpack.c.l.b16 %v1645
        %v2495 = vunpack.c.h.b16 %v1645
        %v2496 = vunpack.c.l.b16 %v1646
        %v2497 = vunpack.c.h.b16 %v1646
        %v2498 = vunpack.c.l.b16 %v1647
        %v2499 = vunpack.c.h.b16 %v1647
        %v2500 = vunpack.c.l.b16 %v1648
        %v2501 = vunpack.c.h.b16 %v1648
        %v2502 = vunpack.c.l.b16 %v1649
        %v2503 = vunpack.c.h.b16 %v1649
        %v2504 = vunpack.c.l.b16 %v1650
        %v2505 = vunpack.c.h.b16 %v1650
        %v2506 = vunpack.c.l.b16 %v1651
        %v2507 = vunpack.c.h.b16 %v1651
        %v2508 = vunpack.c.l.b16 %v1652
        %v2509 = vunpack.c.h.b16 %v1652
        %v2510 = vunpack.c.l.b16 %v1653
        %v2511 = vunpack.c.h.b16 %v1653
        %v2512 = vunpack.c.l.b16 %v1654
        %v2513 = vunpack.c.h.b16 %v1654
        %v2514 = vunpack.c.l.b16 %v1655
        %v2515 = vunpack.c.h.b16 %v1655
        %v2516 = vunpack.c.l.b16 %v1656
        %v2517 = vunpack.c.h.b16 %v1656
        %v2518 = vunpack.c.l.b16 %v1657
        %v2519 = vunpack.c.h.b16 %v1657
        %v2520 = vunpack.c.l.b16 %v1658
        %v2521 = vunpack.c.h.b16 %v1658
        %v2522 = vunpack.c.l.b16 %v1659
        %v2523 = vunpack.c.h.b16 %v1659
        %v2524 = vunpack.c.l.b16 %v1660
        %v2525 = vunpack.c.h.b16 %v1660
        %v2526 = vunpack.c.l.b16 %v1661
        %v2527 = vunpack.c.h.b16 %v1661
        %v2528 = vunpack.c.l.b16 %v1662
        %v2529 = vunpack.c.h.b16 %v1662
        %v2530 = vunpack.c.l.b16 %v1663
        %v2531 = vunpack.c.h.b16 %v1663
        %v2532 = vunpack.c.l.b16 %v1664
        %v2533 = vunpack.c.h.b16 %v1664
        %v2534 = vunpack.c.l.b16 %v1665
        %v2535 = vunpack.c.h.b16 %v1665
        %v2536 = vunpack.c.l.b16 %v1666
        %v2537 = vunpack.c.h.b16 %v1666
        %v2538 = vunpack.c.l.b16 %v1667
        %v2539 = vunpack.c.h.b16 %v1667
        %v2540 = vunpack.c.l.b16 %v1668
        %v2541 = vunpack.c.h.b16 %v1668
        %v2542 = vunpack.c.l.b16 %v1669
        %v2543 = vunpack.c.h.b16 %v1669
        %v2544 = vunpack.c.l.b16 %v1670
        %v2545 = vunpack.c.h.b16 %v1670
        %v2546 = vunpack.c.l.b16 %v1671
        %v2547 = vunpack.c.h.b16 %v1671
        %v2548 = vunpack.c.l.b16 %v1672
        %v2549 = vunpack.c.h.b16 %v1672
        %v2550 = vunpack.c.l.b16 %v1673
        %v2551 = vunpack.c.h.b16 %v1673
        %v2552 = vunpack.c.l.b16 %v1674
        %v2553 = vunpack.c.h.b16 %v1674
        %v2554 = vunpack.c.l.b16 %v1675
        %v2555 = vunpack.c.h.b16 %v1675
        %v2556 = vunpack.c.l.b16 %v1676
        %v2557 = vunpack.c.h.b16 %v1676
        %v2558 = vunpack.c.l.b16 %v1677
        %v2559 = vunpack.c.h.b16 %v1677
        %v2560 = vunpack.c.l.b16 %v1678
        %v2561 = vunpack.c.h.b16 %v1678
        %v2562 = vunpack.c.l.b16 %v1679
        %v2563 = vunpack.c.h.b16 %v1679
        %v2564 = vunpack.c.l.b16 %v1680
        %v2565 = vunpack.c.h.b16 %v1680
        %v2566 = vunpack.c.l.b16 %v1681
        %v2567 = vunpack.c.h.b16 %v1681
        %v2568 = vunpack.c.l.b16 %v1682
        %v2569 = vunpack.c.h.b16 %v1682
        %v2570 = vunpack.c.l.b16 %v1683
        %v2571 = vunpack.c.h.b16 %v1683
        %v2572 = vunpack.c.l.b16 %v1684
        %v2573 = vunpack.c.h.b16 %v1684
        %v2574 = vunpack.c.l.b16 %v1685
        %v2575 = vunpack.c.h.b16 %v1685
        %v2576 = vunpack.c.l.b16 %v1686
        %v2577 = vunpack.c.h.b16 %v1686
        %v2578 = vunpack.c.l.b16 %v1687
        %v2579 = vunpack.c.h.b16 %v1687
        %v2580 = vunpack.c.l.b16 %v1688
        %v2581 = vunpack.c.h.b16 %v1688
        %v2582 = vunpack.c.l.b16 %v1689
        %v2583 = vunpack.c.h.b16 %v1689
        %v2584 = vunpack.c.l.b16 %v1690
        %v2585 = vunpack.c.h.b16 %v1690
        %v2586 = vunpack.c.l.b16 %v1691
        %v2587 = vunpack.c.h.b16 %v1691
        %v2588 = vunpack.c.l.b16 %v1692
        %v2589 = vunpack.c.h.b16 %v1692
        %v2590 = vunpack.c.l.b16 %v1693
        %v2591 = vunpack.c.h.b16 %v1693
        %v2592 = vunpack.c.l.b16 %v1694
        %v2593 = vunpack.c.h.b16 %v1694
        %v2594 = vunpack.c.l.b16 %v1695
        %v2595 = vunpack.c.h.b16 %v1695
        %v2596 = vunpack.c.l.b16 %v1696
        %v2597 = vunpack.c.h.b16 %v1696
        %v2598 = vunpack.c.l.b16 %v1697
        %v2599 = vunpack.c.h.b16 %v1697
        %v2600 = vunpack.c.l.b16 %v1698
        %v2601 = vunpack.c.h.b16 %v1698
        %v2602 = vunpack.c.l.b16 %v1699
        %v2603 = vunpack.c.h.b16 %v1699
        %v2604 = vunpack.c.l.b16 %v1700
        %v2605 = vunpack.c.h.b16 %v1700
        %v2606 = vunpack.c.l.b16 %v1701
        %v2607 = vunpack.c.h.b16 %v1701
        %v2608 = vunpack.c.l.b16 %v1702
        %v2609 = vunpack.c.h.b16 %v1702
        %v2610 = vunpack.c.l.b16 %v1703
        %v2611 = vunpack.c.h.b16 %v1703
        %v2612 = vunpack.c.l.b16 %v1704
        %v2613 = vunpack.c.h.b16 %v1704
        %v2614 = vunpack.c.l.b16 %v1705
        %v2615 = vunpack.c.h.b16 %v1705
        %v2616 = vunpack.c.l.b16 %v1706
        %v2617 = vunpack.c.h.b16 %v1706
        %v2618 = vunpack.c.l.b16 %v1707
        %v2619 = vunpack.c.h.b16 %v1707
        %v2620 = vunpack.c.l.b16 %v1708
        %v2621 = vunpack.c.h.b16 %v1708
        %v2622 = vunpack.c.l.b16 %v1709
        %v2623 = vunpack.c.h.b16 %v1709
        %v2624 = vunpack.c.l.b16 %v1710
        %v2625 = vunpack.c.h.b16 %v1710
        %v2626 = vunpack.c.l.b16 %v1711
        %v2627 = vunpack.c.h.b16 %v1711
        %v2628 = vunpack.c.l.b16 %v1712
        %v2629 = vunpack.c.h.b16 %v1712
        %v2630 = vunpack.c.l.b16 %v1713
        %v2631 = vunpack.c.h.b16 %v1713
        %v2632 = vunpack.c.l.b16 %v1714
        %v2633 = vunpack.c.h.b16 %v1714
        %v2634 = vunpack.c.l.b16 %v1715
        %v2635 = vunpack.c.h.b16 %v1715
        %v2636 = vunpack.c.l.b16 %v1716
        %v2637 = vunpack.c.h.b16 %v1716
        %v2638 = vunpack.c.l.b16 %v1717
        %v2639 = vunpack.c.h.b16 %v1717
        %v2640 = vunpack.c.l.b16 %v1718
        %v2641 = vunpack.c.h.b16 %v1718
        %v2642 = vunpack.c.l.b16 %v1719
        %v2643 = vunpack.c.h.b16 %v1719
        %v2644 = vunpack.c.l.b16 %v1720
        %v2645 = vunpack.c.h.b16 %v1720
        %v2646 = vunpack.c.l.b16 %v1721
        %v2647 = vunpack.c.h.b16 %v1721
        %v2648 = vunpack.c.l.b16 %v1722
        %v2649 = vunpack.c.h.b16 %v1722
        %v2650 = vunpack.c.l.b16 %v1723
        %v2651 = vunpack.c.h.b16 %v1723
        %v2652 = vunpack.c.l.b16 %v1724
        %v2653 = vunpack.c.h.b16 %v1724
        %v2654 = vunpack.c.l.b16 %v1725
        %v2655 = vunpack.c.h.b16 %v1725
        %v2656 = vunpack.c.l.b16 %v1726
        %v2657 = vunpack.c.h.b16 %v1726
        %v2658 = vunpack.c.l.b16 %v1727
        %v2659 = vunpack.c.h.b16 %v1727
        %v2660 = vunpack.c.l.b16 %v1728
        %v2661 = vunpack.c.h.b16 %v1728
        %v2662 = vunpack.c.l.b16 %v1729
        %v2663 = vunpack.c.h.b16 %v1729
        %v2664 = vunpack.c.l.b16 %v1730
        %v2665 = vunpack.c.h.b16 %v1730
        %v2666 = vunpack.c.l.b16 %v1731
        %v2667 = vunpack.c.h.b16 %v1731
        %v2668 = vunpack.c.l.b16 %v1732
        %v2669 = vunpack.c.h.b16 %v1732
        %v2670 = vunpack.c.l.b16 %v1733
        %v2671 = vunpack.c.h.b16 %v1733
        %v2672 = vunpack.c.l.b16 %v1734
        %v2673 = vunpack.c.h.b16 %v1734
        %v2674 = vunpack.c.l.b16 %v1735
        %v2675 = vunpack.c.h.b16 %v1735
        %v2676 = vunpack.c.l.b16 %v1736
        %v2677 = vunpack.c.h.b16 %v1736
        %v2678 = vunpack.c.l.b16 %v1737
        %v2679 = vunpack.c.h.b16 %v1737
        %v2680 = vunpack.c.l.b16 %v1738
        %v2681 = vunpack.c.h.b16 %v1738
        %v2682 = vunpack.c.l.b16 %v1739
        %v2683 = vunpack.c.h.b16 %v1739
        %v2684 = vunpack.c.l.b16 %v1740
        %v2685 = vunpack.c.h.b16 %v1740
        %v2686 = vunpack.c.l.b16 %v1741
        %v2687 = vunpack.c.h.b16 %v1741
        %v2688 = vunpack.c.l.b16 %v1742
        %v2689 = vunpack.c.h.b16 %v1742
        %v2690 = vunpack.c.l.b16 %v1743
        %v2691 = vunpack.c.h.b16 %v1743
        %v2692 = vunpack.c.l.b16 %v1744
        %v2693 = vunpack.c.h.b16 %v1744
        %v2694 = vunpack.c.l.b16 %v1745
        %v2695 = vunpack.c.h.b16 %v1745
        %v2696 = vunpack.c.l.b16 %v1746
        %v2697 = vunpack.c.h.b16 %v1746
        %v2698 = vunpack.c.l.b16 %v1747
        %v2699 = vunpack.c.h.b16 %v1747
        %v2700 = vunpack.c.l.b16 %v1748
        %v2701 = vunpack.c.h.b16 %v1748
        %v2702 = vunpack.c.l.b16 %v1749
        %v2703 = vunpack.c.h.b16 %v1749
        %v2704 = vunpack.c.l.b16 %v1750
        %v2705 = vunpack.c.h.b16 %v1750
        %v2706 = vunpack.c.l.b16 %v1751
        %v2707 = vunpack.c.h.b16 %v1751
        %v2708 = vunpack.c.l.b16 %v1752
        %v2709 = vunpack.c.h.b16 %v1752
        %v2710 = vunpack.c.l.b16 %v1753
        %v2711 = vunpack.c.h.b16 %v1753
        %v2712 = vunpack.c.l.b16 %v1754
        %v2713 = vunpack.c.h.b16 %v1754
        %v2714 = vunpack.c.l.b16 %v1755
        %v2715 = vunpack.c.h.b16 %v1755
        %v2716 = vunpack.c.l.b16 %v1756
        %v2717 = vunpack.c.h.b16 %v1756
        %v2718 = vunpack.c.l.b16 %v1757
        %v2719 = vunpack.c.h.b16 %v1757
        %v2720 = vunpack.c.l.b16 %v1758
        %v2721 = vunpack.c.h.b16 %v1758
        %v2722 = vunpack.c.l.b16 %v1759
        %v2723 = vunpack.c.h.b16 %v1759
        %v2724 = vunpack.c.l.b16 %v1760
        %v2725 = vunpack.c.h.b16 %v1760
        %v2726 = vunpack.c.l.b16 %v1761
        %v2727 = vunpack.c.h.b16 %v1761
        %v2728 = vunpack.c.l.b16 %v1762
        %v2729 = vunpack.c.h.b16 %v1762
        %v2730 = vunpack.c.l.b16 %v1763
        %v2731 = vunpack.c.h.b16 %v1763
        %v2732 = vunpack.c.l.b16 %v1764
        %v2733 = vunpack.c.h.b16 %v1764
        %v2734 = vunpack.c.l.b16 %v1765
        %v2735 = vunpack.c.h.b16 %v1765
        %v2736 = vunpack.c.l.b16 %v1766
        %v2737 = vunpack.c.h.b16 %v1766
        %v2738 = vunpack.c.l.b16 %v1767
        %v2739 = vunpack.c.h.b16 %v1767
        %v2740 = vunpack.c.l.b16 %v1768
        %v2741 = vunpack.c.h.b16 %v1768
        %v2742 = vunpack.c.l.b16 %v1769
        %v2743 = vunpack.c.h.b16 %v1769
        %v2744 = vunpack.c.l.b16 %v1770
        %v2745 = vunpack.c.h.b16 %v1770
        %v2746 = vunpack.c.l.b16 %v1771
        %v2747 = vunpack.c.h.b16 %v1771
        %v2748 = vunpack.c.l.b16 %v1772
        %v2749 = vunpack.c.h.b16 %v1772
        %v2750 = vunpack.c.l.b16 %v1773
        %v2751 = vunpack.c.h.b16 %v1773
        %v2752 = vunpack.c.l.b16 %v1774
        %v2753 = vunpack.c.h.b16 %v1774
        %v2754 = vunpack.c.l.b16 %v1775
        %v2755 = vunpack.c.h.b16 %v1775
        %v2756 = vunpack.c.l.b16 %v1776
        %v2757 = vunpack.c.h.b16 %v1776
        %v2758 = vunpack.c.l.b16 %v1777
        %v2759 = vunpack.c.h.b16 %v1777
        %v2760 = vunpack.c.l.b16 %v1778
        %v2761 = vunpack.c.h.b16 %v1778
        %v2762 = vunpack.c.l.b16 %v1779
        %v2763 = vunpack.c.h.b16 %v1779
        %v2764 = vunpack.c.l.b16 %v1780
        %v2765 = vunpack.c.h.b16 %v1780
        %v2766 = vunpack.c.l.b16 %v1781
        %v2767 = vunpack.c.h.b16 %v1781
        %v2768 = vunpack.c.l.b16 %v1782
        %v2769 = vunpack.c.h.b16 %v1782
        %v2770 = vunpack.c.l.b16 %v1783
        %v2771 = vunpack.c.h.b16 %v1783
        %v2772 = vunpack.c.l.b16 %v1784
        %v2773 = vunpack.c.h.b16 %v1784
        %v2774 = vunpack.c.l.b16 %v1785
        %v2775 = vunpack.c.h.b16 %v1785
        %v2776 = vunpack.c.l.b16 %v1786
        %v2777 = vunpack.c.h.b16 %v1786
        %v2778 = vunpack.c.l.b16 %v1787
        %v2779 = vunpack.c.h.b16 %v1787
        %v2780 = vunpack.c.l.b16 %v1788
        %v2781 = vunpack.c.h.b16 %v1788
        %v2782 = vunpack.c.l.b16 %v1789
        %v2783 = vunpack.c.h.b16 %v1789
        %v2784 = vunpack.c.l.b16 %v1790
        %v2785 = vunpack.c.h.b16 %v1790
        %v2786 = vunpack.c.l.b16 %v1791
        %v2787 = vunpack.c.h.b16 %v1791
        %v2788 = vunpack.c.l.b16 %v1792
        %v2789 = vunpack.c.h.b16 %v1792
        %v2790 = vunpack.c.l.b16 %v1793
        %v2791 = vunpack.c.h.b16 %v1793
        %v2792 = vunpack.c.l.b16 %v1794
        %v2793 = vunpack.c.h.b16 %v1794
        %v2794 = vunpack.c.l.b16 %v1795
        %v2795 = vunpack.c.h.b16 %v1795
        %v2796 = vunpack.c.l.b16 %v1796
        %v2797 = vunpack.c.h.b16 %v1796
        %v2798 = vunpack.c.l.b16 %v1797
        %v2799 = vunpack.c.h.b16 %v1797
        %v2800 = vunpack.c.l.b16 %v1798
        %v2801 = vunpack.c.h.b16 %v1798
        %v2802 = vunpack.c.l.b16 %v1799
        %v2803 = vunpack.c.h.b16 %v1799
        %v2804 = vunpack.c.l.b16 %v1800
        %v2805 = vunpack.c.h.b16 %v1800
        %v2806 = vunpack.c.l.b16 %v1801
        %v2807 = vunpack.c.h.b16 %v1801
        %v2808 = vunpack.c.l.b16 %v1802
        %v2809 = vunpack.c.h.b16 %v1802
        %v2810 = vunpack.c.l.b16 %v1803
        %v2811 = vunpack.c.h.b16 %v1803
        %v2812 = vunpack.c.l.b16 %v1804
        %v2813 = vunpack.c.h.b16 %v1804
        %v2814 = vunpack.c.l.b16 %v1805
        %v2815 = vunpack.c.h.b16 %v1805
        %v2816 = vunpack.c.l.b16 %v1806
        %v2817 = vunpack.c.h.b16 %v1806
        %v2818 = vunpack.c.l.b16 %v1807
        %v2819 = vunpack.c.h.b16 %v1807
        %v2820 = vunpack.c.l.b16 %v1808
        %v2821 = vunpack.c.h.b16 %v1808
        %v2822 = vunpack.c.l.b16 %v1809
        %v2823 = vunpack.c.h.b16 %v1809
        %v2824 = vpack.c.b16 %v2194, %v2184
        %v2825 = vpack.c.b16 %v2195, %v2185
        %v2826 = vpack.c.b16 %v2196, %v2186
        %v2827 = vpack.c.b16 %v2197, %v2187
        %v2828 = vpack.c.b16 %v2198, %v2188
        %v2829 = vpack.c.b16 %v2199, %v2189
        %v2830 = vpack.c.b16 %v2200, %v2190
        %v2831 = vpack.c.b16 %v2201, %v2191
        %v2832 = vpack.c.b16 %v2202, %v2192
        %v2833 = vpack.c.b16 %v2203, %v2193
        %v2834 = vpack.c.b16 %v2214, %v2204
        %v2835 = vpack.c.b16 %v2215, %v2205
        %v2836 = vpack.c.b16 %v2216, %v2206
        %v2837 = vpack.c.b16 %v2217, %v2207
        %v2838 = vpack.c.b16 %v2218, %v2208
        %v2839 = vpack.c.b16 %v2219, %v2209
        %v2840 = vpack.c.b16 %v2220, %v2210
        %v2841 = vpack.c.b16 %v2221, %v2211
        %v2842 = vpack.c.b16 %v2222, %v2212
        %v2843 = vpack.c.b16 %v2223, %v2213
        %v2844 = vpack.c.b16 %v2234, %v2224
        %v2845 = vpack.c.b16 %v2235, %v2225
        %v2846 = vpack.c.b16 %v2236, %v2226
        %v2847 = vpack.c.b16 %v2237, %v2227
        %v2848 = vpack.c.b16 %v2238, %v2228
        %v2849 = vpack.c.b16 %v2239, %v2229
        %v2850 = vpack.c.b16 %v2240, %v2230
        %v2851 = vpack.c.b16 %v2241, %v2231
        %v2852 = vpack.c.b16 %v2242, %v2232
        %v2853 = vpack.c.b16 %v2243, %v2233
        %v2854 = vpack.c.b16 %v2254, %v2244
        %v2855 = vpack.c.b16 %v2255, %v2245
        %v2856 = vpack.c.b16 %v2256, %v2246
        %v2857 = vpack.c.b16 %v2257, %v2247
        %v2858 = vpack.c.b16 %v2258, %v2248
        %v2859 = vpack.c.b16 %v2259, %v2249
        %v2860 = vpack.c.b16 %v2260, %v2250
        %v2861 = vpack.c.b16 %v2261, %v2251
        %v2862 = vpack.c.b16 %v2262, %v2252
        %v2863 = vpack.c.b16 %v2263, %v2253
        %v2864 = vpack.c.b16 %v2274, %v2264
        %v2865 = vpack.c.b16 %v2275, %v2265
        %v2866 = vpack.c.b16 %v2276, %v2266
        %v2867 = vpack.c.b16 %v2277, %v2267
        %v2868 = vpack.c.b16 %v2278, %v2268
        %v2869 = vpack.c.b16 %v2279, %v2269
        %v2870 = vpack.c.b16 %v2280, %v2270
        %v2871 = vpack.c.b16 %v2281, %v2271
        %v2872 = vpack.c.b16 %v2282, %v2272
        %v2873 = vpack.c.b16 %v2283, %v2273
        %v2874 = vpack.c.b16 %v2294, %v2284
        %v2875 = vpack.c.b16 %v2295, %v2285
        %v2876 = vpack.c.b16 %v2296, %v2286
        %v2877 = vpack.c.b16 %v2297, %v2287
        %v2878 = vpack.c.b16 %v2298, %v2288
        %v2879 = vpack.c.b16 %v2299, %v2289
        %v2880 = vpack.c.b16 %v2300, %v2290
        %v2881 = vpack.c.b16 %v2301, %v2291
        %v2882 = vpack.c.b16 %v2302, %v2292
        %v2883 = vpack.c.b16 %v2303, %v2293
        %v2884 = vpack.c.b16 %v2314, %v2304
        %v2885 = vpack.c.b16 %v2315, %v2305
        %v2886 = vpack.c.b16 %v2316, %v2306
        %v2887 = vpack.c.b16 %v2317, %v2307
        %v2888 = vpack.c.b16 %v2318, %v2308
        %v2889 = vpack.c.b16 %v2319, %v2309
        %v2890 = vpack.c.b16 %v2320, %v2310
        %v2891 = vpack.c.b16 %v2321, %v2311
        %v2892 = vpack.c.b16 %v2322, %v2312
        %v2893 = vpack.c.b16 %v2323, %v2313
        %v2894 = vpack.c.b16 %v2334, %v2324
        %v2895 = vpack.c.b16 %v2335, %v2325
        %v2896 = vpack.c.b16 %v2336, %v2326
        %v2897 = vpack.c.b16 %v2337, %v2327
        %v2898 = vpack.c.b16 %v2338, %v2328
        %v2899 = vpack.c.b16 %v2339, %v2329
        %v2900 = vpack.c.b16 %v2340, %v2330
        %v2901 = vpack.c.b16 %v2341, %v2331
        %v2902 = vpack.c.b16 %v2342, %v2332
        %v2903 = vpack.c.b16 %v2343, %v2333
        %v2904 = vpack.c.b16 %v2354, %v2344
        %v2905 = vpack.c.b16 %v2355, %v2345
        %v2906 = vpack.c.b16 %v2356, %v2346
        %v2907 = vpack.c.b16 %v2357, %v2347
        %v2908 = vpack.c.b16 %v2358, %v2348
        %v2909 = vpack.c.b16 %v2359, %v2349
        %v2910 = vpack.c.b16 %v2360, %v2350
        %v2911 = vpack.c.b16 %v2361, %v2351
        %v2912 = vpack.c.b16 %v2362, %v2352
        %v2913 = vpack.c.b16 %v2363, %v2353
        %v2914 = vpack.c.b16 %v2374, %v2364
        %v2915 = vpack.c.b16 %v2375, %v2365
        %v2916 = vpack.c.b16 %v2376, %v2366
        %v2917 = vpack.c.b16 %v2377, %v2367
        %v2918 = vpack.c.b16 %v2378, %v2368
        %v2919 = vpack.c.b16 %v2379, %v2369
        %v2920 = vpack.c.b16 %v2380, %v2370
        %v2921 = vpack.c.b16 %v2381, %v2371
        %v2922 = vpack.c.b16 %v2382, %v2372
        %v2923 = vpack.c.b16 %v2383, %v2373
        %v2924 = vpack.c.b16 %v2394, %v2384
        %v2925 = vpack.c.b16 %v2395, %v2385
        %v2926 = vpack.c.b16 %v2396, %v2386
        %v2927 = vpack.c.b16 %v2397, %v2387
        %v2928 = vpack.c.b16 %v2398, %v2388
        %v2929 = vpack.c.b16 %v2399, %v2389
        %v2930 = vpack.c.b16 %v2400, %v2390
        %v2931 = vpack.c.b16 %v2401, %v2391
        %v2932 = vpack.c.b16 %v2402, %v2392
        %v2933 = vpack.c.b16 %v2403, %v2393
        %v2934 = vpack.c.b16 %v2414, %v2404
        %v2935 = vpack.c.b16 %v2415, %v2405
        %v2936 = vpack.c.b16 %v2416, %v2406
        %v2937 = vpack.c.b16 %v2417, %v2407
        %v2938 = vpack.c.b16 %v2418, %v2408
        %v2939 = vpack.c.b16 %v2419, %v2409
        %v2940 = vpack.c.b16 %v2420, %v2410
        %v2941 = vpack.c.b16 %v2421, %v2411
        %v2942 = vpack.c.b16 %v2422, %v2412
        %v2943 = vpack.c.b16 %v2423, %v2413
        %v2944 = vpack.c.b16 %v2434, %v2424
        %v2945 = vpack.c.b16 %v2435, %v2425
        %v2946 = vpack.c.b16 %v2436, %v2426
        %v2947 = vpack.c.b16 %v2437, %v2427
        %v2948 = vpack.c.b16 %v2438, %v2428
        %v2949 = vpack.c.b16 %v2439, %v2429
        %v2950 = vpack.c.b16 %v2440, %v2430
        %v2951 = vpack.c.b16 %v2441, %v2431
        %v2952 = vpack.c.b16 %v2442, %v2432
        %v2953 = vpack.c.b16 %v2443, %v2433
        %v2954 = vpack.c.b16 %v2454, %v2444
        %v2955 = vpack.c.b16 %v2455, %v2445
        %v2956 = vpack.c.b16 %v2456, %v2446
        %v2957 = vpack.c.b16 %v2457, %v2447
        %v2958 = vpack.c.b16 %v2458, %v2448
        %v2959 = vpack.c.b16 %v2459, %v2449
        %v2960 = vpack.c.b16 %v2460, %v2450
        %v2961 = vpack.c.b16 %v2461, %v2451
        %v2962 = vpack.c.b16 %v2462, %v2452
        %v2963 = vpack.c.b16 %v2463, %v2453
        %v2964 = vpack.c.b16 %v2474, %v2464
        %v2965 = vpack.c.b16 %v2475, %v2465
        %v2966 = vpack.c.b16 %v2476, %v2466
        %v2967 = vpack.c.b16 %v2477, %v2467
        %v2968 = vpack.c.b16 %v2478, %v2468
        %v2969 = vpack.c.b16 %v2479, %v2469
        %v2970 = vpack.c.b16 %v2480, %v2470
        %v2971 = vpack.c.b16 %v2481, %v2471
        %v2972 = vpack.c.b16 %v2482, %v2472
        %v2973 = vpack.c.b16 %v2483, %v2473
        %v2974 = vpack.c.b16 %v2494, %v2484
        %v2975 = vpack.c.b16 %v2495, %v2485
        %v2976 = vpack.c.b16 %v2496, %v2486
        %v2977 = vpack.c.b16 %v2497, %v2487
        %v2978 = vpack.c.b16 %v2498, %v2488
        %v2979 = vpack.c.b16 %v2499, %v2489
        %v2980 = vpack.c.b16 %v2500, %v2490
        %v2981 = vpack.c.b16 %v2501, %v2491
        %v2982 = vpack.c.b16 %v2502, %v2492
        %v2983 = vpack.c.b16 %v2503, %v2493
        %v2984 = vpack.c.b16 %v2514, %v2504
        %v2985 = vpack.c.b16 %v2515, %v2505
        %v2986 = vpack.c.b16 %v2516, %v2506
        %v2987 = vpack.c.b16 %v2517, %v2507
        %v2988 = vpack.c.b16 %v2518, %v2508
        %v2989 = vpack.c.b16 %v2519, %v2509
        %v2990 = vpack.c.b16 %v2520, %v2510
        %v2991 = vpack.c.b16 %v2521, %v2511
        %v2992 = vpack.c.b16 %v2522, %v2512
        %v2993 = vpack.c.b16 %v2523, %v2513
        %v2994 = vpack.c.b16 %v2534, %v2524
        %v2995 = vpack.c.b16 %v2535, %v2525
        %v2996 = vpack.c.b16 %v2536, %v2526
        %v2997 = vpack.c.b16 %v2537, %v2527
        %v2998 = vpack.c.b16 %v2538, %v2528
        %v2999 = vpack.c.b16 %v2539, %v2529
        %v3000 = vpack.c.b16 %v2540, %v2530
        %v3001 = vpack.c.b16 %v2541, %v2531
        %v3002 = vpack.c.b16 %v2542, %v2532
        %v3003 = vpack.c.b16 %v2543, %v2533
        %v3004 = vpack.c.b16 %v2554, %v2544
        %v3005 = vpack.c.b16 %v2555, %v2545
        %v3006 = vpack.c.b16 %v2556, %v2546
        %v3007 = vpack.c.b16 %v2557, %v2547
        %v3008 = vpack.c.b16 %v2558, %v2548
        %v3009 = vpack.c.b16 %v2559, %v2549
        %v3010 = vpack.c.b16 %v2560, %v2550
        %v3011 = vpack.c.b16 %v2561, %v2551
        %v3012 = vpack.c.b16 %v2562, %v2552
        %v3013 = vpack.c.b16 %v2563, %v2553
        %v3014 = vpack.c.b16 %v2574, %v2564
        %v3015 = vpack.c.b16 %v2575, %v2565
        %v3016 = vpack.c.b16 %v2576, %v2566
        %v3017 = vpack.c.b16 %v2577, %v2567
        %v3018 = vpack.c.b16 %v2578, %v2568
        %v3019 = vpack.c.b16 %v2579, %v2569
        %v3020 = vpack.c.b16 %v2580, %v2570
        %v3021 = vpack.c.b16 %v2581, %v2571
        %v3022 = vpack.c.b16 %v2582, %v2572
        %v3023 = vpack.c.b16 %v2583, %v2573
        %v3024 = vpack.c.b16 %v2594, %v2584
        %v3025 = vpack.c.b16 %v2595, %v2585
        %v3026 = vpack.c.b16 %v2596, %v2586
        %v3027 = vpack.c.b16 %v2597, %v2587
        %v3028 = vpack.c.b16 %v2598, %v2588
        %v3029 = vpack.c.b16 %v2599, %v2589
        %v3030 = vpack.c.b16 %v2600, %v2590
        %v3031 = vpack.c.b16 %v2601, %v2591
        %v3032 = vpack.c.b16 %v2602, %v2592
        %v3033 = vpack.c.b16 %v2603, %v2593
        %v3034 = vpack.c.b16 %v2614, %v2604
        %v3035 = vpack.c.b16 %v2615, %v2605
        %v3036 = vpack.c.b16 %v2616, %v2606
        %v3037 = vpack.c.b16 %v2617, %v2607
        %v3038 = vpack.c.b16 %v2618, %v2608
        %v3039 = vpack.c.b16 %v2619, %v2609
        %v3040 = vpack.c.b16 %v2620, %v2610
        %v3041 = vpack.c.b16 %v2621, %v2611
        %v3042 = vpack.c.b16 %v2622, %v2612
        %v3043 = vpack.c.b16 %v2623, %v2613
        %v3044 = vpack.c.b16 %v2634, %v2624
        %v3045 = vpack.c.b16 %v2635, %v2625
        %v3046 = vpack.c.b16 %v2636, %v2626
        %v3047 = vpack.c.b16 %v2637, %v2627
        %v3048 = vpack.c.b16 %v2638, %v2628
        %v3049 = vpack.c.b16 %v2639, %v2629
        %v3050 = vpack.c.b16 %v2640, %v2630
        %v3051 = vpack.c.b16 %v2641, %v2631
        %v3052 = vpack.c.b16 %v2642, %v2632
        %v3053 = vpack.c.b16 %v2643, %v2633
        %v3054 = vpack.c.b16 %v2654, %v2644
        %v3055 = vpack.c.b16 %v2655, %v2645
        %v3056 = vpack.c.b16 %v2656, %v2646
        %v3057 = vpack.c.b16 %v2657, %v2647
        %v3058 = vpack.c.b16 %v2658, %v2648
        %v3059 = vpack.c.b16 %v2659, %v2649
        %v3060 = vpack.c.b16 %v2660, %v2650
        %v3061 = vpack.c.b16 %v2661, %v2651
        %v3062 = vpack.c.b16 %v2662, %v2652
        %v3063 = vpack.c.b16 %v2663, %v2653
        %v3064 = vpack.c.b16 %v2674, %v2664
        %v3065 = vpack.c.b16 %v2675, %v2665
        %v3066 = vpack.c.b16 %v2676, %v2666
        %v3067 = vpack.c.b16 %v2677, %v2667
        %v3068 = vpack.c.b16 %v2678, %v2668
        %v3069 = vpack.c.b16 %v2679, %v2669
        %v3070 = vpack.c.b16 %v2680, %v2670
        %v3071 = vpack.c.b16 %v2681, %v2671
        %v3072 = vpack.c.b16 %v2682, %v2672
        %v3073 = vpack.c.b16 %v2683, %v2673
        %v3074 = vpack.c.b16 %v2694, %v2684
        %v3075 = vpack.c.b16 %v2695, %v2685
        %v3076 = vpack.c.b16 %v2696, %v2686
        %v3077 = vpack.c.b16 %v2697, %v2687
        %v3078 = vpack.c.b16 %v2698, %v2688
        %v3079 = vpack.c.b16 %v2699, %v2689
        %v3080 = vpack.c.b16 %v2700, %v2690
        %v3081 = vpack.c.b16 %v2701, %v2691
        %v3082 = vpack.c.b16 %v2702, %v2692
        %v3083 = vpack.c.b16 %v2703, %v2693
        %v3084 = vpack.c.b16 %v2714, %v2704
        %v3085 = vpack.c.b16 %v2715, %v2705
        %v3086 = vpack.c.b16 %v2716, %v2706
        %v3087 = vpack.c.b16 %v2717, %v2707
        %v3088 = vpack.c.b16 %v2718, %v2708
        %v3089 = vpack.c.b16 %v2719, %v2709
        %v3090 = vpack.c.b16 %v2720, %v2710
        %v3091 = vpack.c.b16 %v2721, %v2711
        %v3092 = vpack.c.b16 %v2722, %v2712
        %v3093 = vpack.c.b16 %v2723, %v2713
        %v3094 = vpack.c.b16 %v2734, %v2724
        %v3095 = vpack.c.b16 %v2735, %v2725
        %v3096 = vpack.c.b16 %v2736, %v2726
        %v3097 = vpack.c.b16 %v2737, %v2727
        %v3098 = vpack.c.b16 %v2738, %v2728
        %v3099 = vpack.c.b16 %v2739, %v2729
        %v3100 = vpack.c.b16 %v2740, %v2730
        %v3101 = vpack.c.b16 %v2741, %v2731
        %v3102 = vpack.c.b16 %v2742, %v2732
        %v3103 = vpack.c.b16 %v2743, %v2733
        %v3104 = vpack.c.b16 %v2754, %v2744
        %v3105 = vpack.c.b16 %v2755, %v2745
        %v3106 = vpack.c.b16 %v2756, %v2746
        %v3107 = vpack.c.b16 %v2757, %v2747
        %v3108 = vpack.c.b16 %v2758, %v2748
        %v3109 = vpack.c.b16 %v2759, %v2749
        %v3110 = vpack.c.b16 %v2760, %v2750
        %v3111 = vpack.c.b16 %v2761, %v2751
        %v3112 = vpack.c.b16 %v2762, %v2752
        %v3113 = vpack.c.b16 %v2763, %v2753
        %v3114 = vpack.c.b16 %v2774, %v2764
        %v3115 = vpack.c.b16 %v2775, %v2765
        %v3116 = vpack.c.b16 %v2776, %v2766
        %v3117 = vpack.c.b16 %v2777, %v2767
        %v3118 = vpack.c.b16 %v2778, %v2768
        %v3119 = vpack.c.b16 %v2779, %v2769
        %v3120 = vpack.c.b16 %v2780, %v2770
        %v3121 = vpack.c.b16 %v2781, %v2771
        %v3122 = vpack.c.b16 %v2782, %v2772
        %v3123 = vpack.c.b16 %v2783, %v2773
        %v3124 = vpack.c.b16 %v2794, %v2784
        %v3125 = vpack.c.b16 %v2795, %v2785
        %v3126 = vpack.c.b16 %v2796, %v2786
        %v3127 = vpack.c.b16 %v2797, %v2787
        %v3128 = vpack.c.b16 %v2798, %v2788
        %v3129 = vpack.c.b16 %v2799, %v2789
        %v3130 = vpack.c.b16 %v2800, %v2790
        %v3131 = vpack.c.b16 %v2801, %v2791
        %v3132 = vpack.c.b16 %v2802, %v2792
        %v3133 = vpack.c.b16 %v2803, %v2793
        %v3134 = vpack.c.b16 %v2814, %v2804
        %v3135 = vpack.c.b16 %v2815, %v2805
        %v3136 = vpack.c.b16 %v2816, %v2806
        %v3137 = vpack.c.b16 %v2817, %v2807
        %v3138 = vpack.c.b16 %v2818, %v2808
        %v3139 = vpack.c.b16 %v2819, %v2809
        %v3140 = vpack.c.b16 %v2820, %v2810
        %v3141 = vpack.c.b16 %v2821, %v2811
        %v3142 = vpack.c.b16 %v2822, %v2812
        %v3143 = vpack.c.b16 %v2823, %v2813
        %3464 = vmatprep.subr.bf16.mxu0 %v2895
        %3465 = vmatpush1.bf16.msra.mxu0 %v2894
        %3466 = vmatprep.subr.bf16.mxu0 %v2885
        %3467 = vmatpush1.bf16.msra.mxu0 %v2884
        %3468 = vmatprep.subr.bf16.mxu0 %v2875
        %3469 = vmatpush1.bf16.msra.mxu0 %v2874
        %3470 = vmatprep.subr.bf16.mxu0 %v2865
        %3471 = vmatpush1.bf16.msra.mxu0 %v2864
        %3472 = vmatprep.subr.bf16.mxu0 %v2855
        %3473 = vmatpush1.bf16.msra.mxu0 %v2854
        %3474 = vmatprep.subr.bf16.mxu0 %v2845
        %3475 = vmatpush1.bf16.msra.mxu0 %v2844
        %3476 = vmatprep.subr.bf16.mxu0 %v2835
        %3477 = vmatpush1.bf16.msra.mxu0 %v2834
        %3478 = vmatprep.subr.bf16.mxu0 %v2825
        %3479 = vmatpush1.bf16.msra.mxu0 %v2824
        %3480 = vmatprep.subr.bf16.mxu0 %v2975
        %3481 = vmatpush2.bf16.msra.mxu0 %v2974
        %3482 = vmatprep.subr.bf16.mxu0 %v2965
        %3483 = vmatpush2.bf16.msra.mxu0 %v2964
        %3484 = vmatprep.subr.bf16.mxu0 %v2955
        %3485 = vmatpush2.bf16.msra.mxu0 %v2954
        %3486 = vmatprep.subr.bf16.mxu0 %v2945
        %3487 = vmatpush2.bf16.msra.mxu0 %v2944
        %3488 = vmatprep.subr.bf16.mxu0 %v2935
        %3489 = vmatpush2.bf16.msra.mxu0 %v2934
        %3490 = vmatprep.subr.bf16.mxu0 %v2925
        %3491 = vmatpush2.bf16.msra.mxu0 %v2924
        %3492 = vmatprep.subr.bf16.mxu0 %v2915
        %3493 = vmatpush2.bf16.msra.mxu0 %v2914
        %3494 = vmatprep.subr.bf16.mxu0 %v2905
        %3495 = vmatpush2.bf16.msra.mxu0 %v2904
        %3496 = vmatprep.mubr.bf16.mxu0 %v1487
        %3497 = vmatmul.mubr.bf16.gmra.mxu0 %v1486
        %v3498 = vpop.f32.mrf.mxu0
        %v3499 = vadd.f32 %v1817, %v3498
        %v3500 = vpop.f32.mrf.mxu0
        %v3501 = vadd.f32 %v1821, %v3500
        %v3502 = vpop.f32.mrf.mxu0
        %v3503 = vpop.f32.mrf.mxu0
        %3504 = vdwg.mxu0
        %3505 = vmatprep.subr.bf16.mxu0 %v3055
        %3506 = vmatpush1.bf16.msra.mxu0 %v3054
        %3507 = vmatprep.subr.bf16.mxu0 %v3045
        %3508 = vmatpush1.bf16.msra.mxu0 %v3044
        %3509 = vmatprep.subr.bf16.mxu0 %v3035
        %3510 = vmatpush1.bf16.msra.mxu0 %v3034
        %3511 = vmatprep.subr.bf16.mxu0 %v3025
        %3512 = vmatpush1.bf16.msra.mxu0 %v3024
        %3513 = vmatprep.subr.bf16.mxu0 %v3015
        %3514 = vmatpush1.bf16.msra.mxu0 %v3014
        %3515 = vmatprep.subr.bf16.mxu0 %v3005
        %3516 = vmatpush1.bf16.msra.mxu0 %v3004
        %3517 = vmatprep.subr.bf16.mxu0 %v2995
        %3518 = vmatpush1.bf16.msra.mxu0 %v2994
        %3519 = vmatprep.subr.bf16.mxu0 %v2985
        %3520 = vmatpush1.bf16.msra.mxu0 %v2984
        %3521 = vmatprep.subr.bf16.mxu0 %v3135
        %3522 = vmatpush2.bf16.msra.mxu0 %v3134
        %3523 = vmatprep.subr.bf16.mxu0 %v3125
        %3524 = vmatpush2.bf16.msra.mxu0 %v3124
        %3525 = vmatprep.subr.bf16.mxu0 %v3115
        %3526 = vmatpush2.bf16.msra.mxu0 %v3114
        %3527 = vmatprep.subr.bf16.mxu0 %v3105
        %3528 = vmatpush2.bf16.msra.mxu0 %v3104
        %3529 = vmatprep.subr.bf16.mxu0 %v3095
        %3530 = vmatpush2.bf16.msra.mxu0 %v3094
        %3531 = vmatprep.subr.bf16.mxu0 %v3085
        %3532 = vmatpush2.bf16.msra.mxu0 %v3084
        %3533 = vmatprep.subr.bf16.mxu0 %v3075
        %3534 = vmatpush2.bf16.msra.mxu0 %v3074
        %3535 = vmatprep.subr.bf16.mxu0 %v3065
        %3536 = vmatpush2.bf16.msra.mxu0 %v3064
        %3537 = vmatprep.mubr.bf16.mxu0 %v1489
        %3538 = vmatmul.mubr.bf16.gmra.mxu0 %v1488
        %v3539 = vpop.f32.mrf.mxu0
        %v3540 = vadd.f32 %v3499, %v3539
        %v3541 = vpop.f32.mrf.mxu0
        %v3542 = vadd.f32 %v3501, %v3541
        %v3543 = vpop.f32.mrf.mxu0
        %v3544 = vpop.f32.mrf.mxu0
        %3545 = vdwg.mxu0
        %3546 = vmatprep.subr.bf16.mxu0 %v2897
        %3547 = vmatpush1.bf16.msra.mxu0 %v2896
        %3548 = vmatprep.subr.bf16.mxu0 %v2887
        %3549 = vmatpush1.bf16.msra.mxu0 %v2886
        %3550 = vmatprep.subr.bf16.mxu0 %v2877
        %3551 = vmatpush1.bf16.msra.mxu0 %v2876
        %3552 = vmatprep.subr.bf16.mxu0 %v2867
        %3553 = vmatpush1.bf16.msra.mxu0 %v2866
        %3554 = vmatprep.subr.bf16.mxu0 %v2857
        %3555 = vmatpush1.bf16.msra.mxu0 %v2856
        %3556 = vmatprep.subr.bf16.mxu0 %v2847
        %3557 = vmatpush1.bf16.msra.mxu0 %v2846
        %3558 = vmatprep.subr.bf16.mxu0 %v2837
        %3559 = vmatpush1.bf16.msra.mxu0 %v2836
        %3560 = vmatprep.subr.bf16.mxu0 %v2827
        %3561 = vmatpush1.bf16.msra.mxu0 %v2826
        %3562 = vmatprep.subr.bf16.mxu0 %v2977
        %3563 = vmatpush2.bf16.msra.mxu0 %v2976
        %3564 = vmatprep.subr.bf16.mxu0 %v2967
        %3565 = vmatpush2.bf16.msra.mxu0 %v2966
        %3566 = vmatprep.subr.bf16.mxu0 %v2957
        %3567 = vmatpush2.bf16.msra.mxu0 %v2956
        %3568 = vmatprep.subr.bf16.mxu0 %v2947
        %3569 = vmatpush2.bf16.msra.mxu0 %v2946
        %3570 = vmatprep.subr.bf16.mxu0 %v2937
        %3571 = vmatpush2.bf16.msra.mxu0 %v2936
        %3572 = vmatprep.subr.bf16.mxu0 %v2927
        %3573 = vmatpush2.bf16.msra.mxu0 %v2926
        %3574 = vmatprep.subr.bf16.mxu0 %v2917
        %3575 = vmatpush2.bf16.msra.mxu0 %v2916
        %3576 = vmatprep.subr.bf16.mxu0 %v2907
        %3577 = vmatpush2.bf16.msra.mxu0 %v2906
        %3578 = vmatprep.mubr.bf16.mxu0 %v1487
        %3579 = vmatmul.mubr.bf16.gmra.mxu0 %v1486
        %v3580 = vpop.f32.mrf.mxu0
        %v3581 = vadd.f32 %v1825, %v3580
        %v3582 = vpop.f32.mrf.mxu0
        %v3583 = vadd.f32 %v1829, %v3582
        %v3584 = vpop.f32.mrf.mxu0
        %v3585 = vpop.f32.mrf.mxu0
        %3586 = vdwg.mxu0
        %3587 = vmatprep.subr.bf16.mxu0 %v3057
        %3588 = vmatpush1.bf16.msra.mxu0 %v3056
        %3589 = vmatprep.subr.bf16.mxu0 %v3047
        %3590 = vmatpush1.bf16.msra.mxu0 %v3046
        %3591 = vmatprep.subr.bf16.mxu0 %v3037
        %3592 = vmatpush1.bf16.msra.mxu0 %v3036
        %3593 = vmatprep.subr.bf16.mxu0 %v3027
        %3594 = vmatpush1.bf16.msra.mxu0 %v3026
        %3595 = vmatprep.subr.bf16.mxu0 %v3017
        %3596 = vmatpush1.bf16.msra.mxu0 %v3016
        %3597 = vmatprep.subr.bf16.mxu0 %v3007
        %3598 = vmatpush1.bf16.msra.mxu0 %v3006
        %3599 = vmatprep.subr.bf16.mxu0 %v2997
        %3600 = vmatpush1.bf16.msra.mxu0 %v2996
        %3601 = vmatprep.subr.bf16.mxu0 %v2987
        %3602 = vmatpush1.bf16.msra.mxu0 %v2986
        %3603 = vmatprep.subr.bf16.mxu0 %v3137
        %3604 = vmatpush2.bf16.msra.mxu0 %v3136
        %3605 = vmatprep.subr.bf16.mxu0 %v3127
        %3606 = vmatpush2.bf16.msra.mxu0 %v3126
        %3607 = vmatprep.subr.bf16.mxu0 %v3117
        %3608 = vmatpush2.bf16.msra.mxu0 %v3116
        %3609 = vmatprep.subr.bf16.mxu0 %v3107
        %3610 = vmatpush2.bf16.msra.mxu0 %v3106
        %3611 = vmatprep.subr.bf16.mxu0 %v3097
        %3612 = vmatpush2.bf16.msra.mxu0 %v3096
        %3613 = vmatprep.subr.bf16.mxu0 %v3087
        %3614 = vmatpush2.bf16.msra.mxu0 %v3086
        %3615 = vmatprep.subr.bf16.mxu0 %v3077
        %3616 = vmatpush2.bf16.msra.mxu0 %v3076
        %3617 = vmatprep.subr.bf16.mxu0 %v3067
        %3618 = vmatpush2.bf16.msra.mxu0 %v3066
        %3619 = vmatprep.mubr.bf16.mxu0 %v1489
        %3620 = vmatmul.mubr.bf16.gmra.mxu0 %v1488
        %v3621 = vpop.f32.mrf.mxu0
        %v3622 = vadd.f32 %v3581, %v3621
        %v3623 = vpop.f32.mrf.mxu0
        %v3624 = vadd.f32 %v3583, %v3623
        %v3625 = vpop.f32.mrf.mxu0
        %v3626 = vpop.f32.mrf.mxu0
        %3627 = vdwg.mxu0
        %3628 = vmatprep.subr.bf16.mxu0 %v2899
        %3629 = vmatpush1.bf16.msra.mxu0 %v2898
        %3630 = vmatprep.subr.bf16.mxu0 %v2889
        %3631 = vmatpush1.bf16.msra.mxu0 %v2888
        %3632 = vmatprep.subr.bf16.mxu0 %v2879
        %3633 = vmatpush1.bf16.msra.mxu0 %v2878
        %3634 = vmatprep.subr.bf16.mxu0 %v2869
        %3635 = vmatpush1.bf16.msra.mxu0 %v2868
        %3636 = vmatprep.subr.bf16.mxu0 %v2859
        %3637 = vmatpush1.bf16.msra.mxu0 %v2858
        %3638 = vmatprep.subr.bf16.mxu0 %v2849
        %3639 = vmatpush1.bf16.msra.mxu0 %v2848
        %3640 = vmatprep.subr.bf16.mxu0 %v2839
        %3641 = vmatpush1.bf16.msra.mxu0 %v2838
        %3642 = vmatprep.subr.bf16.mxu0 %v2829
        %3643 = vmatpush1.bf16.msra.mxu0 %v2828
        %3644 = vmatprep.subr.bf16.mxu0 %v2979
        %3645 = vmatpush2.bf16.msra.mxu0 %v2978
        %3646 = vmatprep.subr.bf16.mxu0 %v2969
        %3647 = vmatpush2.bf16.msra.mxu0 %v2968
        %3648 = vmatprep.subr.bf16.mxu0 %v2959
        %3649 = vmatpush2.bf16.msra.mxu0 %v2958
        %3650 = vmatprep.subr.bf16.mxu0 %v2949
        %3651 = vmatpush2.bf16.msra.mxu0 %v2948
        %3652 = vmatprep.subr.bf16.mxu0 %v2939
        %3653 = vmatpush2.bf16.msra.mxu0 %v2938
        %3654 = vmatprep.subr.bf16.mxu0 %v2929
        %3655 = vmatpush2.bf16.msra.mxu0 %v2928
        %3656 = vmatprep.subr.bf16.mxu0 %v2919
        %3657 = vmatpush2.bf16.msra.mxu0 %v2918
        %3658 = vmatprep.subr.bf16.mxu0 %v2909
        %3659 = vmatpush2.bf16.msra.mxu0 %v2908
        %3660 = vmatprep.mubr.bf16.mxu0 %v1487
        %3661 = vmatmul.mubr.bf16.gmra.mxu0 %v1486
        %v3662 = vpop.f32.mrf.mxu0
        %v3663 = vadd.f32 %v1833, %v3662
        %v3664 = vpop.f32.mrf.mxu0
        %v3665 = vadd.f32 %v1837, %v3664
        %v3666 = vpop.f32.mrf.mxu0
        %v3667 = vpop.f32.mrf.mxu0
        %3668 = vdwg.mxu0
        %3669 = vmatprep.subr.bf16.mxu0 %v3059
        %3670 = vmatpush1.bf16.msra.mxu0 %v3058
        %3671 = vmatprep.subr.bf16.mxu0 %v3049
        %3672 = vmatpush1.bf16.msra.mxu0 %v3048
        %3673 = vmatprep.subr.bf16.mxu0 %v3039
        %3674 = vmatpush1.bf16.msra.mxu0 %v3038
        %3675 = vmatprep.subr.bf16.mxu0 %v3029
        %3676 = vmatpush1.bf16.msra.mxu0 %v3028
        %3677 = vmatprep.subr.bf16.mxu0 %v3019
        %3678 = vmatpush1.bf16.msra.mxu0 %v3018
        %3679 = vmatprep.subr.bf16.mxu0 %v3009
        %3680 = vmatpush1.bf16.msra.mxu0 %v3008
        %3681 = vmatprep.subr.bf16.mxu0 %v2999
        %3682 = vmatpush1.bf16.msra.mxu0 %v2998
        %3683 = vmatprep.subr.bf16.mxu0 %v2989
        %3684 = vmatpush1.bf16.msra.mxu0 %v2988
        %3685 = vmatprep.subr.bf16.mxu0 %v3139
        %3686 = vmatpush2.bf16.msra.mxu0 %v3138
        %3687 = vmatprep.subr.bf16.mxu0 %v3129
        %3688 = vmatpush2.bf16.msra.mxu0 %v3128
        %3689 = vmatprep.subr.bf16.mxu0 %v3119
        %3690 = vmatpush2.bf16.msra.mxu0 %v3118
        %3691 = vmatprep.subr.bf16.mxu0 %v3109
        %3692 = vmatpush2.bf16.msra.mxu0 %v3108
        %3693 = vmatprep.subr.bf16.mxu0 %v3099
        %3694 = vmatpush2.bf16.msra.mxu0 %v3098
        %3695 = vmatprep.subr.bf16.mxu0 %v3089
        %3696 = vmatpush2.bf16.msra.mxu0 %v3088
        %3697 = vmatprep.subr.bf16.mxu0 %v3079
        %3698 = vmatpush2.bf16.msra.mxu0 %v3078
        %3699 = vmatprep.subr.bf16.mxu0 %v3069
        %3700 = vmatpush2.bf16.msra.mxu0 %v3068
        %3701 = vmatprep.mubr.bf16.mxu0 %v1489
        %3702 = vmatmul.mubr.bf16.gmra.mxu0 %v1488
        %v3703 = vpop.f32.mrf.mxu0
        %v3704 = vadd.f32 %v3663, %v3703
        %v3705 = vpop.f32.mrf.mxu0
        %v3706 = vadd.f32 %v3665, %v3705
        %v3707 = vpop.f32.mrf.mxu0
        %v3708 = vpop.f32.mrf.mxu0
        %3709 = vdwg.mxu0
        %3710 = vmatprep.subr.bf16.mxu0 %v2901
        %3711 = vmatpush1.bf16.msra.mxu0 %v2900
        %3712 = vmatprep.subr.bf16.mxu0 %v2891
        %3713 = vmatpush1.bf16.msra.mxu0 %v2890
        %3714 = vmatprep.subr.bf16.mxu0 %v2881
        %3715 = vmatpush1.bf16.msra.mxu0 %v2880
        %3716 = vmatprep.subr.bf16.mxu0 %v2871
        %3717 = vmatpush1.bf16.msra.mxu0 %v2870
        %3718 = vmatprep.subr.bf16.mxu0 %v2861
        %3719 = vmatpush1.bf16.msra.mxu0 %v2860
        %3720 = vmatprep.subr.bf16.mxu0 %v2851
        %3721 = vmatpush1.bf16.msra.mxu0 %v2850
        %3722 = vmatprep.subr.bf16.mxu0 %v2841
        %3723 = vmatpush1.bf16.msra.mxu0 %v2840
        %3724 = vmatprep.subr.bf16.mxu0 %v2831
        %3725 = vmatpush1.bf16.msra.mxu0 %v2830
        %3726 = vmatprep.subr.bf16.mxu0 %v2981
        %3727 = vmatpush2.bf16.msra.mxu0 %v2980
        %3728 = vmatprep.subr.bf16.mxu0 %v2971
        %3729 = vmatpush2.bf16.msra.mxu0 %v2970
        %3730 = vmatprep.subr.bf16.mxu0 %v2961
        %3731 = vmatpush2.bf16.msra.mxu0 %v2960
        %3732 = vmatprep.subr.bf16.mxu0 %v2951
        %3733 = vmatpush2.bf16.msra.mxu0 %v2950
        %3734 = vmatprep.subr.bf16.mxu0 %v2941
        %3735 = vmatpush2.bf16.msra.mxu0 %v2940
        %3736 = vmatprep.subr.bf16.mxu0 %v2931
        %3737 = vmatpush2.bf16.msra.mxu0 %v2930
        %3738 = vmatprep.subr.bf16.mxu0 %v2921
        %3739 = vmatpush2.bf16.msra.mxu0 %v2920
        %3740 = vmatprep.subr.bf16.mxu0 %v2911
        %3741 = vmatpush2.bf16.msra.mxu0 %v2910
        %3742 = vmatprep.mubr.bf16.mxu0 %v1487
        %3743 = vmatmul.mubr.bf16.gmra.mxu0 %v1486
        %v3744 = vpop.f32.mrf.mxu0
        %v3745 = vadd.f32 %v1841, %v3744
        %v3746 = vpop.f32.mrf.mxu0
        %v3747 = vadd.f32 %v1845, %v3746
        %v3748 = vpop.f32.mrf.mxu0
        %v3749 = vpop.f32.mrf.mxu0
        %3750 = vdwg.mxu0
        %3751 = vmatprep.subr.bf16.mxu0 %v3061
        %3752 = vmatpush1.bf16.msra.mxu0 %v3060
        %3753 = vmatprep.subr.bf16.mxu0 %v3051
        %3754 = vmatpush1.bf16.msra.mxu0 %v3050
        %3755 = vmatprep.subr.bf16.mxu0 %v3041
        %3756 = vmatpush1.bf16.msra.mxu0 %v3040
        %3757 = vmatprep.subr.bf16.mxu0 %v3031
        %3758 = vmatpush1.bf16.msra.mxu0 %v3030
        %3759 = vmatprep.subr.bf16.mxu0 %v3021
        %3760 = vmatpush1.bf16.msra.mxu0 %v3020
        %3761 = vmatprep.subr.bf16.mxu0 %v3011
        %3762 = vmatpush1.bf16.msra.mxu0 %v3010
        %3763 = vmatprep.subr.bf16.mxu0 %v3001
        %3764 = vmatpush1.bf16.msra.mxu0 %v3000
        %3765 = vmatprep.subr.bf16.mxu0 %v2991
        %3766 = vmatpush1.bf16.msra.mxu0 %v2990
        %3767 = vmatprep.subr.bf16.mxu0 %v3141
        %3768 = vmatpush2.bf16.msra.mxu0 %v3140
        %3769 = vmatprep.subr.bf16.mxu0 %v3131
        %3770 = vmatpush2.bf16.msra.mxu0 %v3130
        %3771 = vmatprep.subr.bf16.mxu0 %v3121
        %3772 = vmatpush2.bf16.msra.mxu0 %v3120
        %3773 = vmatprep.subr.bf16.mxu0 %v3111
        %3774 = vmatpush2.bf16.msra.mxu0 %v3110
        %3775 = vmatprep.subr.bf16.mxu0 %v3101
        %3776 = vmatpush2.bf16.msra.mxu0 %v3100
        %3777 = vmatprep.subr.bf16.mxu0 %v3091
        %3778 = vmatpush2.bf16.msra.mxu0 %v3090
        %3779 = vmatprep.subr.bf16.mxu0 %v3081
        %3780 = vmatpush2.bf16.msra.mxu0 %v3080
        %3781 = vmatprep.subr.bf16.mxu0 %v3071
        %3782 = vmatpush2.bf16.msra.mxu0 %v3070
        %3783 = vmatprep.mubr.bf16.mxu0 %v1489
        %3784 = vmatmul.mubr.bf16.gmra.mxu0 %v1488
        %v3785 = vpop.f32.mrf.mxu0
        %v3786 = vadd.f32 %v3745, %v3785
        %v3787 = vpop.f32.mrf.mxu0
        %v3788 = vadd.f32 %v3747, %v3787
        %v3789 = vpop.f32.mrf.mxu0
        %v3790 = vpop.f32.mrf.mxu0
        %3791 = vdwg.mxu0
        %3792 = vmatprep.subr.bf16.mxu0 %v2903
        %3793 = vmatpush1.bf16.msra.mxu0 %v2902
        %3794 = vmatprep.subr.bf16.mxu0 %v2893
        %3795 = vmatpush1.bf16.msra.mxu0 %v2892
        %3796 = vmatprep.subr.bf16.mxu0 %v2883
        %3797 = vmatpush1.bf16.msra.mxu0 %v2882
        %3798 = vmatprep.subr.bf16.mxu0 %v2873
        %3799 = vmatpush1.bf16.msra.mxu0 %v2872
        %3800 = vmatprep.subr.bf16.mxu0 %v2863
        %3801 = vmatpush1.bf16.msra.mxu0 %v2862
        %3802 = vmatprep.subr.bf16.mxu0 %v2853
        %3803 = vmatpush1.bf16.msra.mxu0 %v2852
        %3804 = vmatprep.subr.bf16.mxu0 %v2843
        %3805 = vmatpush1.bf16.msra.mxu0 %v2842
        %3806 = vmatprep.subr.bf16.mxu0 %v2833
        %3807 = vmatpush1.bf16.msra.mxu0 %v2832
        %3808 = vmatprep.subr.bf16.mxu0 %v2983
        %3809 = vmatpush2.bf16.msra.mxu0 %v2982
        %3810 = vmatprep.subr.bf16.mxu0 %v2973
        %3811 = vmatpush2.bf16.msra.mxu0 %v2972
        %3812 = vmatprep.subr.bf16.mxu0 %v2963
        %3813 = vmatpush2.bf16.msra.mxu0 %v2962
        %3814 = vmatprep.subr.bf16.mxu0 %v2953
        %3815 = vmatpush2.bf16.msra.mxu0 %v2952
        %3816 = vmatprep.subr.bf16.mxu0 %v2943
        %3817 = vmatpush2.bf16.msra.mxu0 %v2942
        %3818 = vmatprep.subr.bf16.mxu0 %v2933
        %3819 = vmatpush2.bf16.msra.mxu0 %v2932
        %3820 = vmatprep.subr.bf16.mxu0 %v2923
        %3821 = vmatpush2.bf16.msra.mxu0 %v2922
        %3822 = vmatprep.subr.bf16.mxu0 %v2913
        %3823 = vmatpush2.bf16.msra.mxu0 %v2912
        %3824 = vmatprep.mubr.bf16.mxu0 %v1487
        %3825 = vmatmul.mubr.bf16.gmra.mxu0 %v1486
        %v3826 = vpop.f32.mrf.mxu0
        %v3827 = vadd.f32 %v1849, %v3826
        %v3828 = vpop.f32.mrf.mxu0
        %v3829 = vadd.f32 %v1853, %v3828
        %v3830 = vpop.f32.mrf.mxu0
        %v3831 = vpop.f32.mrf.mxu0
        %3832 = vdwg.mxu0
        %3833 = vmatprep.subr.bf16.mxu0 %v3063
        %3834 = vmatpush1.bf16.msra.mxu0 %v3062
        %3835 = vmatprep.subr.bf16.mxu0 %v3053
        %3836 = vmatpush1.bf16.msra.mxu0 %v3052
        %3837 = vmatprep.subr.bf16.mxu0 %v3043
        %3838 = vmatpush1.bf16.msra.mxu0 %v3042
        %3839 = vmatprep.subr.bf16.mxu0 %v3033
        %3840 = vmatpush1.bf16.msra.mxu0 %v3032
        %3841 = vmatprep.subr.bf16.mxu0 %v3023
        %3842 = vmatpush1.bf16.msra.mxu0 %v3022
        %3843 = vmatprep.subr.bf16.mxu0 %v3013
        %3844 = vmatpush1.bf16.msra.mxu0 %v3012
        %3845 = vmatprep.subr.bf16.mxu0 %v3003
        %3846 = vmatpush1.bf16.msra.mxu0 %v3002
        %3847 = vmatprep.subr.bf16.mxu0 %v2993
        %3848 = vmatpush1.bf16.msra.mxu0 %v2992
        %3849 = vmatprep.subr.bf16.mxu0 %v3143
        %3850 = vmatpush2.bf16.msra.mxu0 %v3142
        %3851 = vmatprep.subr.bf16.mxu0 %v3133
        %3852 = vmatpush2.bf16.msra.mxu0 %v3132
        %3853 = vmatprep.subr.bf16.mxu0 %v3123
        %3854 = vmatpush2.bf16.msra.mxu0 %v3122
        %3855 = vmatprep.subr.bf16.mxu0 %v3113
        %3856 = vmatpush2.bf16.msra.mxu0 %v3112
        %3857 = vmatprep.subr.bf16.mxu0 %v3103
        %3858 = vmatpush2.bf16.msra.mxu0 %v3102
        %3859 = vmatprep.subr.bf16.mxu0 %v3093
        %3860 = vmatpush2.bf16.msra.mxu0 %v3092
        %3861 = vmatprep.subr.bf16.mxu0 %v3083
        %3862 = vmatpush2.bf16.msra.mxu0 %v3082
        %3863 = vmatprep.subr.bf16.mxu0 %v3073
        %3864 = vmatpush2.bf16.msra.mxu0 %v3072
        %3865 = vmatprep.mubr.bf16.mxu0 %v1489
        %3866 = vmatmul.mubr.bf16.gmra.mxu0 %v1488
        %v3867 = vpop.f32.mrf.mxu0
        %v3868 = vadd.f32 %v3827, %v3867
        %v3869 = vpop.f32.mrf.mxu0
        %v3870 = vadd.f32 %v3829, %v3869
        %v3871 = vpop.f32.mrf.mxu0
        %v3872 = vpop.f32.mrf.mxu0
        %3873 = vdwg.mxu0
        %v3874 = vtanh.pop %v3540
        %v3875 = vtanh.pop %v3542
        %v3876 = vtanh.pop %v3622
        %v3877 = vtanh.pop %v3624
        %v3878 = vtanh.pop %v3704
        %v3879 = vtanh.pop %v3706
        %v3880 = vtanh.pop %v3786
        %v3881 = vtanh.pop %v3788
        %v3882 = vtanh.pop %v3868
        %v3883 = vtanh.pop %v3870
        %3884 = vst [vmem:[%s400] sm:$0xff] %v3874
        %3885 = vst [vmem:[%s400 + $0x8] sm:$0xff] %v3875
        %3886 = vst [vmem:[%s400 + $0x10] sm:$0xff] %v3876
        %3887 = vst [vmem:[%s400 + $0x18] sm:$0xff] %v3877
        %3888 = vst [vmem:[%s400 + $0x20] sm:$0xff] %v3878
        %3889 = vst [vmem:[%s400 + $0x28] sm:$0xff] %v3879
        %3890 = vst [vmem:[%s400 + $0x30] sm:$0xff] %v3880
        %3891 = vst [vmem:[%s400 + $0x38] sm:$0xff] %v3881
        %3892 = vst [vmem:[%s400 + $0x40] sm:$0xff] %v3882
        %3893 = vst [vmem:[%s400 + $0x48] sm:$0xff] %v3883
        %s3894 = sand.u32 %s192, 1
        %s3895 = scalar_lea.sflag [#allocation4], %s3894
        %s3896 = sand.u32 %s192, 1
        %s3897 = smul.addr %s3896, 80
        %s3898 = scalar_lea.vmem [#allocation14], %s3897
        // Predicated region
        $region77: #{tpu_custom_call.1} parent=47 // pred_check
          %p3899 = pneg %p202
        $region78: #{tpu_custom_call.1} parent=47 // pred_check_branch
          %3901 = sbr.rel (%p3899) target = $region80
        $region79: #{tpu_custom_call.1} parent=47 // pred_region
          %s3902 = smul.u32 10, %s27
          %s3904 = ssub.s32 1280, 1280
          %3905 = vsyncadd %s3895, %s3904
          %s3906 = smul.addr %s3902, 128
          %s3907 = scalar_lea.hbm %s7, %s3906
          %s3909 = sshll.u32 %s3898, 4
          %s3910 = int_to_ptr.vmem [resolvable:$true] %s3909
          %3912 = dma.vmem_to_hbm [thread:$0]  %s3910, 1280, %s3907, %s3895
        $region80: #{tpu_custom_call.1} parent=47 // pred_fallthru
          _
      $region48: #{tpu_custom_call.1} parent=5 // pred_fallthru
        _
      %p3913 = scmp.le.s32.totalorder 2, %s22
      // Predicated region
      $region81: #{tpu_custom_call.1} parent=5 // pred_check
        %p3914 = pneg %p3913
      $region82: #{tpu_custom_call.1} parent=5 // pred_check_branch
        %3916 = sbr.rel (%p3914) target = $region84
      $region83: #{tpu_custom_call.1} parent=5 // pred_region
        %s3917 = ssub.s32 %s22, 2
        // Predicated region
        $region85: #{tpu_custom_call.1} parent=83 // pred_check
          %p3918 = pneg %p208
        $region86: #{tpu_custom_call.1} parent=83 // pred_check_branch
          %3920 = sbr.rel (%p3918) target = $region88
        $region87: #{tpu_custom_call.1} parent=83 // pred_region
          %s3921 = sand.u32 %s193, 1
          %s3922 = scalar_lea.sflag [#allocation4], %s3921
          %s3923 = sand.u32 %s193, 1
          %s3924 = smul.addr %s3923, 80
          %s3925 = scalar_lea.vmem [#allocation14], %s3924
          %3926 = dma.done %s3922, 1280
        $region88: #{tpu_custom_call.1} parent=83 // pred_fallthru
          _
      $region84: #{tpu_custom_call.1} parent=5 // pred_fallthru
        _
    $region6: #{tpu_custom_call.1} parent=1 // loop_footer
      %s26 = sadd.s32 1, %s22
    $region7: #{tpu_custom_call.1} parent=1 // loop_footer_branch
      %21 = sbr.rel target = $region3
    $region8: #{tpu_custom_call.1} parent=1 // loop_exit
      _
    %3927 = vsyncpa [#allocation3], 1
    %s3928 = scalar_lea.sflag [#allocation3], 1
    %3929 = vsyncpa %s3928, 1
    %3930 = vsyncpa [#allocation6], 1
    %3931 = vsyncpa [#allocation9], 1
    %3932 = vsyncpa [#allocation12], 1
    %s3933 = scalar_lea.sflag [#allocation12], 1
    %3934 = vsyncpa %s3933, 1
    %3935 = vsyncpa [#allocation4], 1
    %s3936 = scalar_lea.sflag [#allocation4], 1
    %3937 = vsyncpa %s3936, 1

</llo_original>
